<compile_context>
chip_gen: v5e
topology: v5e:2x2
jax: 0.10.0
libtpu: 0.0.40
codegen_flags: <defaults>
</compile_context>

<pallas_src>
import functools

import jax
import jax.numpy as jnp
from jax.experimental import pallas as pl
from jax.experimental.pallas import tpu as pltpu

_MIB = 1024 * 1024
_PALLAS_MIN_HW = 64  # use the fused Pallas conv when H*W >= 64


def _round_up(x, m):
    return (x + m - 1) // m * m


_VMEM_CAP = None


def _vmem_cap_bytes():
    global _VMEM_CAP
    if _VMEM_CAP is None:
        try:
            _VMEM_CAP = int(pltpu.get_tpu_info().vmem_capacity_bytes)
        except Exception:
            _VMEM_CAP = 64 * _MIB  # conservative (v7x per-TC VMEM)
    return _VMEM_CAP


# ----------------------------------------------------------------------------
# Fused im2col 3x3 conv + bias + ReLU Pallas kernel.
# ----------------------------------------------------------------------------
def _conv3x3_kernel(x_ref, w_ref, b_ref, o_ref, *, H, W):
    """One (batch, Cout-tile) block of a 3x3/stride-1 conv.

    x_ref: (1, H+2, W+2, Cin)  bf16, spatially zero-padded activation
    w_ref: (9, Cin, tco)       bf16, tap-major (ky*3+kx) weights
    b_ref: (1, tco)            f32
    o_ref: (1, H, W, tco)      bf16
    """
    cin = x_ref.shape[-1]
    tco = o_ref.shape[-1]
    acc = None
    for dy in range(3):
        for dx in range(3):
            # Static window slice of the padded activation (stays in VMEM).
            win = x_ref[0, dy:dy + H, dx:dx + W, :]            # (H, W, Cin)
            lhs = win.reshape(H * W, cin)
            part = jnp.dot(lhs, w_ref[dy * 3 + dx],
                           preferred_element_type=jnp.float32)
            acc = part if acc is None else acc + part          # f32 accum
    r = jnp.maximum(acc + b_ref[...], 0.0)                     # bias + ReLU
    o_ref[...] = r.reshape(1, H, W, tco).astype(o_ref.dtype)


def _conv3x3_pallas(x_pad, w9, b2d, H, W):
    """x_pad: (N, H+2, W+2, Cin_pad) bf16; w9: (9, Cin_pad, Cout_pad) bf16;
    b2d: (1, Cout_pad) f32.  Returns (N, H, W, Cout_pad) bf16."""
    n = x_pad.shape[0]
    cin = x_pad.shape[-1]
    cout = w9.shape[-1]
    assert w9.shape[1] == cin, (w9.shape, cin)

    tco = cout if cout <= 256 else (256 if cout % 256 == 0 else 128)
    # Keep at least 2 parallel blocks so both v7x TensorCores get work.
    if n * (cout // tco) < 2 and tco >= 256:
        tco //= 2
    grid = (n, cout // tco)

    # Footprint-derived VMEM limit (double-buffered blocks + kernel scratch).
    xb = x_pad.shape[1] * x_pad.shape[2] * cin * 2
    wb = 9 * cin * tco * 2
    ob = H * W * tco * 2
    scratch = H * W * (2 * cin * 2 + tco * 4)   # window copies + f32 accum
    need = 2 * (xb + wb + ob) + scratch
    vmem = int(min(_vmem_cap_bytes(), max(32 * _MIB, 2 * need)))

    return pl.pallas_call(
        functools.partial(_conv3x3_kernel, H=H, W=W),
        out_shape=jax.ShapeDtypeStruct((n, H, W, cout), jnp.bfloat16),
        grid=grid,
        in_specs=[
            pl.BlockSpec((1, H + 2, W + 2, cin), lambda i, j: (i, 0, 0, 0)),
            pl.BlockSpec((9, cin, tco), lambda i, j: (0, 0, j)),
            pl.BlockSpec((1, tco), lambda i, j: (0, j)),
        ],
        out_specs=pl.BlockSpec((1, H, W, tco), lambda i, j: (i, 0, 0, j)),
        compiler_params=pltpu.CompilerParams(
            dimension_semantics=("parallel", "parallel"),
            vmem_limit_bytes=vmem),
    )(x_pad, w9, b2d)


def conv3x3_relu(h, w9, b2d):
    """3x3 conv (stride 1, pad 1) + bias + ReLU on a channel-padded bf16 NHWC
    activation.  Returns bf16 NHWC with Cout_pad channels."""
    n, hgt, wid, cin = h.shape
    cout = w9.shape[-1]
    hp = jnp.pad(h, ((0, 0), (1, 1), (1, 1), (0, 0)))
    if hgt * wid >= _PALLAS_MIN_HW:
        return _conv3x3_pallas(hp, w9, b2d, hgt, wid)
    # Tiny-spatial deep levels: weight-read-bound -> XLA fallback with bf16
    # weights and f32 accumulation (Pallas per-step overhead would dominate).
    y = jax.lax.conv_general_dilated(
        hp, w9.reshape(3, 3, cin, cout), (1, 1), 'VALID',
        dimension_numbers=('NHWC', 'HWIO', 'NHWC'),
        preferred_element_type=jnp.float32)
    return jnp.maximum(y + b2d.reshape(1, 1, 1, cout), 0.0).astype(jnp.bfloat16)


# ----------------------------------------------------------------------------
# Generic tiled matmul + bias (used by the 1x1 `adjust` conv at large M).
# ----------------------------------------------------------------------------
def _mm_bias_kernel(x_ref, w_ref, b_ref, o_ref, *, relu):
    k = pl.program_id(2)
    part = jnp.dot(x_ref[...], w_ref[...], preferred_element_type=jnp.float32)

    @pl.when(k == 0)
    def _first():                      # direct write: no zero-init + reload
        o_ref[...] = part

    @pl.when(k > 0)
    def _accum():
        o_ref[...] += part

    @pl.when(k == pl.num_programs(2) - 1)
    def _finalize():
        r = o_ref[...] + b_ref[...]
        if relu:
            r = jnp.maximum(r, 0.0)
        o_ref[...] = r


def matmul_bias_pallas(x, w, b2d, relu=False):
    """x: (M, K) bf16; w: (K, Np) bf16 with K, Np multiples of 128 (pre-padded);
    b2d: (1, Np) f32.  Returns (M, Np) f32."""
    m, k = x.shape
    kp, np_ = w.shape
    assert kp == k and kp % 128 == 0 and np_ % 128 == 0, (x.shape, w.shape)

    if m >= 1024:
        tm = 512
    elif m >= 512:
        tm = 256
    else:
        tm = _round_up(m, 16)
    mp = _round_up(m, tm)
    tn = np_ if np_ <= 512 else (512 if np_ % 512 == 0 else 256)
    if (mp // tm) * (np_ // tn) == 1 and tn >= 256:
        tn //= 2                       # keep both v7x TensorCores busy
    tk = kp
    if kp > 1024:
        nb = kp // 128
        tk = 128
        for f in range(1, nb + 1):
            if nb % f == 0 and 128 * f <= 1024:
                tk = 128 * f

    xb = jnp.pad(x.astype(jnp.bfloat16), ((0, mp - m), (0, 0)))
    need = 2 * (tm * tk * 2 + tk * tn * 2 + tm * tn * 4 + tn * 4)
    vmem = int(min(_vmem_cap_bytes(), max(32 * _MIB, 2 * need)))

    out = pl.pallas_call(
        functools.partial(_mm_bias_kernel, relu=relu),
        out_shape=jax.ShapeDtypeStruct((mp, np_), jnp.float32),
        grid=(mp // tm, np_ // tn, kp // tk),
        in_specs=[
            pl.BlockSpec((tm, tk), lambda i, j, kk: (i, kk)),
            pl.BlockSpec((tk, tn), lambda i, j, kk: (kk, j)),
            pl.BlockSpec((1, tn), lambda i, j, kk: (0, j)),
        ],
        out_specs=pl.BlockSpec((tm, tn), lambda i, j, kk: (i, j)),
        compiler_params=pltpu.CompilerParams(
            dimension_semantics=("parallel", "parallel", "arbitrary"),
            vmem_limit_bytes=vmem),
    )(xb, w, b2d)
    return out[:m, :]


def conv1x1(x_nhwc, w, b2d):
    """1x1 conv (the `adjust` layer).  w: (Cin, Cout) bf16, b2d: (1, Cout) f32."""
    n, hgt, wid, cin = x_nhwc.shape
    cout = w.shape[-1]
    m = n * hgt * wid
    xf = x_nhwc.reshape(m, cin).astype(jnp.bfloat16)
    if m < 256:
        # Tiny-M at this input size: weight-read-bound, bf16 XLA dot.
        y = jnp.dot(xf, w, preferred_element_type=jnp.float32) + b2d
    else:
        y = matmul_bias_pallas(xf, w, b2d, relu=False)
    return y.reshape(n, hgt, wid, cout)


def maxpool2x2(x_nhwc):
    # Cheap memory-bound glue; kept in XLA.
    n, hgt, wid, c = x_nhwc.shape
    return x_nhwc.reshape(n, hgt // 2, 2, wid // 2, 2, c).max(axis=(2, 4))


# ----------------------------------------------------------------------------
# Parameters: deterministic in-script weights, pre-padded/cast ONCE at init.
# ----------------------------------------------------------------------------
def init_params(key, in_ch=3):
    chs = [in_ch, 64, 128, 256, 512, 1024]
    keys = jax.random.split(key, 4 * 5 + 2)
    ki = 0
    convs = []
    for i in range(5):
        cin, cout = chs[i], chs[i + 1]
        cin_p, cout_p = _round_up(cin, 128), _round_up(cout, 128)
        level = []
        for c_in, c_in_p in ((cin, cin_p), (cout, cout_p)):
            w = jax.random.normal(keys[ki], (3, 3, c_in, cout), jnp.float32) * \
                (2.0 / (9 * c_in)) ** 0.5
            b = 0.01 * jax.random.normal(keys[ki + 1], (cout,), jnp.float32)
            ki += 2
            wp = jnp.zeros((9, c_in_p, cout_p), jnp.bfloat16)
            wp = wp.at[:, :c_in, :cout].set(
                w.reshape(9, c_in, cout).astype(jnp.bfloat16))
            bp = jnp.zeros((1, cout_p), jnp.float32).at[:, :cout].set(b[None, :])
            level += [wp, bp]
        convs.append(tuple(level))
    w_adj = (jax.random.normal(keys[ki], (1024, 256), jnp.float32)
             * (1.0 / 1024.0) ** 0.5).astype(jnp.bfloat16)
    b_adj = (0.01 * jax.random.normal(keys[ki + 1], (256,), jnp.float32)
             ).reshape(1, 256)
    return convs, (w_adj, b_adj)


# ----------------------------------------------------------------------------
# BackboneUNet.forward
# ----------------------------------------------------------------------------
_REAL_COUTS = (64, 128, 256, 512, 1024)


def backbone_unet_forward(x_nchw, params):
    convs, (w_adj, b_adj) = params
    x = jnp.transpose(x_nchw, (0, 2, 3, 1)).astype(jnp.bfloat16)  # NCHW->NHWC
    cin_pad = convs[0][0].shape[1]
    h = jnp.pad(x, ((0, 0), (0, 0), (0, 0), (0, cin_pad - x.shape[-1])))
    feats = []
    for i, (w1, b1, w2, b2) in enumerate(convs):
        if i > 0:
            h = maxpool2x2(h)
        h = conv3x3_relu(h, w1, b1)
        h = conv3x3_relu(h, w2, b2)
        feats.append(h)                              # bf16, 128-padded channels

    out = conv1x1(feats[4][..., :1024], w_adj, b_adj)  # adjust: Conv2d(1024,256,1)

    search_cat = [
        jnp.transpose(f[..., :c], (0, 3, 1, 2)).astype(jnp.float32)
        for f, c in zip(feats, _REAL_COUTS)
    ]
    out = jnp.transpose(out, (0, 3, 1, 2)).astype(jnp.float32)
    return search_cat, out


# ----------------------------------------------------------------------------
# Pure-XLA f32 reference of the first two encoder levels (the Pallas-conv
# levels at this input size) for a correctness cross-check.
# ----------------------------------------------------------------------------
def _reference_features(x_nchw, params, n_levels=2):
    convs, _ = params
    x = jnp.transpose(x_nchw, (0, 2, 3, 1)).astype(jnp.bfloat16)
    x = x.astype(jnp.float32)
    cin_pad = convs[0][0].shape[1]
    h = jnp.pad(x, ((0, 0), (0, 0), (0, 0), (0, cin_pad - x.shape[-1])))
    feats = []
    for i, (w1, b1, w2, b2) in enumerate(convs[:n_levels]):
        if i > 0:
            h = maxpool2x2(h)
        for w9, b2d in ((w1, b1), (w2, b2)):
            cin, cout = w9.shape[1], w9.shape[2]
            hp = jnp.pad(h, ((0, 0), (1, 1), (1, 1), (0, 0)))
            y = jax.lax.conv_general_dilated(
                hp, w9.astype(jnp.float32).reshape(3, 3, cin, cout),
                (1, 1), 'VALID', dimension_numbers=('NHWC', 'HWIO', 'NHWC'),
                precision=jax.lax.Precision.HIGHEST)
            h = jnp.maximum(y + b2d.reshape(1, 1, 1, cout), 0.0)
        feats.append(h)
    return feats


if __name__ == "__main__":
    key = jax.random.PRNGKey(0)
    pkey, xkey = jax.random.split(key)
    params = init_params(pkey, in_ch=3)

    # Small input consistent with the module: NCHW, 3 input channels.
    x = jax.random.normal(xkey, (2, 3, 16, 16), jnp.float32)

    fwd = jax.jit(lambda xx: backbone_unet_forward(xx, params))
    search_cat, out = fwd(x)
    jax.block_until_ready(out)
    for f in search_cat:
        jax.block_until_ready(f)

    # Shape sanity checks (encoder levels at /1, /2, /4, /8, /16 resolution).
    assert search_cat[0].shape == (2, 64, 16, 16)
    assert search_cat[1].shape == (2, 128, 8, 8)
    assert search_cat[2].shape == (2, 256, 4, 4)
    assert search_cat[3].shape == (2, 512, 2, 2)
    assert search_cat[4].shape == (2, 1024, 1, 1)
    assert out.shape == (2, 256, 1, 1)
    assert bool(jnp.all(jnp.isfinite(out)))

    # Numerical cross-check of the fused-conv Pallas levels vs XLA f32 ref
    # (loose tolerance: chain activations are bf16 by design).
    ref_feats = jax.jit(lambda xx: _reference_features(xx, params))(x)
    for lvl, c in ((0, 64), (1, 128)):
        ref = jnp.transpose(ref_feats[lvl][..., :c], (0, 3, 1, 2))
        got = search_cat[lvl]
        err = float(jnp.max(jnp.abs(got - ref)))
        scale = float(jnp.max(jnp.abs(ref))) + 1e-6
        assert err / scale < 0.06, f"level {lvl} rel err {err / scale:.4f}"

    print("KERNEL_OK")
</pallas_src>

<mosaic_0001>
module attributes {stable_mosaic.version = 11 : i64} {
  func.func @_conv3x3_kernel(%arg0: i32, %arg1: i32, %arg2: memref<1x18x18x128xbf16, #tpu.memory_space<vmem>>, %arg3: memref<9x128x128xbf16, #tpu.memory_space<vmem>>, %arg4: memref<1x128xf32, #tpu.memory_space<vmem>>, %arg5: memref<1x16x16x128xbf16, #tpu.memory_space<vmem>>) attributes {dimension_semantics = [#tpu.dimension_semantics<parallel>, #tpu.dimension_semantics<parallel>], iteration_bounds = array<i64: 2, 1>, scalar_prefetch = 0 : i64, scratch_operands = 0 : i64, tpu.core_type = #tpu.core_type<tc>, window_params = [{transform_indices = @transform_0, window_bounds = array<i64: 1, 18, 18, 128>}, {transform_indices = @transform_1, window_bounds = array<i64: 9, 128, 128>}, {transform_indices = @transform_2, window_bounds = array<i64: 1, 128>}, {transform_indices = @transform_3, window_bounds = array<i64: 1, 16, 16, 128>}]} {
    %c0 = arith.constant 0 : index
    %c0_0 = arith.constant 0 : index
    %c0_1 = arith.constant 0 : index
    %c0_2 = arith.constant 0 : index
    %0 = vector.load %arg2[%c0, %c0_0, %c0_1, %c0_2] : memref<1x18x18x128xbf16, #tpu.memory_space<vmem>>, vector<1x16x16x128xbf16>
    %1 = vector.shape_cast %0 : vector<1x16x16x128xbf16> to vector<16x16x128xbf16>
    %2 = vector.shape_cast %1 : vector<16x16x128xbf16> to vector<256x128xbf16>
    %c0_3 = arith.constant 0 : index
    %c0_4 = arith.constant 0 : index
    %c0_5 = arith.constant 0 : index
    %3 = vector.load %arg3[%c0_3, %c0_4, %c0_5] : memref<9x128x128xbf16, #tpu.memory_space<vmem>>, vector<1x128x128xbf16>
    %4 = vector.shape_cast %3 : vector<1x128x128xbf16> to vector<128x128xbf16>
    %cst = arith.constant dense<0.000000e+00> : vector<256x128xf32>
    %5 = tpu.matmul %2, %4, %cst {dimension_numbers = #tpu.dot_dimension_numbers<[1], [0], [0], [1], [0, 0, 1, 1], [], []>} : vector<256x128xbf16>, vector<128x128xbf16>, vector<256x128xf32> -> vector<256x128xf32>
    %c0_6 = arith.constant 0 : index
    %c0_7 = arith.constant 0 : index
    %c1 = arith.constant 1 : index
    %c0_8 = arith.constant 0 : index
    %6 = vector.load %arg2[%c0_6, %c0_7, %c1, %c0_8] : memref<1x18x18x128xbf16, #tpu.memory_space<vmem>>, vector<1x16x16x128xbf16>
    %7 = vector.shape_cast %6 : vector<1x16x16x128xbf16> to vector<16x16x128xbf16>
    %8 = vector.shape_cast %7 : vector<16x16x128xbf16> to vector<256x128xbf16>
    %c1_9 = arith.constant 1 : index
    %c0_10 = arith.constant 0 : index
    %c0_11 = arith.constant 0 : index
    %9 = vector.load %arg3[%c1_9, %c0_10, %c0_11] : memref<9x128x128xbf16, #tpu.memory_space<vmem>>, vector<1x128x128xbf16>
    %10 = vector.shape_cast %9 : vector<1x128x128xbf16> to vector<128x128xbf16>
    %cst_12 = arith.constant dense<0.000000e+00> : vector<256x128xf32>
    %11 = tpu.matmul %8, %10, %cst_12 {dimension_numbers = #tpu.dot_dimension_numbers<[1], [0], [0], [1], [0, 0, 1, 1], [], []>} : vector<256x128xbf16>, vector<128x128xbf16>, vector<256x128xf32> -> vector<256x128xf32>
    %12 = arith.addf %5, %11 : vector<256x128xf32>
    %c0_13 = arith.constant 0 : index
    %c0_14 = arith.constant 0 : index
    %c2 = arith.constant 2 : index
    %c0_15 = arith.constant 0 : index
    %13 = vector.load %arg2[%c0_13, %c0_14, %c2, %c0_15] : memref<1x18x18x128xbf16, #tpu.memory_space<vmem>>, vector<1x16x16x128xbf16>
    %14 = vector.shape_cast %13 : vector<1x16x16x128xbf16> to vector<16x16x128xbf16>
    %15 = vector.shape_cast %14 : vector<16x16x128xbf16> to vector<256x128xbf16>
    %c2_16 = arith.constant 2 : index
    %c0_17 = arith.constant 0 : index
    %c0_18 = arith.constant 0 : index
    %16 = vector.load %arg3[%c2_16, %c0_17, %c0_18] : memref<9x128x128xbf16, #tpu.memory_space<vmem>>, vector<1x128x128xbf16>
    %17 = vector.shape_cast %16 : vector<1x128x128xbf16> to vector<128x128xbf16>
    %cst_19 = arith.constant dense<0.000000e+00> : vector<256x128xf32>
    %18 = tpu.matmul %15, %17, %cst_19 {dimension_numbers = #tpu.dot_dimension_numbers<[1], [0], [0], [1], [0, 0, 1, 1], [], []>} : vector<256x128xbf16>, vector<128x128xbf16>, vector<256x128xf32> -> vector<256x128xf32>
    %19 = arith.addf %12, %18 : vector<256x128xf32>
    %c0_20 = arith.constant 0 : index
    %c1_21 = arith.constant 1 : index
    %c0_22 = arith.constant 0 : index
    %c0_23 = arith.constant 0 : index
    %20 = vector.load %arg2[%c0_20, %c1_21, %c0_22, %c0_23] : memref<1x18x18x128xbf16, #tpu.memory_space<vmem>>, vector<1x16x16x128xbf16>
    %21 = vector.shape_cast %20 : vector<1x16x16x128xbf16> to vector<16x16x128xbf16>
    %22 = vector.shape_cast %21 : vector<16x16x128xbf16> to vector<256x128xbf16>
    %c3 = arith.constant 3 : index
    %c0_24 = arith.constant 0 : index
    %c0_25 = arith.constant 0 : index
    %23 = vector.load %arg3[%c3, %c0_24, %c0_25] : memref<9x128x128xbf16, #tpu.memory_space<vmem>>, vector<1x128x128xbf16>
    %24 = vector.shape_cast %23 : vector<1x128x128xbf16> to vector<128x128xbf16>
    %cst_26 = arith.constant dense<0.000000e+00> : vector<256x128xf32>
    %25 = tpu.matmul %22, %24, %cst_26 {dimension_numbers = #tpu.dot_dimension_numbers<[1], [0], [0], [1], [0, 0, 1, 1], [], []>} : vector<256x128xbf16>, vector<128x128xbf16>, vector<256x128xf32> -> vector<256x128xf32>
    %26 = arith.addf %19, %25 : vector<256x128xf32>
    %c0_27 = arith.constant 0 : index
    %c1_28 = arith.constant 1 : index
    %c1_29 = arith.constant 1 : index
    %c0_30 = arith.constant 0 : index
    %27 = vector.load %arg2[%c0_27, %c1_28, %c1_29, %c0_30] : memref<1x18x18x128xbf16, #tpu.memory_space<vmem>>, vector<1x16x16x128xbf16>
    %28 = vector.shape_cast %27 : vector<1x16x16x128xbf16> to vector<16x16x128xbf16>
    %29 = vector.shape_cast %28 : vector<16x16x128xbf16> to vector<256x128xbf16>
    %c4 = arith.constant 4 : index
    %c0_31 = arith.constant 0 : index
    %c0_32 = arith.constant 0 : index
    %30 = vector.load %arg3[%c4, %c0_31, %c0_32] : memref<9x128x128xbf16, #tpu.memory_space<vmem>>, vector<1x128x128xbf16>
    %31 = vector.shape_cast %30 : vector<1x128x128xbf16> to vector<128x128xbf16>
    %cst_33 = arith.constant dense<0.000000e+00> : vector<256x128xf32>
    %32 = tpu.matmul %29, %31, %cst_33 {dimension_numbers = #tpu.dot_dimension_numbers<[1], [0], [0], [1], [0, 0, 1, 1], [], []>} : vector<256x128xbf16>, vector<128x128xbf16>, vector<256x128xf32> -> vector<256x128xf32>
    %33 = arith.addf %26, %32 : vector<256x128xf32>
    %c0_34 = arith.constant 0 : index
    %c1_35 = arith.constant 1 : index
    %c2_36 = arith.constant 2 : index
    %c0_37 = arith.constant 0 : index
    %34 = vector.load %arg2[%c0_34, %c1_35, %c2_36, %c0_37] : memref<1x18x18x128xbf16, #tpu.memory_space<vmem>>, vector<1x16x16x128xbf16>
    %35 = vector.shape_cast %34 : vector<1x16x16x128xbf16> to vector<16x16x128xbf16>
    %36 = vector.shape_cast %35 : vector<16x16x128xbf16> to vector<256x128xbf16>
    %c5 = arith.constant 5 : index
    %c0_38 = arith.constant 0 : index
    %c0_39 = arith.constant 0 : index
    %37 = vector.load %arg3[%c5, %c0_38, %c0_39] : memref<9x128x128xbf16, #tpu.memory_space<vmem>>, vector<1x128x128xbf16>
    %38 = vector.shape_cast %37 : vector<1x128x128xbf16> to vector<128x128xbf16>
    %cst_40 = arith.constant dense<0.000000e+00> : vector<256x128xf32>
    %39 = tpu.matmul %36, %38, %cst_40 {dimension_numbers = #tpu.dot_dimension_numbers<[1], [0], [0], [1], [0, 0, 1, 1], [], []>} : vector<256x128xbf16>, vector<128x128xbf16>, vector<256x128xf32> -> vector<256x128xf32>
    %40 = arith.addf %33, %39 : vector<256x128xf32>
    %c0_41 = arith.constant 0 : index
    %c2_42 = arith.constant 2 : index
    %c0_43 = arith.constant 0 : index
    %c0_44 = arith.constant 0 : index
    %41 = vector.load %arg2[%c0_41, %c2_42, %c0_43, %c0_44] : memref<1x18x18x128xbf16, #tpu.memory_space<vmem>>, vector<1x16x16x128xbf16>
    %42 = vector.shape_cast %41 : vector<1x16x16x128xbf16> to vector<16x16x128xbf16>
    %43 = vector.shape_cast %42 : vector<16x16x128xbf16> to vector<256x128xbf16>
    %c6 = arith.constant 6 : index
    %c0_45 = arith.constant 0 : index
    %c0_46 = arith.constant 0 : index
    %44 = vector.load %arg3[%c6, %c0_45, %c0_46] : memref<9x128x128xbf16, #tpu.memory_space<vmem>>, vector<1x128x128xbf16>
    %45 = vector.shape_cast %44 : vector<1x128x128xbf16> to vector<128x128xbf16>
    %cst_47 = arith.constant dense<0.000000e+00> : vector<256x128xf32>
    %46 = tpu.matmul %43, %45, %cst_47 {dimension_numbers = #tpu.dot_dimension_numbers<[1], [0], [0], [1], [0, 0, 1, 1], [], []>} : vector<256x128xbf16>, vector<128x128xbf16>, vector<256x128xf32> -> vector<256x128xf32>
    %47 = arith.addf %40, %46 : vector<256x128xf32>
    %c0_48 = arith.constant 0 : index
    %c2_49 = arith.constant 2 : index
    %c1_50 = arith.constant 1 : index
    %c0_51 = arith.constant 0 : index
    %48 = vector.load %arg2[%c0_48, %c2_49, %c1_50, %c0_51] : memref<1x18x18x128xbf16, #tpu.memory_space<vmem>>, vector<1x16x16x128xbf16>
    %49 = vector.shape_cast %48 : vector<1x16x16x128xbf16> to vector<16x16x128xbf16>
    %50 = vector.shape_cast %49 : vector<16x16x128xbf16> to vector<256x128xbf16>
    %c7 = arith.constant 7 : index
    %c0_52 = arith.constant 0 : index
    %c0_53 = arith.constant 0 : index
    %51 = vector.load %arg3[%c7, %c0_52, %c0_53] : memref<9x128x128xbf16, #tpu.memory_space<vmem>>, vector<1x128x128xbf16>
    %52 = vector.shape_cast %51 : vector<1x128x128xbf16> to vector<128x128xbf16>
    %cst_54 = arith.constant dense<0.000000e+00> : vector<256x128xf32>
    %53 = tpu.matmul %50, %52, %cst_54 {dimension_numbers = #tpu.dot_dimension_numbers<[1], [0], [0], [1], [0, 0, 1, 1], [], []>} : vector<256x128xbf16>, vector<128x128xbf16>, vector<256x128xf32> -> vector<256x128xf32>
    %54 = arith.addf %47, %53 : vector<256x128xf32>
    %c0_55 = arith.constant 0 : index
    %c2_56 = arith.constant 2 : index
    %c2_57 = arith.constant 2 : index
    %c0_58 = arith.constant 0 : index
    %55 = vector.load %arg2[%c0_55, %c2_56, %c2_57, %c0_58] : memref<1x18x18x128xbf16, #tpu.memory_space<vmem>>, vector<1x16x16x128xbf16>
    %56 = vector.shape_cast %55 : vector<1x16x16x128xbf16> to vector<16x16x128xbf16>
    %57 = vector.shape_cast %56 : vector<16x16x128xbf16> to vector<256x128xbf16>
    %c8 = arith.constant 8 : index
    %c0_59 = arith.constant 0 : index
    %c0_60 = arith.constant 0 : index
    %58 = vector.load %arg3[%c8, %c0_59, %c0_60] : memref<9x128x128xbf16, #tpu.memory_space<vmem>>, vector<1x128x128xbf16>
    %59 = vector.shape_cast %58 : vector<1x128x128xbf16> to vector<128x128xbf16>
    %cst_61 = arith.constant dense<0.000000e+00> : vector<256x128xf32>
    %60 = tpu.matmul %57, %59, %cst_61 {dimension_numbers = #tpu.dot_dimension_numbers<[1], [0], [0], [1], [0, 0, 1, 1], [], []>} : vector<256x128xbf16>, vector<128x128xbf16>, vector<256x128xf32> -> vector<256x128xf32>
    %61 = arith.addf %54, %60 : vector<256x128xf32>
    %c0_62 = arith.constant 0 : index
    %c0_63 = arith.constant 0 : index
    %62 = vector.load %arg4[%c0_62, %c0_63] : memref<1x128xf32, #tpu.memory_space<vmem>>, vector<1x128xf32>
    %63 = vector.broadcast %62 : vector<1x128xf32> to vector<256x128xf32>
    %64 = arith.addf %61, %63 : vector<256x128xf32>
    %cst_64 = arith.constant 0.000000e+00 : f32
    %65 = vector.broadcast %cst_64 : f32 to vector<256x128xf32>
    %66 = arith.maximumf %64, %65 : vector<256x128xf32>
    %67 = vector.shape_cast %66 : vector<256x128xf32> to vector<1x16x16x128xf32>
    %68 = arith.truncf %67 : vector<1x16x16x128xf32> to vector<1x16x16x128xbf16>
    %c0_65 = arith.constant 0 : index
    %c0_66 = arith.constant 0 : index
    %c0_67 = arith.constant 0 : index
    %c0_68 = arith.constant 0 : index
    %69 = vector.load %arg5[%c0_65, %c0_66, %c0_67, %c0_68] : memref<1x16x16x128xbf16, #tpu.memory_space<vmem>>, vector<1x16x16x128xbf16>
    tpu.vector_store %arg5[%c0_65, %c0_66, %c0_67, %c0_68], %68 {strides = array<i32>} : memref<1x16x16x128xbf16, #tpu.memory_space<vmem>>, vector<1x16x16x128xbf16>,
    return
  }
  func.func @transform_0(%arg0: i32, %arg1: i32) -> (i32, i32, i32, i32) {
    %c0_i32 = arith.constant 0 : i32
    %c0_i32_0 = arith.constant 0 : i32
    %c0_i32_1 = arith.constant 0 : i32
    %c0_i32_2 = arith.constant 0 : i32
    return %arg0, %c0_i32, %c0_i32_0, %c0_i32_1 : i32, i32, i32, i32
  }
  func.func @transform_1(%arg0: i32, %arg1: i32) -> (i32, i32, i32) {
    %c0_i32 = arith.constant 0 : i32
    %c0_i32_0 = arith.constant 0 : i32
    %c0_i32_1 = arith.constant 0 : i32
    return %c0_i32, %c0_i32_0, %arg1 : i32, i32, i32
  }
  func.func @transform_2(%arg0: i32, %arg1: i32) -> (i32, i32) {
    %c0_i32 = arith.constant 0 : i32
    %c0_i32_0 = arith.constant 0 : i32
    return %c0_i32, %arg1 : i32, i32
  }
  func.func @transform_3(%arg0: i32, %arg1: i32) -> (i32, i32, i32, i32) {
    %c0_i32 = arith.constant 0 : i32
    %c0_i32_0 = arith.constant 0 : i32
    %c0_i32_1 = arith.constant 0 : i32
    return %arg0, %c0_i32, %c0_i32_0, %arg1 : i32, i32, i32, i32
  }
}

module attributes {stable_mosaic.version = 11 : i64} {
  func.func @_conv3x3_kernel(%arg0: i32, %arg1: i32, %arg2: memref<1x10x10x128xbf16, #tpu.memory_space<vmem>>, %arg3: memref<9x128x128xbf16, #tpu.memory_space<vmem>>, %arg4: memref<1x128xf32, #tpu.memory_space<vmem>>, %arg5: memref<1x8x8x128xbf16, #tpu.memory_space<vmem>>) attributes {dimension_semantics = [#tpu.dimension_semantics<parallel>, #tpu.dimension_semantics<parallel>], iteration_bounds = array<i64: 2, 1>, scalar_prefetch = 0 : i64, scratch_operands = 0 : i64, tpu.core_type = #tpu.core_type<tc>, window_params = [{transform_indices = @transform_0, window_bounds = array<i64: 1, 10, 10, 128>}, {transform_indices = @transform_1, window_bounds = array<i64: 9, 128, 128>}, {transform_indices = @transform_2, window_bounds = array<i64: 1, 128>}, {transform_indices = @transform_3, window_bounds = array<i64: 1, 8, 8, 128>}]} {
    %c0 = arith.constant 0 : index
    %c0_0 = arith.constant 0 : index
    %c0_1 = arith.constant 0 : index
    %c0_2 = arith.constant 0 : index
    %0 = vector.load %arg2[%c0, %c0_0, %c0_1, %c0_2] : memref<1x10x10x128xbf16, #tpu.memory_space<vmem>>, vector<1x8x8x128xbf16>
    %1 = vector.shape_cast %0 : vector<1x8x8x128xbf16> to vector<8x8x128xbf16>
    %2 = vector.shape_cast %1 : vector<8x8x128xbf16> to vector<64x128xbf16>
    %c0_3 = arith.constant 0 : index
    %c0_4 = arith.constant 0 : index
    %c0_5 = arith.constant 0 : index
    %3 = vector.load %arg3[%c0_3, %c0_4, %c0_5] : memref<9x128x128xbf16, #tpu.memory_space<vmem>>, vector<1x128x128xbf16>
    %4 = vector.shape_cast %3 : vector<1x128x128xbf16> to vector<128x128xbf16>
    %cst = arith.constant dense<0.000000e+00> : vector<64x128xf32>
    %5 = tpu.matmul %2, %4, %cst {dimension_numbers = #tpu.dot_dimension_numbers<[1], [0], [0], [1], [0, 0, 1, 1], [], []>} : vector<64x128xbf16>, vector<128x128xbf16>, vector<64x128xf32> -> vector<64x128xf32>
    %c0_6 = arith.constant 0 : index
    %c0_7 = arith.constant 0 : index
    %c1 = arith.constant 1 : index
    %c0_8 = arith.constant 0 : index
    %6 = vector.load %arg2[%c0_6, %c0_7, %c1, %c0_8] : memref<1x10x10x128xbf16, #tpu.memory_space<vmem>>, vector<1x8x8x128xbf16>
    %7 = vector.shape_cast %6 : vector<1x8x8x128xbf16> to vector<8x8x128xbf16>
    %8 = vector.shape_cast %7 : vector<8x8x128xbf16> to vector<64x128xbf16>
    %c1_9 = arith.constant 1 : index
    %c0_10 = arith.constant 0 : index
    %c0_11 = arith.constant 0 : index
    %9 = vector.load %arg3[%c1_9, %c0_10, %c0_11] : memref<9x128x128xbf16, #tpu.memory_space<vmem>>, vector<1x128x128xbf16>
    %10 = vector.shape_cast %9 : vector<1x128x128xbf16> to vector<128x128xbf16>
    %cst_12 = arith.constant dense<0.000000e+00> : vector<64x128xf32>
    %11 = tpu.matmul %8, %10, %cst_12 {dimension_numbers = #tpu.dot_dimension_numbers<[1], [0], [0], [1], [0, 0, 1, 1], [], []>} : vector<64x128xbf16>, vector<128x128xbf16>, vector<64x128xf32> -> vector<64x128xf32>
    %12 = arith.addf %5, %11 : vector<64x128xf32>
    %c0_13 = arith.constant 0 : index
    %c0_14 = arith.constant 0 : index
    %c2 = arith.constant 2 : index
    %c0_15 = arith.constant 0 : index
    %13 = vector.load %arg2[%c0_13, %c0_14, %c2, %c0_15] : memref<1x10x10x128xbf16, #tpu.memory_space<vmem>>, vector<1x8x8x128xbf16>
    %14 = vector.shape_cast %13 : vector<1x8x8x128xbf16> to vector<8x8x128xbf16>
    %15 = vector.shape_cast %14 : vector<8x8x128xbf16> to vector<64x128xbf16>
    %c2_16 = arith.constant 2 : index
    %c0_17 = arith.constant 0 : index
    %c0_18 = arith.constant 0 : index
    %16 = vector.load %arg3[%c2_16, %c0_17, %c0_18] : memref<9x128x128xbf16, #tpu.memory_space<vmem>>, vector<1x128x128xbf16>
    %17 = vector.shape_cast %16 : vector<1x128x128xbf16> to vector<128x128xbf16>
    %cst_19 = arith.constant dense<0.000000e+00> : vector<64x128xf32>
    %18 = tpu.matmul %15, %17, %cst_19 {dimension_numbers = #tpu.dot_dimension_numbers<[1], [0], [0], [1], [0, 0, 1, 1], [], []>} : vector<64x128xbf16>, vector<128x128xbf16>, vector<64x128xf32> -> vector<64x128xf32>
    %19 = arith.addf %12, %18 : vector<64x128xf32>
    %c0_20 = arith.constant 0 : index
    %c1_21 = arith.constant 1 : index
    %c0_22 = arith.constant 0 : index
    %c0_23 = arith.constant 0 : index
    %20 = vector.load %arg2[%c0_20, %c1_21, %c0_22, %c0_23] : memref<1x10x10x128xbf16, #tpu.memory_space<vmem>>, vector<1x8x8x128xbf16>
    %21 = vector.shape_cast %20 : vector<1x8x8x128xbf16> to vector<8x8x128xbf16>
    %22 = vector.shape_cast %21 : vector<8x8x128xbf16> to vector<64x128xbf16>
    %c3 = arith.constant 3 : index
    %c0_24 = arith.constant 0 : index
    %c0_25 = arith.constant 0 : index
    %23 = vector.load %arg3[%c3, %c0_24, %c0_25] : memref<9x128x128xbf16, #tpu.memory_space<vmem>>, vector<1x128x128xbf16>
    %24 = vector.shape_cast %23 : vector<1x128x128xbf16> to vector<128x128xbf16>
    %cst_26 = arith.constant dense<0.000000e+00> : vector<64x128xf32>
    %25 = tpu.matmul %22, %24, %cst_26 {dimension_numbers = #tpu.dot_dimension_numbers<[1], [0], [0], [1], [0, 0, 1, 1], [], []>} : vector<64x128xbf16>, vector<128x128xbf16>, vector<64x128xf32> -> vector<64x128xf32>
    %26 = arith.addf %19, %25 : vector<64x128xf32>
    %c0_27 = arith.constant 0 : index
    %c1_28 = arith.constant 1 : index
    %c1_29 = arith.constant 1 : index
    %c0_30 = arith.constant 0 : index
    %27 = vector.load %arg2[%c0_27, %c1_28, %c1_29, %c0_30] : memref<1x10x10x128xbf16, #tpu.memory_space<vmem>>, vector<1x8x8x128xbf16>
    %28 = vector.shape_cast %27 : vector<1x8x8x128xbf16> to vector<8x8x128xbf16>
    %29 = vector.shape_cast %28 : vector<8x8x128xbf16> to vector<64x128xbf16>
    %c4 = arith.constant 4 : index
    %c0_31 = arith.constant 0 : index
    %c0_32 = arith.constant 0 : index
    %30 = vector.load %arg3[%c4, %c0_31, %c0_32] : memref<9x128x128xbf16, #tpu.memory_space<vmem>>, vector<1x128x128xbf16>
    %31 = vector.shape_cast %30 : vector<1x128x128xbf16> to vector<128x128xbf16>
    %cst_33 = arith.constant dense<0.000000e+00> : vector<64x128xf32>
    %32 = tpu.matmul %29, %31, %cst_33 {dimension_numbers = #tpu.dot_dimension_numbers<[1], [0], [0], [1], [0, 0, 1, 1], [], []>} : vector<64x128xbf16>, vector<128x128xbf16>, vector<64x128xf32> -> vector<64x128xf32>
    %33 = arith.addf %26, %32 : vector<64x128xf32>
    %c0_34 = arith.constant 0 : index
    %c1_35 = arith.constant 1 : index
    %c2_36 = arith.constant 2 : index
    %c0_37 = arith.constant 0 : index
    %34 = vector.load %arg2[%c0_34, %c1_35, %c2_36, %c0_37] : memref<1x10x10x128xbf16, #tpu.memory_space<vmem>>, vector<1x8x8x128xbf16>
    %35 = vector.shape_cast %34 : vector<1x8x8x128xbf16> to vector<8x8x128xbf16>
    %36 = vector.shape_cast %35 : vector<8x8x128xbf16> to vector<64x128xbf16>
    %c5 = arith.constant 5 : index
    %c0_38 = arith.constant 0 : index
    %c0_39 = arith.constant 0 : index
    %37 = vector.load %arg3[%c5, %c0_38, %c0_39] : memref<9x128x128xbf16, #tpu.memory_space<vmem>>, vector<1x128x128xbf16>
    %38 = vector.shape_cast %37 : vector<1x128x128xbf16> to vector<128x128xbf16>
    %cst_40 = arith.constant dense<0.000000e+00> : vector<64x128xf32>
    %39 = tpu.matmul %36, %38, %cst_40 {dimension_numbers = #tpu.dot_dimension_numbers<[1], [0], [0], [1], [0, 0, 1, 1], [], []>} : vector<64x128xbf16>, vector<128x128xbf16>, vector<64x128xf32> -> vector<64x128xf32>
    %40 = arith.addf %33, %39 : vector<64x128xf32>
    %c0_41 = arith.constant 0 : index
    %c2_42 = arith.constant 2 : index
    %c0_43 = arith.constant 0 : index
    %c0_44 = arith.constant 0 : index
    %41 = vector.load %arg2[%c0_41, %c2_42, %c0_43, %c0_44] : memref<1x10x10x128xbf16, #tpu.memory_space<vmem>>, vector<1x8x8x128xbf16>
    %42 = vector.shape_cast %41 : vector<1x8x8x128xbf16> to vector<8x8x128xbf16>
    %43 = vector.shape_cast %42 : vector<8x8x128xbf16> to vector<64x128xbf16>
    %c6 = arith.constant 6 : index
    %c0_45 = arith.constant 0 : index
    %c0_46 = arith.constant 0 : index
    %44 = vector.load %arg3[%c6, %c0_45, %c0_46] : memref<9x128x128xbf16, #tpu.memory_space<vmem>>, vector<1x128x128xbf16>
    %45 = vector.shape_cast %44 : vector<1x128x128xbf16> to vector<128x128xbf16>
    %cst_47 = arith.constant dense<0.000000e+00> : vector<64x128xf32>
    %46 = tpu.matmul %43, %45, %cst_47 {dimension_numbers = #tpu.dot_dimension_numbers<[1], [0], [0], [1], [0, 0, 1, 1], [], []>} : vector<64x128xbf16>, vector<128x128xbf16>, vector<64x128xf32> -> vector<64x128xf32>
    %47 = arith.addf %40, %46 : vector<64x128xf32>
    %c0_48 = arith.constant 0 : index
    %c2_49 = arith.constant 2 : index
    %c1_50 = arith.constant 1 : index
    %c0_51 = arith.constant 0 : index
    %48 = vector.load %arg2[%c0_48, %c2_49, %c1_50, %c0_51] : memref<1x10x10x128xbf16, #tpu.memory_space<vmem>>, vector<1x8x8x128xbf16>
    %49 = vector.shape_cast %48 : vector<1x8x8x128xbf16> to vector<8x8x128xbf16>
    %50 = vector.shape_cast %49 : vector<8x8x128xbf16> to vector<64x128xbf16>
    %c7 = arith.constant 7 : index
    %c0_52 = arith.constant 0 : index
    %c0_53 = arith.constant 0 : index
    %51 = vector.load %arg3[%c7, %c0_52, %c0_53] : memref<9x128x128xbf16, #tpu.memory_space<vmem>>, vector<1x128x128xbf16>
    %52 = vector.shape_cast %51 : vector<1x128x128xbf16> to vector<128x128xbf16>
    %cst_54 = arith.constant dense<0.000000e+00> : vector<64x128xf32>
    %53 = tpu.matmul %50, %52, %cst_54 {dimension_numbers = #tpu.dot_dimension_numbers<[1], [0], [0], [1], [0, 0, 1, 1], [], []>} : vector<64x128xbf16>, vector<128x128xbf16>, vector<64x128xf32> -> vector<64x128xf32>
    %54 = arith.addf %47, %53 : vector<64x128xf32>
    %c0_55 = arith.constant 0 : index
    %c2_56 = arith.constant 2 : index
    %c2_57 = arith.constant 2 : index
    %c0_58 = arith.constant 0 : index
    %55 = vector.load %arg2[%c0_55, %c2_56, %c2_57, %c0_58] : memref<1x10x10x128xbf16, #tpu.memory_space<vmem>>, vector<1x8x8x128xbf16>
    %56 = vector.shape_cast %55 : vector<1x8x8x128xbf16> to vector<8x8x128xbf16>
    %57 = vector.shape_cast %56 : vector<8x8x128xbf16> to vector<64x128xbf16>
    %c8 = arith.constant 8 : index
    %c0_59 = arith.constant 0 : index
    %c0_60 = arith.constant 0 : index
    %58 = vector.load %arg3[%c8, %c0_59, %c0_60] : memref<9x128x128xbf16, #tpu.memory_space<vmem>>, vector<1x128x128xbf16>
    %59 = vector.shape_cast %58 : vector<1x128x128xbf16> to vector<128x128xbf16>
    %cst_61 = arith.constant dense<0.000000e+00> : vector<64x128xf32>
    %60 = tpu.matmul %57, %59, %cst_61 {dimension_numbers = #tpu.dot_dimension_numbers<[1], [0], [0], [1], [0, 0, 1, 1], [], []>} : vector<64x128xbf16>, vector<128x128xbf16>, vector<64x128xf32> -> vector<64x128xf32>
    %61 = arith.addf %54, %60 : vector<64x128xf32>
    %c0_62 = arith.constant 0 : index
    %c0_63 = arith.constant 0 : index
    %62 = vector.load %arg4[%c0_62, %c0_63] : memref<1x128xf32, #tpu.memory_space<vmem>>, vector<1x128xf32>
    %63 = vector.broadcast %62 : vector<1x128xf32> to vector<64x128xf32>
    %64 = arith.addf %61, %63 : vector<64x128xf32>
    %cst_64 = arith.constant 0.000000e+00 : f32
    %65 = vector.broadcast %cst_64 : f32 to vector<64x128xf32>
    %66 = arith.maximumf %64, %65 : vector<64x128xf32>
    %67 = vector.shape_cast %66 : vector<64x128xf32> to vector<1x8x8x128xf32>
    %68 = arith.truncf %67 : vector<1x8x8x128xf32> to vector<1x8x8x128xbf16>
    %c0_65 = arith.constant 0 : index
    %c0_66 = arith.constant 0 : index
    %c0_67 = arith.constant 0 : index
    %c0_68 = arith.constant 0 : index
    %69 = vector.load %arg5[%c0_65, %c0_66, %c0_67, %c0_68] : memref<1x8x8x128xbf16, #tpu.memory_space<vmem>>, vector<1x8x8x128xbf16>
    tpu.vector_store %arg5[%c0_65, %c0_66, %c0_67, %c0_68], %68 {strides = array<i32>} : memref<1x8x8x128xbf16, #tpu.memory_space<vmem>>, vector<1x8x8x128xbf16>,
    return
  }
  func.func @transform_0(%arg0: i32, %arg1: i32) -> (i32, i32, i32, i32) {
    %c0_i32 = arith.constant 0 : i32
    %c0_i32_0 = arith.constant 0 : i32
    %c0_i32_1 = arith.constant 0 : i32
    %c0_i32_2 = arith.constant 0 : i32
    return %arg0, %c0_i32, %c0_i32_0, %c0_i32_1 : i32, i32, i32, i32
  }
  func.func @transform_1(%arg0: i32, %arg1: i32) -> (i32, i32, i32) {
    %c0_i32 = arith.constant 0 : i32
    %c0_i32_0 = arith.constant 0 : i32
    %c0_i32_1 = arith.constant 0 : i32
    return %c0_i32, %c0_i32_0, %arg1 : i32, i32, i32
  }
  func.func @transform_2(%arg0: i32, %arg1: i32) -> (i32, i32) {
    %c0_i32 = arith.constant 0 : i32
    %c0_i32_0 = arith.constant 0 : i32
    return %c0_i32, %arg1 : i32, i32
  }
  func.func @transform_3(%arg0: i32, %arg1: i32) -> (i32, i32, i32, i32) {
    %c0_i32 = arith.constant 0 : i32
    %c0_i32_0 = arith.constant 0 : i32
    %c0_i32_1 = arith.constant 0 : i32
    return %arg0, %c0_i32, %c0_i32_0, %arg1 : i32, i32, i32, i32
  }
}

</mosaic_0001>

<llo_original>
// kernel: _lambda_.6
$region0: #{_lambda_.6}
  #allocation0 [shape = 'u32[]', space=smem, size = 0x4, offset = 0x4, fixed_abs, tag = 'smem constant byte address 0x4 - core index']
  #allocation1 [shape = 'u32[72,128]{1,0:T(1,128)}', space=vmem, size = 0x9000, scoped, tag = 'internal scratch']
  %s0 = inlined_call_operand.vmem [shape: bf16[2,10,10,128], index: 0, kind: input, shape index: {}]
  %s1 = inlined_call_operand.hbm [shape: bf16[9,128,128], index: 1, kind: input, shape index: {}]
  %s2 = inlined_call_operand.hbm [shape: f32[1,128], index: 2, kind: input, shape index: {}]
  %s3 = inlined_call_operand.vmem [shape: bf16[2,8,8,128], index: 3, kind: output, shape index: {}]
  %s4 = sld [smem:[#allocation0]]
  $region53: #{_lambda_.6} parent=0
    _
  %s6 = ssub.s32 1, %s4
  %s7 = scalar_select 0, %s6, %s4
  $region1: #{_lambda_.6} parent=0
    #allocation2 [shape = 'u8[294912]{0}', space=vmem, size = 0x48000, scoped, tag = 'input window, operand 1, single buffered']
    #allocation3 [shape = 's32[2]{0}', space=sflag, size = 0x8, scoped, tag = 'scoped memory for _lambda_.6']
    #allocation4 [shape = 'u8[512]{0}', space=vmem, size = 0x400, scoped, tag = 'input window, operand 2, single buffered']
    #allocation5 [shape = 's32[1]{0}', space=sflag, size = 0x4, scoped, tag = 'scoped memory for _lambda_.6']
    %8 = vsyncpa [#allocation3], 0
    %9 = vsyncpa [#allocation5], 0
    loop: start=0, step=1, limit=4
    $region2: #{_lambda_.6} parent=1 // loop_pre_header
      _
    $region3: #{_lambda_.6} parent=1 // loop_header
      %s11 = sphi 0, %s15
      %p12 = scmp.ge.s32.totalorder %s11, 4
      %s18 = sphi 0, %s30
      %s19 = sphi 0, %s26
      %s20 = sphi 0, %s18
      %s21 = sphi 0, %s19
      %s22 = sphi 0, %s20
      %s23 = sphi 0, %s21
      %s33 = sphi 0, %s35
      %s36 = sphi 0, %s33
      %s37 = sphi 0, %s36
      %s53 = sphi 0, %s37
      %s59 = sphi 0, %s61
      %s62 = sphi 0, %s59
      %s63 = sphi 0, %s62
      %s79 = sphi 0, %s63
      %s85 = sphi 0, %s87
      %s88 = sphi 0, %s85
      %s89 = sphi 0, %s88
      %s105 = sphi 0, %s89
      %s113 = sphi 0, %s115
      %s116 = sphi 0, %s113
      %s117 = sphi 0, %s116
      %s133 = sphi 0, %s117
    $region4: #{_lambda_.6} parent=1 // loop_header_branch
      %14 = sbr.rel (%p12) target = $region8
    $region5: #{_lambda_.6} parent=1 // loop_body
      %s16 = ssub.s32 %s11, 1
      %s17 = ssub.s32 %s11, 2
      %s24 = sadd.s32 1, %s19
      %p25 = scmp.ge.s32.totalorder %s24, 1
      %s26 = scalar_select %p25, 0, %s24
      %s27 = sadd.s32 1, %s18
      %s28 = scalar_select %p25, %s27, %s18
      %p29 = scmp.ge.s32.totalorder %s28, 2
      %s30 = scalar_select %p29, 0, %s28
      %s31 = ssub.s32 %s18, %s30
      %p32 = scmp.eq.s32.totalorder %s31, 0
      %s34 = sadd.s32 %s33, 1
      %s35 = scalar_select %p32, %s33, %s34
      %p38 = pneg %p32
      %p39 = scmp.eq.s32.totalorder %s11, 1
      %p40 = por %p38, %p39
      %p41 = scmp.ne.s32.totalorder %s33, %s36
      %p42 = scmp.eq.s32.totalorder %s11, 0
      %p43 = por %p41, %p42
      %p44 = scmp.ne.s32.totalorder %s33, %s36
      %p45 = scmp.eq.s32.totalorder %s16, 1
      %p46 = por %p44, %p45
      %p47 = scmp.ne.s32.totalorder %s36, %s37
      %p48 = scmp.eq.s32.totalorder %s16, 0
      %p49 = por %p47, %p48
      %p50 = scmp.ne.s32.totalorder %s36, %s37
      %p51 = scmp.eq.s32.totalorder %s17, 1
      %p52 = por %p50, %p51
      %p54 = scmp.ne.s32.totalorder %s37, %s53
      %p55 = scmp.eq.s32.totalorder %s17, 0
      %p56 = por %p54, %p55
      %s57 = ssub.s32 %s19, %s26
      %p58 = scmp.eq.s32.totalorder %s57, 0
      %s60 = sadd.s32 %s59, 1
      %s61 = scalar_select %p58, %s59, %s60
      %p64 = pneg %p58
      %p65 = scmp.eq.s32.totalorder %s11, 1
      %p66 = por %p64, %p65
      %p67 = scmp.ne.s32.totalorder %s59, %s62
      %p68 = scmp.eq.s32.totalorder %s11, 0
      %p69 = por %p67, %p68
      %p70 = scmp.ne.s32.totalorder %s59, %s62
      %p71 = scmp.eq.s32.totalorder %s16, 1
      %p72 = por %p70, %p71
      %p73 = scmp.ne.s32.totalorder %s62, %s63
      %p74 = scmp.eq.s32.totalorder %s16, 0
      %p75 = por %p73, %p74
      %p76 = scmp.ne.s32.totalorder %s62, %s63
      %p77 = scmp.eq.s32.totalorder %s17, 1
      %p78 = por %p76, %p77
      %p80 = scmp.ne.s32.totalorder %s63, %s79
      %p81 = scmp.eq.s32.totalorder %s17, 0
      %p82 = por %p80, %p81
      %s83 = ssub.s32 %s19, %s26
      %p84 = scmp.eq.s32.totalorder %s83, 0
      %s86 = sadd.s32 %s85, 1
      %s87 = scalar_select %p84, %s85, %s86
      %p90 = pneg %p84
      %p91 = scmp.eq.s32.totalorder %s11, 1
      %p92 = por %p90, %p91
      %p93 = scmp.ne.s32.totalorder %s85, %s88
      %p94 = scmp.eq.s32.totalorder %s11, 0
      %p95 = por %p93, %p94
      %p96 = scmp.ne.s32.totalorder %s85, %s88
      %p97 = scmp.eq.s32.totalorder %s16, 1
      %p98 = por %p96, %p97
      %p99 = scmp.ne.s32.totalorder %s88, %s89
      %p100 = scmp.eq.s32.totalorder %s16, 0
      %p101 = por %p99, %p100
      %p102 = scmp.ne.s32.totalorder %s88, %s89
      %p103 = scmp.eq.s32.totalorder %s17, 1
      %p104 = por %p102, %p103
      %p106 = scmp.ne.s32.totalorder %s89, %s105
      %p107 = scmp.eq.s32.totalorder %s17, 0
      %p108 = por %p106, %p107
      %s109 = ssub.s32 %s18, %s30
      %s110 = ssub.s32 %s19, %s26
      %s111 = sor.u32 %s109, %s110
      %p112 = scmp.eq.s32.totalorder %s111, 0
      %s114 = sadd.s32 %s113, 1
      %s115 = scalar_select %p112, %s113, %s114
      %p118 = pneg %p112
      %p119 = scmp.eq.s32.totalorder %s11, 1
      %p120 = por %p118, %p119
      %p121 = scmp.ne.s32.totalorder %s113, %s116
      %p122 = scmp.eq.s32.totalorder %s11, 0
      %p123 = por %p121, %p122
      %p124 = scmp.ne.s32.totalorder %s113, %s116
      %p125 = scmp.eq.s32.totalorder %s16, 1
      %p126 = por %p124, %p125
      %p127 = scmp.ne.s32.totalorder %s116, %s117
      %p128 = scmp.eq.s32.totalorder %s16, 0
      %p129 = por %p127, %p128
      %p130 = scmp.ne.s32.totalorder %s116, %s117
      %p131 = scmp.eq.s32.totalorder %s17, 1
      %p132 = por %p130, %p131
      %p134 = scmp.ne.s32.totalorder %s117, %s133
      %p135 = scmp.eq.s32.totalorder %s17, 0
      %p136 = por %p134, %p135
      %p137 = scmp.le.s32.totalorder 1, %s11
      %p138 = scmp.lt.s32.totalorder %s11, 3
      %p139 = pnand %p137, %p138
      %p140 = pneg %p139
      // Predicated region
      $region9: #{_lambda_.6} parent=5 // pred_check
        _
      $region10: #{_lambda_.6} parent=5 // pred_check_branch
        %142 = sbr.rel (%p139) target = $region12
      $region11: #{_lambda_.6} parent=5 // pred_region
        %s143 = ssub.s32 %s11, 1
        // Predicated region
        $region13: #{_lambda_.6} parent=11 // pred_check
          %p144 = pneg %p75
        $region14: #{_lambda_.6} parent=11 // pred_check_branch
          %146 = sbr.rel (%p144) target = $region16
        $region15: #{_lambda_.6} parent=11 // pred_region
          %148 = vsyncadd [#allocation3], 0
          %s149 = smul.addr %s21, 4
          %s150 = scalar_lea.hbm %s1, %s149
          %s151 = sshll.u32 %s150, 4
          %s152 = int_to_ptr.hbm [resolvable:$true] %s151
          %s153 = sshll.u32 [#allocation2], 4
          %s154 = int_to_ptr.vmem [resolvable:$true] %s153
          %159 = dma.hbm_to_vmem [thread:$0]  %s152, 9216, %s154, [#allocation3], 64, 64, 4
        $region16: #{_lambda_.6} parent=11 // pred_fallthru
          _
        // Predicated region
        $region17: #{_lambda_.6} parent=11 // pred_check
          %p160 = pneg %p101
        $region18: #{_lambda_.6} parent=11 // pred_check_branch
          %162 = sbr.rel (%p160) target = $region20
        $region19: #{_lambda_.6} parent=11 // pred_region
          %164 = vsyncadd [#allocation5], 0
          %s165 = scalar_lea.hbm %s2, %s21
          %s167 = sshll.u32 %s165, 4
          %s168 = int_to_ptr.hbm [resolvable:$true] %s167
          %s169 = sshll.u32 [#allocation4], 4
          %s170 = int_to_ptr.vmem [resolvable:$true] %s169
          %172 = dma.hbm_to_vmem [thread:$0]  %s168, 16, %s170, [#allocation5]
        $region20: #{_lambda_.6} parent=11 // pred_fallthru
          _
      $region12: #{_lambda_.6} parent=5 // pred_fallthru
        _
      %p173 = scmp.lt.s32.totalorder %s11, 2
      // Predicated region
      $region21: #{_lambda_.6} parent=5 // pred_check
        %p174 = pneg %p173
      $region22: #{_lambda_.6} parent=5 // pred_check_branch
        %176 = sbr.rel (%p174) target = $region24
      $region23: #{_lambda_.6} parent=5 // pred_region
        // Predicated region
        $region25: #{_lambda_.6} parent=23 // pred_check
          %p177 = pneg %p43
        $region26: #{_lambda_.6} parent=23 // pred_check_branch
          %179 = sbr.rel (%p177) target = $region28
        $region27: #{_lambda_.6} parent=23 // pred_region
          %p180 = scmp.lt.s32.totalorder %s18, 1
          %s181 = scalar_select %p180, %s18, 1
          %s182 = smul.addr %s181, 20
          %s183 = smul.addr %s182, 4
          %s184 = scalar_lea.vmem %s0, %s183
        $region28: #{_lambda_.6} parent=23 // pred_fallthru
          _
      $region24: #{_lambda_.6} parent=5 // pred_fallthru
        _
      %p185 = scmp.le.s32.totalorder 1, %s11
      %p186 = scmp.lt.s32.totalorder %s11, 3
      %p187 = pnand %p185, %p186
      %p188 = pneg %p187
      // Predicated region
      $region29: #{_lambda_.6} parent=5 // pred_check
        _
      $region30: #{_lambda_.6} parent=5 // pred_check_branch
        %190 = sbr.rel (%p187) target = $region32
      $region31: #{_lambda_.6} parent=5 // pred_region
        %s191 = ssub.s32 %s11, 1
        // Predicated region
        $region33: #{_lambda_.6} parent=31 // pred_check
          %p192 = pneg %p75
        $region34: #{_lambda_.6} parent=31 // pred_check_branch
          %194 = sbr.rel (%p192) target = $region36
        $region35: #{_lambda_.6} parent=31 // pred_region
          %196 = dma.done [#allocation3], 9216
        $region36: #{_lambda_.6} parent=31 // pred_fallthru
          _
        // Predicated region
        $region37: #{_lambda_.6} parent=31 // pred_check
          %p197 = pneg %p101
        $region38: #{_lambda_.6} parent=31 // pred_check_branch
          %199 = sbr.rel (%p197) target = $region40
        $region39: #{_lambda_.6} parent=31 // pred_region
          %201 = dma.done [#allocation5], 16
        $region40: #{_lambda_.6} parent=31 // pred_fallthru
          _
        %p202 = scmp.lt.s32.totalorder %s20, 1
        %s203 = scalar_select %p202, %s20, 1
        %s204 = smul.addr %s203, 20
        %s205 = smul.addr %s204, 4
        %s206 = scalar_lea.vmem %s0, %s205
        %p207 = pneg %p49
        %p208 = pneg %p46
        %p209 = pneg %p75
        %p210 = pneg %p72
        %p211 = pneg %p101
        %p212 = pneg %p98
        %p213 = pneg %p129
        %p214 = pneg %p126
        %p215 = scmp.lt.s32.totalorder %s20, 1
        %s216 = scalar_select %p215, %s20, 1
        %p217 = scmp.lt.s32.totalorder %s21, 0
        %s218 = scalar_select %p217, %s21, 0
        %s219 = smul.addr %s216, 8
        %s220 = sadd.s32 %s218, %s219
        %s221 = smul.addr %s220, 4
        %s222 = scalar_lea.vmem %s3, %s221
        %p223 = scmp.lt.s32.totalorder %s20, 1
        %s224 = scalar_select %p223, %s20, 1
        %s225 = smul.addr %s224, 20
        %s226 = smul.addr %s225, 4
        %s227 = scalar_lea.vmem %s0, %s226
        %p228 = scmp.lt.s32.totalorder %s20, 1
        %s229 = scalar_select %p228, %s20, 1
        %p230 = scmp.lt.s32.totalorder %s21, 0
        %s231 = scalar_select %p230, %s21, 0
        %s232 = smul.addr %s229, 8
        %s233 = sadd.s32 %s231, %s232
        %s234 = smul.addr %s233, 4
        %s235 = scalar_lea.vmem %s3, %s234
        %v236 = vld [vmem:[%s227] sm:$0xf]
        %v237 = vld [vmem:[%s227 + $0x8] sm:$0xf]
        %v238 = vld [vmem:[%s227 + $0x10] sm:$0xf]
        %v239 = vld [vmem:[%s227 + $0x18] sm:$0xf]
        %v240 = vld [vmem:[%s227 + $0x20] sm:$0xf]
        %v241 = vld [vmem:[%s227 + $0x28] sm:$0xf]
        %v242 = vld [vmem:[%s227 + $0x30] sm:$0xf]
        %v243 = vld [vmem:[%s227 + $0x38] sm:$0xf]
        %v244 = vld [vmem:[#allocation2] sm:$0xf]
        %v245 = vld [vmem:[#allocation2 + $0x4] sm:$0xf]
        %v246 = vld [vmem:[#allocation2 + $0x8] sm:$0xf]
        %v247 = vld [vmem:[#allocation2 + $0xc] sm:$0xf]
        %v248 = vld [vmem:[#allocation2 + $0x10] sm:$0xf]
        %v249 = vld [vmem:[#allocation2 + $0x14] sm:$0xf]
        %v250 = vld [vmem:[#allocation2 + $0x18] sm:$0xf]
        %v251 = vld [vmem:[#allocation2 + $0x1c] sm:$0xf]
        %v252 = vld [vmem:[#allocation2 + $0x20] sm:$0xf]
        %v253 = vld [vmem:[#allocation2 + $0x24] sm:$0xf]
        %v254 = vld [vmem:[#allocation2 + $0x28] sm:$0xf]
        %v255 = vld [vmem:[#allocation2 + $0x2c] sm:$0xf]
        %v256 = vld [vmem:[#allocation2 + $0x30] sm:$0xf]
        %v257 = vld [vmem:[#allocation2 + $0x34] sm:$0xf]
        %v258 = vld [vmem:[#allocation2 + $0x38] sm:$0xf]
        %v259 = vld [vmem:[#allocation2 + $0x3c] sm:$0xf]
        %v260 = vld [vmem:[%s227 + $0x4] sm:$0x1]
        %v261 = vld [vmem:[%s227 + $0xc] sm:$0x1]
        %v262 = vld [vmem:[%s227 + $0x14] sm:$0x1]
        %v263 = vld [vmem:[%s227 + $0x1c] sm:$0x1]
        %v264 = vld [vmem:[%s227 + $0x24] sm:$0x1]
        %v265 = vld [vmem:[%s227 + $0x2c] sm:$0x1]
        %v266 = vld [vmem:[%s227 + $0x34] sm:$0x1]
        %v267 = vld [vmem:[%s227 + $0x3c] sm:$0x1]
        %vm268 = vsmask.f32 3328
        %vm269 = vsmask.f32 7440
        %vm270 = vmor %vm268, %vm269
        %v272 = vshrl.u32 %v236, 16
        %v274 = vrot.slane %v272, 4
        %v275 = vshll.u32 %v236, 16
        %v277 = vrot.slane %v275, 5
        %v278 = vor.u32 %v274, %v277
        %v279 = vrot.slane %v278, 4
        %v281 = vshll.u32 %v260, 16
        %v283 = vrot.slane %v281, 5
        %v284 = vsel %vm270, %v279, %v283
        %v286 = vshrl.u32 %v237, 16
        %v288 = vrot.slane %v286, 4
        %v289 = vshll.u32 %v237, 16
        %v291 = vrot.slane %v289, 5
        %v292 = vor.u32 %v288, %v291
        %v293 = vrot.slane %v292, 4
        %v295 = vshll.u32 %v261, 16
        %v297 = vrot.slane %v295, 5
        %v298 = vsel %vm270, %v293, %v297
        %v300 = vshrl.u32 %v238, 16
        %v302 = vrot.slane %v300, 4
        %v303 = vshll.u32 %v238, 16
        %v305 = vrot.slane %v303, 5
        %v306 = vor.u32 %v302, %v305
        %v307 = vrot.slane %v306, 4
        %v309 = vshll.u32 %v262, 16
        %v311 = vrot.slane %v309, 5
        %v312 = vsel %vm270, %v307, %v311
        %v314 = vshrl.u32 %v239, 16
        %v316 = vrot.slane %v314, 4
        %v317 = vshll.u32 %v239, 16
        %v319 = vrot.slane %v317, 5
        %v320 = vor.u32 %v316, %v319
        %v321 = vrot.slane %v320, 4
        %v323 = vshll.u32 %v263, 16
        %v325 = vrot.slane %v323, 5
        %v326 = vsel %vm270, %v321, %v325
        %v328 = vshrl.u32 %v240, 16
        %v330 = vrot.slane %v328, 4
        %v331 = vshll.u32 %v240, 16
        %v333 = vrot.slane %v331, 5
        %v334 = vor.u32 %v330, %v333
        %v335 = vrot.slane %v334, 4
        %v337 = vshll.u32 %v264, 16
        %v339 = vrot.slane %v337, 5
        %v340 = vsel %vm270, %v335, %v339
        %v342 = vshrl.u32 %v241, 16
        %v344 = vrot.slane %v342, 4
        %v345 = vshll.u32 %v241, 16
        %v347 = vrot.slane %v345, 5
        %v348 = vor.u32 %v344, %v347
        %v349 = vrot.slane %v348, 4
        %v351 = vshll.u32 %v265, 16
        %v353 = vrot.slane %v351, 5
        %v354 = vsel %vm270, %v349, %v353
        %v356 = vshrl.u32 %v242, 16
        %v358 = vrot.slane %v356, 4
        %v359 = vshll.u32 %v242, 16
        %v361 = vrot.slane %v359, 5
        %v362 = vor.u32 %v358, %v361
        %v363 = vrot.slane %v362, 4
        %v365 = vshll.u32 %v266, 16
        %v367 = vrot.slane %v365, 5
        %v368 = vsel %vm270, %v363, %v367
        %v370 = vshrl.u32 %v243, 16
        %v372 = vrot.slane %v370, 4
        %v373 = vshll.u32 %v243, 16
        %v375 = vrot.slane %v373, 5
        %v376 = vor.u32 %v372, %v375
        %v377 = vrot.slane %v376, 4
        %v379 = vshll.u32 %v267, 16
        %v381 = vrot.slane %v379, 5
        %v382 = vsel %vm270, %v377, %v381
        %s383 = scalar_lea.vmem [#allocation2], 64
        %v384 = vld [vmem:[%s383] sm:$0xf]
        %v385 = vld [vmem:[%s383 + $0x4] sm:$0xf]
        %v386 = vld [vmem:[%s383 + $0x8] sm:$0xf]
        %v387 = vld [vmem:[%s383 + $0xc] sm:$0xf]
        %v388 = vld [vmem:[%s383 + $0x10] sm:$0xf]
        %v389 = vld [vmem:[%s383 + $0x14] sm:$0xf]
        %v390 = vld [vmem:[%s383 + $0x18] sm:$0xf]
        %v391 = vld [vmem:[%s383 + $0x1c] sm:$0xf]
        %v392 = vld [vmem:[%s383 + $0x20] sm:$0xf]
        %v393 = vld [vmem:[%s383 + $0x24] sm:$0xf]
        %v394 = vld [vmem:[%s383 + $0x28] sm:$0xf]
        %v395 = vld [vmem:[%s383 + $0x2c] sm:$0xf]
        %v396 = vld [vmem:[%s383 + $0x30] sm:$0xf]
        %v397 = vld [vmem:[%s383 + $0x34] sm:$0xf]
        %v398 = vld [vmem:[%s383 + $0x38] sm:$0xf]
        %v399 = vld [vmem:[%s383 + $0x3c] sm:$0xf]
        %v400 = vunpack.c.l.b16 %v284
        %v401 = vunpack.c.l.b16 %v298
        %v402 = vunpack.c.l.b16 %v312
        %v403 = vunpack.c.l.b16 %v326
        %v404 = vunpack.c.l.b16 %v340
        %v405 = vunpack.c.l.b16 %v354
        %v406 = vunpack.c.l.b16 %v368
        %v407 = vunpack.c.l.b16 %v382
        %v408 = vpack.c.b16 %v401, %v400
        %v409 = vpack.c.b16 %v403, %v402
        %v410 = vpack.c.b16 %v405, %v404
        %v411 = vpack.c.b16 %v407, %v406
        %v432 = vunpack.c.l.b16 %v384
        %v433 = vunpack.c.l.b16 %v385
        %v434 = vunpack.c.l.b16 %v386
        %v435 = vunpack.c.l.b16 %v387
        %v436 = vunpack.c.l.b16 %v388
        %v437 = vunpack.c.l.b16 %v389
        %v438 = vunpack.c.l.b16 %v390
        %v439 = vunpack.c.l.b16 %v391
        %v440 = vunpack.c.l.b16 %v392
        %v441 = vunpack.c.l.b16 %v393
        %v442 = vunpack.c.l.b16 %v394
        %v443 = vunpack.c.l.b16 %v395
        %v444 = vunpack.c.l.b16 %v396
        %v445 = vunpack.c.l.b16 %v397
        %v446 = vunpack.c.l.b16 %v398
        %v447 = vunpack.c.l.b16 %v399
        %v448 = vpack.c.b16 %v433, %v432
        %v449 = vpack.c.b16 %v435, %v434
        %v450 = vpack.c.b16 %v437, %v436
        %v451 = vpack.c.b16 %v439, %v438
        %v452 = vpack.c.b16 %v441, %v440
        %v453 = vpack.c.b16 %v443, %v442
        %v454 = vpack.c.b16 %v445, %v444
        %v455 = vpack.c.b16 %v447, %v446
        %464 = vmatpush.bf16.msra.mxu0 %v455
        %465 = vmatpush.bf16.msra.mxu0 %v454
        %466 = vmatpush.bf16.msra.mxu0 %v453
        %467 = vmatpush.bf16.msra.mxu0 %v452
        %468 = vmatpush.bf16.msra.mxu0 %v451
        %469 = vmatpush.bf16.msra.mxu0 %v450
        %470 = vmatpush.bf16.msra.mxu0 %v449
        %471 = vmatpush.bf16.msra.mxu0 %v448
        %472 = vmatmul.bf16.gmra.mxu0 %v408
        %v473 = vpop.f32.mrf.mxu0
        %v474 = vadd.f32 0.0, %v473
        %v475 = vpop.f32.mrf.mxu0
        %v476 = vadd.f32 0.0, %v475
        %477 = vmatmul.bf16.gmra.mxu0 %v409
        %v478 = vpop.f32.mrf.mxu0
        %v479 = vadd.f32 0.0, %v478
        %v480 = vpop.f32.mrf.mxu0
        %v481 = vadd.f32 0.0, %v480
        %482 = vmatmul.bf16.gmra.mxu0 %v410
        %v483 = vpop.f32.mrf.mxu0
        %v484 = vadd.f32 0.0, %v483
        %v485 = vpop.f32.mrf.mxu0
        %v486 = vadd.f32 0.0, %v485
        %487 = vmatmul.bf16.gmra.mxu0 %v411
        %v488 = vpop.f32.mrf.mxu0
        %v489 = vadd.f32 0.0, %v488
        %v490 = vpop.f32.mrf.mxu0
        %v491 = vadd.f32 0.0, %v490
        %492 = vdwg.mxu0
        %v501 = vunpack.c.l.b16 %v236
        %v502 = vunpack.c.l.b16 %v237
        %v503 = vunpack.c.l.b16 %v238
        %v504 = vunpack.c.l.b16 %v239
        %v505 = vunpack.c.l.b16 %v240
        %v506 = vunpack.c.l.b16 %v241
        %v507 = vunpack.c.l.b16 %v242
        %v508 = vunpack.c.l.b16 %v243
        %v509 = vpack.c.b16 %v502, %v501
        %v510 = vpack.c.b16 %v504, %v503
        %v511 = vpack.c.b16 %v506, %v505
        %v512 = vpack.c.b16 %v508, %v507
        %v533 = vunpack.c.l.b16 %v244
        %v534 = vunpack.c.l.b16 %v245
        %v535 = vunpack.c.l.b16 %v246
        %v536 = vunpack.c.l.b16 %v247
        %v537 = vunpack.c.l.b16 %v248
        %v538 = vunpack.c.l.b16 %v249
        %v539 = vunpack.c.l.b16 %v250
        %v540 = vunpack.c.l.b16 %v251
        %v541 = vunpack.c.l.b16 %v252
        %v542 = vunpack.c.l.b16 %v253
        %v543 = vunpack.c.l.b16 %v254
        %v544 = vunpack.c.l.b16 %v255
        %v545 = vunpack.c.l.b16 %v256
        %v546 = vunpack.c.l.b16 %v257
        %v547 = vunpack.c.l.b16 %v258
        %v548 = vunpack.c.l.b16 %v259
        %v549 = vpack.c.b16 %v534, %v533
        %v550 = vpack.c.b16 %v536, %v535
        %v551 = vpack.c.b16 %v538, %v537
        %v552 = vpack.c.b16 %v540, %v539
        %v553 = vpack.c.b16 %v542, %v541
        %v554 = vpack.c.b16 %v544, %v543
        %v555 = vpack.c.b16 %v546, %v545
        %v556 = vpack.c.b16 %v548, %v547
        %565 = vmatpush.bf16.msra.mxu0 %v556
        %566 = vmatpush.bf16.msra.mxu0 %v555
        %567 = vmatpush.bf16.msra.mxu0 %v554
        %568 = vmatpush.bf16.msra.mxu0 %v553
        %569 = vmatpush.bf16.msra.mxu0 %v552
        %570 = vmatpush.bf16.msra.mxu0 %v551
        %571 = vmatpush.bf16.msra.mxu0 %v550
        %572 = vmatpush.bf16.msra.mxu0 %v549
        %573 = vmatmul.bf16.gmra.mxu0 %v509
        %v574 = vpop.f32.mrf.mxu0
        %v575 = vadd.f32 %v474, %v574
        %v576 = vpop.f32.mrf.mxu0
        %v577 = vadd.f32 %v476, %v576
        %578 = vmatmul.bf16.gmra.mxu0 %v510
        %v579 = vpop.f32.mrf.mxu0
        %v580 = vadd.f32 %v479, %v579
        %v581 = vpop.f32.mrf.mxu0
        %v582 = vadd.f32 %v481, %v581
        %583 = vmatmul.bf16.gmra.mxu0 %v511
        %v584 = vpop.f32.mrf.mxu0
        %v585 = vadd.f32 %v484, %v584
        %v586 = vpop.f32.mrf.mxu0
        %v587 = vadd.f32 %v486, %v586
        %588 = vmatmul.bf16.gmra.mxu0 %v512
        %v589 = vpop.f32.mrf.mxu0
        %v590 = vadd.f32 %v489, %v589
        %v591 = vpop.f32.mrf.mxu0
        %v592 = vadd.f32 %v491, %v591
        %593 = vdwg.mxu0
        %v594 = vld [vmem:[%s227] sm:$0xe]
        %v595 = vld [vmem:[%s227 + $0x8] sm:$0xe]
        %v596 = vld [vmem:[%s227 + $0x10] sm:$0xe]
        %v597 = vld [vmem:[%s227 + $0x18] sm:$0xe]
        %v598 = vld [vmem:[%s227 + $0x20] sm:$0xe]
        %v599 = vld [vmem:[%s227 + $0x28] sm:$0xe]
        %v600 = vld [vmem:[%s227 + $0x30] sm:$0xe]
        %v601 = vld [vmem:[%s227 + $0x38] sm:$0xe]
        %vm618 = vcmask 1042432
        %vm619 = vcmask 1046532
        %vm620 = vmor %vm618, %vm619
        %v621 = vrot.slane %v594, 5
        %v622 = vrot.slane %v621, 4
        %v623 = vrot.slane %v260, 5
        %v624 = vsel %vm620, %v622, %v623
        %v625 = vrot.slane %v595, 5
        %v626 = vrot.slane %v625, 4
        %v627 = vrot.slane %v261, 5
        %v628 = vsel %vm620, %v626, %v627
        %v629 = vrot.slane %v596, 5
        %v630 = vrot.slane %v629, 4
        %v631 = vrot.slane %v262, 5
        %v632 = vsel %vm620, %v630, %v631
        %v633 = vrot.slane %v597, 5
        %v634 = vrot.slane %v633, 4
        %v635 = vrot.slane %v263, 5
        %v636 = vsel %vm620, %v634, %v635
        %v637 = vrot.slane %v598, 5
        %v638 = vrot.slane %v637, 4
        %v639 = vrot.slane %v264, 5
        %v640 = vsel %vm620, %v638, %v639
        %v641 = vrot.slane %v599, 5
        %v642 = vrot.slane %v641, 4
        %v643 = vrot.slane %v265, 5
        %v644 = vsel %vm620, %v642, %v643
        %v645 = vrot.slane %v600, 5
        %v646 = vrot.slane %v645, 4
        %v647 = vrot.slane %v266, 5
        %v648 = vsel %vm620, %v646, %v647
        %v649 = vrot.slane %v601, 5
        %v650 = vrot.slane %v649, 4
        %v651 = vrot.slane %v267, 5
        %v652 = vsel %vm620, %v650, %v651
        %s653 = scalar_lea.vmem [#allocation2], 128
        %v654 = vld [vmem:[%s653] sm:$0xf]
        %v655 = vld [vmem:[%s653 + $0x4] sm:$0xf]
        %v656 = vld [vmem:[%s653 + $0x8] sm:$0xf]
        %v657 = vld [vmem:[%s653 + $0xc] sm:$0xf]
        %v658 = vld [vmem:[%s653 + $0x10] sm:$0xf]
        %v659 = vld [vmem:[%s653 + $0x14] sm:$0xf]
        %v660 = vld [vmem:[%s653 + $0x18] sm:$0xf]
        %v661 = vld [vmem:[%s653 + $0x1c] sm:$0xf]
        %v662 = vld [vmem:[%s653 + $0x20] sm:$0xf]
        %v663 = vld [vmem:[%s653 + $0x24] sm:$0xf]
        %v664 = vld [vmem:[%s653 + $0x28] sm:$0xf]
        %v665 = vld [vmem:[%s653 + $0x2c] sm:$0xf]
        %v666 = vld [vmem:[%s653 + $0x30] sm:$0xf]
        %v667 = vld [vmem:[%s653 + $0x34] sm:$0xf]
        %v668 = vld [vmem:[%s653 + $0x38] sm:$0xf]
        %v669 = vld [vmem:[%s653 + $0x3c] sm:$0xf]
        %v670 = vunpack.c.l.b16 %v624
        %v671 = vunpack.c.l.b16 %v628
        %v672 = vunpack.c.l.b16 %v632
        %v673 = vunpack.c.l.b16 %v636
        %v674 = vunpack.c.l.b16 %v640
        %v675 = vunpack.c.l.b16 %v644
        %v676 = vunpack.c.l.b16 %v648
        %v677 = vunpack.c.l.b16 %v652
        %v678 = vpack.c.b16 %v671, %v670
        %v679 = vpack.c.b16 %v673, %v672
        %v680 = vpack.c.b16 %v675, %v674
        %v681 = vpack.c.b16 %v677, %v676
        %v702 = vunpack.c.l.b16 %v654
        %v703 = vunpack.c.l.b16 %v655
        %v704 = vunpack.c.l.b16 %v656
        %v705 = vunpack.c.l.b16 %v657
        %v706 = vunpack.c.l.b16 %v658
        %v707 = vunpack.c.l.b16 %v659
        %v708 = vunpack.c.l.b16 %v660
        %v709 = vunpack.c.l.b16 %v661
        %v710 = vunpack.c.l.b16 %v662
        %v711 = vunpack.c.l.b16 %v663
        %v712 = vunpack.c.l.b16 %v664
        %v713 = vunpack.c.l.b16 %v665
        %v714 = vunpack.c.l.b16 %v666
        %v715 = vunpack.c.l.b16 %v667
        %v716 = vunpack.c.l.b16 %v668
        %v717 = vunpack.c.l.b16 %v669
        %v718 = vpack.c.b16 %v703, %v702
        %v719 = vpack.c.b16 %v705, %v704
        %v720 = vpack.c.b16 %v707, %v706
        %v721 = vpack.c.b16 %v709, %v708
        %v722 = vpack.c.b16 %v711, %v710
        %v723 = vpack.c.b16 %v713, %v712
        %v724 = vpack.c.b16 %v715, %v714
        %v725 = vpack.c.b16 %v717, %v716
        %734 = vmatpush.bf16.msra.mxu0 %v725
        %735 = vmatpush.bf16.msra.mxu0 %v724
        %736 = vmatpush.bf16.msra.mxu0 %v723
        %737 = vmatpush.bf16.msra.mxu0 %v722
        %738 = vmatpush.bf16.msra.mxu0 %v721
        %739 = vmatpush.bf16.msra.mxu0 %v720
        %740 = vmatpush.bf16.msra.mxu0 %v719
        %741 = vmatpush.bf16.msra.mxu0 %v718
        %742 = vmatmul.bf16.gmra.mxu0 %v678
        %v743 = vpop.f32.mrf.mxu0
        %v744 = vadd.f32 0.0, %v743
        %v745 = vpop.f32.mrf.mxu0
        %v746 = vadd.f32 0.0, %v745
        %747 = vmatmul.bf16.gmra.mxu0 %v679
        %v748 = vpop.f32.mrf.mxu0
        %v749 = vadd.f32 0.0, %v748
        %v750 = vpop.f32.mrf.mxu0
        %v751 = vadd.f32 0.0, %v750
        %752 = vmatmul.bf16.gmra.mxu0 %v680
        %v753 = vpop.f32.mrf.mxu0
        %v754 = vadd.f32 0.0, %v753
        %v755 = vpop.f32.mrf.mxu0
        %v756 = vadd.f32 0.0, %v755
        %757 = vmatmul.bf16.gmra.mxu0 %v681
        %v758 = vpop.f32.mrf.mxu0
        %v759 = vadd.f32 0.0, %v758
        %v760 = vpop.f32.mrf.mxu0
        %v761 = vadd.f32 0.0, %v760
        %762 = vdwg.mxu0
        %v763 = vadd.f32 %v575, %v744
        %v764 = vadd.f32 %v577, %v746
        %v765 = vadd.f32 %v580, %v749
        %v766 = vadd.f32 %v582, %v751
        %v767 = vadd.f32 %v585, %v754
        %v768 = vadd.f32 %v587, %v756
        %v769 = vadd.f32 %v590, %v759
        %v770 = vadd.f32 %v592, %v761
        %s771 = scalar_lea.vmem %s227, 8
        %v772 = vld [vmem:[%s771] sm:$0xf]
        %v773 = vld [vmem:[%s771 + $0x8] sm:$0xf]
        %v774 = vld [vmem:[%s771 + $0x10] sm:$0xf]
        %v775 = vld [vmem:[%s771 + $0x18] sm:$0xf]
        %v776 = vld [vmem:[%s771 + $0x20] sm:$0xf]
        %v777 = vld [vmem:[%s771 + $0x28] sm:$0xf]
        %v778 = vld [vmem:[%s771 + $0x30] sm:$0xf]
        %v779 = vld [vmem:[%s771 + $0x38] sm:$0xf]
        %s780 = scalar_lea.vmem [#allocation2], 192
        %v781 = vld [vmem:[%s780] sm:$0xf]
        %v782 = vld [vmem:[%s780 + $0x4] sm:$0xf]
        %v783 = vld [vmem:[%s780 + $0x8] sm:$0xf]
        %v784 = vld [vmem:[%s780 + $0xc] sm:$0xf]
        %v785 = vld [vmem:[%s780 + $0x10] sm:$0xf]
        %v786 = vld [vmem:[%s780 + $0x14] sm:$0xf]
        %v787 = vld [vmem:[%s780 + $0x18] sm:$0xf]
        %v788 = vld [vmem:[%s780 + $0x1c] sm:$0xf]
        %v789 = vld [vmem:[%s780 + $0x20] sm:$0xf]
        %v790 = vld [vmem:[%s780 + $0x24] sm:$0xf]
        %v791 = vld [vmem:[%s780 + $0x28] sm:$0xf]
        %v792 = vld [vmem:[%s780 + $0x2c] sm:$0xf]
        %v793 = vld [vmem:[%s780 + $0x30] sm:$0xf]
        %v794 = vld [vmem:[%s780 + $0x34] sm:$0xf]
        %v795 = vld [vmem:[%s780 + $0x38] sm:$0xf]
        %v796 = vld [vmem:[%s780 + $0x3c] sm:$0xf]
        %v805 = vunpack.c.l.b16 %v772
        %v806 = vunpack.c.l.b16 %v773
        %v807 = vunpack.c.l.b16 %v774
        %v808 = vunpack.c.l.b16 %v775
        %v809 = vunpack.c.l.b16 %v776
        %v810 = vunpack.c.l.b16 %v777
        %v811 = vunpack.c.l.b16 %v778
        %v812 = vunpack.c.l.b16 %v779
        %v813 = vpack.c.b16 %v806, %v805
        %v814 = vpack.c.b16 %v808, %v807
        %v815 = vpack.c.b16 %v810, %v809
        %v816 = vpack.c.b16 %v812, %v811
        %v837 = vunpack.c.l.b16 %v781
        %v838 = vunpack.c.l.b16 %v782
        %v839 = vunpack.c.l.b16 %v783
        %v840 = vunpack.c.l.b16 %v784
        %v841 = vunpack.c.l.b16 %v785
        %v842 = vunpack.c.l.b16 %v786
        %v843 = vunpack.c.l.b16 %v787
        %v844 = vunpack.c.l.b16 %v788
        %v845 = vunpack.c.l.b16 %v789
        %v846 = vunpack.c.l.b16 %v790
        %v847 = vunpack.c.l.b16 %v791
        %v848 = vunpack.c.l.b16 %v792
        %v849 = vunpack.c.l.b16 %v793
        %v850 = vunpack.c.l.b16 %v794
        %v851 = vunpack.c.l.b16 %v795
        %v852 = vunpack.c.l.b16 %v796
        %v853 = vpack.c.b16 %v838, %v837
        %v854 = vpack.c.b16 %v840, %v839
        %v855 = vpack.c.b16 %v842, %v841
        %v856 = vpack.c.b16 %v844, %v843
        %v857 = vpack.c.b16 %v846, %v845
        %v858 = vpack.c.b16 %v848, %v847
        %v859 = vpack.c.b16 %v850, %v849
        %v860 = vpack.c.b16 %v852, %v851
        %869 = vmatpush.bf16.msra.mxu0 %v860
        %870 = vmatpush.bf16.msra.mxu0 %v859
        %871 = vmatpush.bf16.msra.mxu0 %v858
        %872 = vmatpush.bf16.msra.mxu0 %v857
        %873 = vmatpush.bf16.msra.mxu0 %v856
        %874 = vmatpush.bf16.msra.mxu0 %v855
        %875 = vmatpush.bf16.msra.mxu0 %v854
        %876 = vmatpush.bf16.msra.mxu0 %v853
        %877 = vmatmul.bf16.gmra.mxu0 %v813
        %v878 = vpop.f32.mrf.mxu0
        %v879 = vadd.f32 0.0, %v878
        %v880 = vpop.f32.mrf.mxu0
        %v881 = vadd.f32 0.0, %v880
        %882 = vmatmul.bf16.gmra.mxu0 %v814
        %v883 = vpop.f32.mrf.mxu0
        %v884 = vadd.f32 0.0, %v883
        %v885 = vpop.f32.mrf.mxu0
        %v886 = vadd.f32 0.0, %v885
        %887 = vmatmul.bf16.gmra.mxu0 %v815
        %v888 = vpop.f32.mrf.mxu0
        %v889 = vadd.f32 0.0, %v888
        %v890 = vpop.f32.mrf.mxu0
        %v891 = vadd.f32 0.0, %v890
        %892 = vmatmul.bf16.gmra.mxu0 %v816
        %v893 = vpop.f32.mrf.mxu0
        %v894 = vadd.f32 0.0, %v893
        %v895 = vpop.f32.mrf.mxu0
        %v896 = vadd.f32 0.0, %v895
        %897 = vdwg.mxu0
        %v898 = vadd.f32 %v763, %v879
        %v899 = vadd.f32 %v764, %v881
        %v900 = vadd.f32 %v765, %v884
        %v901 = vadd.f32 %v766, %v886
        %v902 = vadd.f32 %v767, %v889
        %v903 = vadd.f32 %v768, %v891
        %v904 = vadd.f32 %v769, %v894
        %v905 = vadd.f32 %v770, %v896
        %v906 = vld [vmem:[%s771] sm:$0xf]
        %v907 = vld [vmem:[%s771 + $0x4] sm:$0x1]
        %v908 = vld [vmem:[%s771 + $0x8] sm:$0xf]
        %v909 = vld [vmem:[%s771 + $0xc] sm:$0x1]
        %v910 = vld [vmem:[%s771 + $0x10] sm:$0xf]
        %v911 = vld [vmem:[%s771 + $0x14] sm:$0x1]
        %v912 = vld [vmem:[%s771 + $0x18] sm:$0xf]
        %v913 = vld [vmem:[%s771 + $0x1c] sm:$0x1]
        %v914 = vld [vmem:[%s771 + $0x20] sm:$0xf]
        %v915 = vld [vmem:[%s771 + $0x24] sm:$0x1]
        %v916 = vld [vmem:[%s771 + $0x28] sm:$0xf]
        %v917 = vld [vmem:[%s771 + $0x2c] sm:$0x1]
        %v918 = vld [vmem:[%s771 + $0x30] sm:$0xf]
        %v919 = vld [vmem:[%s771 + $0x34] sm:$0x1]
        %v920 = vld [vmem:[%s771 + $0x38] sm:$0xf]
        %v921 = vld [vmem:[%s771 + $0x3c] sm:$0x1]
        %v923 = vshrl.u32 %v906, 16
        %v925 = vrot.slane %v923, 4
        %v926 = vshll.u32 %v906, 16
        %v928 = vrot.slane %v926, 5
        %v929 = vor.u32 %v925, %v928
        %v930 = vrot.slane %v929, 4
        %v932 = vshll.u32 %v907, 16
        %v934 = vrot.slane %v932, 5
        %v935 = vsel %vm270, %v930, %v934
        %v937 = vshrl.u32 %v908, 16
        %v939 = vrot.slane %v937, 4
        %v940 = vshll.u32 %v908, 16
        %v942 = vrot.slane %v940, 5
        %v943 = vor.u32 %v939, %v942
        %v944 = vrot.slane %v943, 4
        %v946 = vshll.u32 %v909, 16
        %v948 = vrot.slane %v946, 5
        %v949 = vsel %vm270, %v944, %v948
        %v951 = vshrl.u32 %v910, 16
        %v953 = vrot.slane %v951, 4
        %v954 = vshll.u32 %v910, 16
        %v956 = vrot.slane %v954, 5
        %v957 = vor.u32 %v953, %v956
        %v958 = vrot.slane %v957, 4
        %v960 = vshll.u32 %v911, 16
        %v962 = vrot.slane %v960, 5
        %v963 = vsel %vm270, %v958, %v962
        %v965 = vshrl.u32 %v912, 16
        %v967 = vrot.slane %v965, 4
        %v968 = vshll.u32 %v912, 16
        %v970 = vrot.slane %v968, 5
        %v971 = vor.u32 %v967, %v970
        %v972 = vrot.slane %v971, 4
        %v974 = vshll.u32 %v913, 16
        %v976 = vrot.slane %v974, 5
        %v977 = vsel %vm270, %v972, %v976
        %v979 = vshrl.u32 %v914, 16
        %v981 = vrot.slane %v979, 4
        %v982 = vshll.u32 %v914, 16
        %v984 = vrot.slane %v982, 5
        %v985 = vor.u32 %v981, %v984
        %v986 = vrot.slane %v985, 4
        %v988 = vshll.u32 %v915, 16
        %v990 = vrot.slane %v988, 5
        %v991 = vsel %vm270, %v986, %v990
        %v993 = vshrl.u32 %v916, 16
        %v995 = vrot.slane %v993, 4
        %v996 = vshll.u32 %v916, 16
        %v998 = vrot.slane %v996, 5
        %v999 = vor.u32 %v995, %v998
        %v1000 = vrot.slane %v999, 4
        %v1002 = vshll.u32 %v917, 16
        %v1004 = vrot.slane %v1002, 5
        %v1005 = vsel %vm270, %v1000, %v1004
        %v1007 = vshrl.u32 %v918, 16
        %v1009 = vrot.slane %v1007, 4
        %v1010 = vshll.u32 %v918, 16
        %v1012 = vrot.slane %v1010, 5
        %v1013 = vor.u32 %v1009, %v1012
        %v1014 = vrot.slane %v1013, 4
        %v1016 = vshll.u32 %v919, 16
        %v1018 = vrot.slane %v1016, 5
        %v1019 = vsel %vm270, %v1014, %v1018
        %v1021 = vshrl.u32 %v920, 16
        %v1023 = vrot.slane %v1021, 4
        %v1024 = vshll.u32 %v920, 16
        %v1026 = vrot.slane %v1024, 5
        %v1027 = vor.u32 %v1023, %v1026
        %v1028 = vrot.slane %v1027, 4
        %v1030 = vshll.u32 %v921, 16
        %v1032 = vrot.slane %v1030, 5
        %v1033 = vsel %vm270, %v1028, %v1032
        %s1034 = scalar_lea.vmem [#allocation2], 256
        %v1035 = vld [vmem:[%s1034] sm:$0xf]
        %v1036 = vld [vmem:[%s1034 + $0x4] sm:$0xf]
        %v1037 = vld [vmem:[%s1034 + $0x8] sm:$0xf]
        %v1038 = vld [vmem:[%s1034 + $0xc] sm:$0xf]
        %v1039 = vld [vmem:[%s1034 + $0x10] sm:$0xf]
        %v1040 = vld [vmem:[%s1034 + $0x14] sm:$0xf]
        %v1041 = vld [vmem:[%s1034 + $0x18] sm:$0xf]
        %v1042 = vld [vmem:[%s1034 + $0x1c] sm:$0xf]
        %v1043 = vld [vmem:[%s1034 + $0x20] sm:$0xf]
        %v1044 = vld [vmem:[%s1034 + $0x24] sm:$0xf]
        %v1045 = vld [vmem:[%s1034 + $0x28] sm:$0xf]
        %v1046 = vld [vmem:[%s1034 + $0x2c] sm:$0xf]
        %v1047 = vld [vmem:[%s1034 + $0x30] sm:$0xf]
        %v1048 = vld [vmem:[%s1034 + $0x34] sm:$0xf]
        %v1049 = vld [vmem:[%s1034 + $0x38] sm:$0xf]
        %v1050 = vld [vmem:[%s1034 + $0x3c] sm:$0xf]
        %v1051 = vunpack.c.l.b16 %v935
        %v1052 = vunpack.c.l.b16 %v949
        %v1053 = vunpack.c.l.b16 %v963
        %v1054 = vunpack.c.l.b16 %v977
        %v1055 = vunpack.c.l.b16 %v991
        %v1056 = vunpack.c.l.b16 %v1005
        %v1057 = vunpack.c.l.b16 %v1019
        %v1058 = vunpack.c.l.b16 %v1033
        %v1059 = vpack.c.b16 %v1052, %v1051
        %v1060 = vpack.c.b16 %v1054, %v1053
        %v1061 = vpack.c.b16 %v1056, %v1055
        %v1062 = vpack.c.b16 %v1058, %v1057
        %v1083 = vunpack.c.l.b16 %v1035
        %v1084 = vunpack.c.l.b16 %v1036
        %v1085 = vunpack.c.l.b16 %v1037
        %v1086 = vunpack.c.l.b16 %v1038
        %v1087 = vunpack.c.l.b16 %v1039
        %v1088 = vunpack.c.l.b16 %v1040
        %v1089 = vunpack.c.l.b16 %v1041
        %v1090 = vunpack.c.l.b16 %v1042
        %v1091 = vunpack.c.l.b16 %v1043
        %v1092 = vunpack.c.l.b16 %v1044
        %v1093 = vunpack.c.l.b16 %v1045
        %v1094 = vunpack.c.l.b16 %v1046
        %v1095 = vunpack.c.l.b16 %v1047
        %v1096 = vunpack.c.l.b16 %v1048
        %v1097 = vunpack.c.l.b16 %v1049
        %v1098 = vunpack.c.l.b16 %v1050
        %v1099 = vpack.c.b16 %v1084, %v1083
        %v1100 = vpack.c.b16 %v1086, %v1085
        %v1101 = vpack.c.b16 %v1088, %v1087
        %v1102 = vpack.c.b16 %v1090, %v1089
        %v1103 = vpack.c.b16 %v1092, %v1091
        %v1104 = vpack.c.b16 %v1094, %v1093
        %v1105 = vpack.c.b16 %v1096, %v1095
        %v1106 = vpack.c.b16 %v1098, %v1097
        %1115 = vmatpush.bf16.msra.mxu0 %v1106
        %1116 = vmatpush.bf16.msra.mxu0 %v1105
        %1117 = vmatpush.bf16.msra.mxu0 %v1104
        %1118 = vmatpush.bf16.msra.mxu0 %v1103
        %1119 = vmatpush.bf16.msra.mxu0 %v1102
        %1120 = vmatpush.bf16.msra.mxu0 %v1101
        %1121 = vmatpush.bf16.msra.mxu0 %v1100
        %1122 = vmatpush.bf16.msra.mxu0 %v1099
        %1123 = vmatmul.bf16.gmra.mxu0 %v1059
        %v1124 = vpop.f32.mrf.mxu0
        %v1125 = vadd.f32 0.0, %v1124
        %v1126 = vpop.f32.mrf.mxu0
        %v1127 = vadd.f32 0.0, %v1126
        %1128 = vmatmul.bf16.gmra.mxu0 %v1060
        %v1129 = vpop.f32.mrf.mxu0
        %v1130 = vadd.f32 0.0, %v1129
        %v1131 = vpop.f32.mrf.mxu0
        %v1132 = vadd.f32 0.0, %v1131
        %1133 = vmatmul.bf16.gmra.mxu0 %v1061
        %v1134 = vpop.f32.mrf.mxu0
        %v1135 = vadd.f32 0.0, %v1134
        %v1136 = vpop.f32.mrf.mxu0
        %v1137 = vadd.f32 0.0, %v1136
        %1138 = vmatmul.bf16.gmra.mxu0 %v1062
        %v1139 = vpop.f32.mrf.mxu0
        %v1140 = vadd.f32 0.0, %v1139
        %v1141 = vpop.f32.mrf.mxu0
        %v1142 = vadd.f32 0.0, %v1141
        %1143 = vdwg.mxu0
        %v1144 = vadd.f32 %v898, %v1125
        %v1145 = vadd.f32 %v899, %v1127
        %v1146 = vadd.f32 %v900, %v1130
        %v1147 = vadd.f32 %v901, %v1132
        %v1148 = vadd.f32 %v902, %v1135
        %v1149 = vadd.f32 %v903, %v1137
        %v1150 = vadd.f32 %v904, %v1140
        %v1151 = vadd.f32 %v905, %v1142
        %v1152 = vld [vmem:[%s771] sm:$0xe]
        %v1153 = vld [vmem:[%s771 + $0x8] sm:$0xe]
        %v1154 = vld [vmem:[%s771 + $0x10] sm:$0xe]
        %v1155 = vld [vmem:[%s771 + $0x18] sm:$0xe]
        %v1156 = vld [vmem:[%s771 + $0x20] sm:$0xe]
        %v1157 = vld [vmem:[%s771 + $0x28] sm:$0xe]
        %v1158 = vld [vmem:[%s771 + $0x30] sm:$0xe]
        %v1159 = vld [vmem:[%s771 + $0x38] sm:$0xe]
        %v1176 = vrot.slane %v1152, 5
        %v1177 = vrot.slane %v1176, 4
        %v1178 = vrot.slane %v907, 5
        %v1179 = vsel %vm620, %v1177, %v1178
        %v1180 = vrot.slane %v1153, 5
        %v1181 = vrot.slane %v1180, 4
        %v1182 = vrot.slane %v909, 5
        %v1183 = vsel %vm620, %v1181, %v1182
        %v1184 = vrot.slane %v1154, 5
        %v1185 = vrot.slane %v1184, 4
        %v1186 = vrot.slane %v911, 5
        %v1187 = vsel %vm620, %v1185, %v1186
        %v1188 = vrot.slane %v1155, 5
        %v1189 = vrot.slane %v1188, 4
        %v1190 = vrot.slane %v913, 5
        %v1191 = vsel %vm620, %v1189, %v1190
        %v1192 = vrot.slane %v1156, 5
        %v1193 = vrot.slane %v1192, 4
        %v1194 = vrot.slane %v915, 5
        %v1195 = vsel %vm620, %v1193, %v1194
        %v1196 = vrot.slane %v1157, 5
        %v1197 = vrot.slane %v1196, 4
        %v1198 = vrot.slane %v917, 5
        %v1199 = vsel %vm620, %v1197, %v1198
        %v1200 = vrot.slane %v1158, 5
        %v1201 = vrot.slane %v1200, 4
        %v1202 = vrot.slane %v919, 5
        %v1203 = vsel %vm620, %v1201, %v1202
        %v1204 = vrot.slane %v1159, 5
        %v1205 = vrot.slane %v1204, 4
        %v1206 = vrot.slane %v921, 5
        %v1207 = vsel %vm620, %v1205, %v1206
        %s1208 = scalar_lea.vmem [#allocation2], 320
        %v1209 = vld [vmem:[%s1208] sm:$0xf]
        %v1210 = vld [vmem:[%s1208 + $0x4] sm:$0xf]
        %v1211 = vld [vmem:[%s1208 + $0x8] sm:$0xf]
        %v1212 = vld [vmem:[%s1208 + $0xc] sm:$0xf]
        %v1213 = vld [vmem:[%s1208 + $0x10] sm:$0xf]
        %v1214 = vld [vmem:[%s1208 + $0x14] sm:$0xf]
        %v1215 = vld [vmem:[%s1208 + $0x18] sm:$0xf]
        %v1216 = vld [vmem:[%s1208 + $0x1c] sm:$0xf]
        %v1217 = vld [vmem:[%s1208 + $0x20] sm:$0xf]
        %v1218 = vld [vmem:[%s1208 + $0x24] sm:$0xf]
        %v1219 = vld [vmem:[%s1208 + $0x28] sm:$0xf]
        %v1220 = vld [vmem:[%s1208 + $0x2c] sm:$0xf]
        %v1221 = vld [vmem:[%s1208 + $0x30] sm:$0xf]
        %v1222 = vld [vmem:[%s1208 + $0x34] sm:$0xf]
        %v1223 = vld [vmem:[%s1208 + $0x38] sm:$0xf]
        %v1224 = vld [vmem:[%s1208 + $0x3c] sm:$0xf]
        %v1225 = vunpack.c.l.b16 %v1179
        %v1226 = vunpack.c.l.b16 %v1183
        %v1227 = vunpack.c.l.b16 %v1187
        %v1228 = vunpack.c.l.b16 %v1191
        %v1229 = vunpack.c.l.b16 %v1195
        %v1230 = vunpack.c.l.b16 %v1199
        %v1231 = vunpack.c.l.b16 %v1203
        %v1232 = vunpack.c.l.b16 %v1207
        %v1233 = vpack.c.b16 %v1226, %v1225
        %v1234 = vpack.c.b16 %v1228, %v1227
        %v1235 = vpack.c.b16 %v1230, %v1229
        %v1236 = vpack.c.b16 %v1232, %v1231
        %v1257 = vunpack.c.l.b16 %v1209
        %v1258 = vunpack.c.l.b16 %v1210
        %v1259 = vunpack.c.l.b16 %v1211
        %v1260 = vunpack.c.l.b16 %v1212
        %v1261 = vunpack.c.l.b16 %v1213
        %v1262 = vunpack.c.l.b16 %v1214
        %v1263 = vunpack.c.l.b16 %v1215
        %v1264 = vunpack.c.l.b16 %v1216
        %v1265 = vunpack.c.l.b16 %v1217
        %v1266 = vunpack.c.l.b16 %v1218
        %v1267 = vunpack.c.l.b16 %v1219
        %v1268 = vunpack.c.l.b16 %v1220
        %v1269 = vunpack.c.l.b16 %v1221
        %v1270 = vunpack.c.l.b16 %v1222
        %v1271 = vunpack.c.l.b16 %v1223
        %v1272 = vunpack.c.l.b16 %v1224
        %v1273 = vpack.c.b16 %v1258, %v1257
        %v1274 = vpack.c.b16 %v1260, %v1259
        %v1275 = vpack.c.b16 %v1262, %v1261
        %v1276 = vpack.c.b16 %v1264, %v1263
        %v1277 = vpack.c.b16 %v1266, %v1265
        %v1278 = vpack.c.b16 %v1268, %v1267
        %v1279 = vpack.c.b16 %v1270, %v1269
        %v1280 = vpack.c.b16 %v1272, %v1271
        %1289 = vmatpush.bf16.msra.mxu0 %v1280
        %1290 = vmatpush.bf16.msra.mxu0 %v1279
        %1291 = vmatpush.bf16.msra.mxu0 %v1278
        %1292 = vmatpush.bf16.msra.mxu0 %v1277
        %1293 = vmatpush.bf16.msra.mxu0 %v1276
        %1294 = vmatpush.bf16.msra.mxu0 %v1275
        %1295 = vmatpush.bf16.msra.mxu0 %v1274
        %1296 = vmatpush.bf16.msra.mxu0 %v1273
        %1297 = vmatmul.bf16.gmra.mxu0 %v1233
        %v1298 = vpop.f32.mrf.mxu0
        %v1299 = vadd.f32 0.0, %v1298
        %v1300 = vpop.f32.mrf.mxu0
        %v1301 = vadd.f32 0.0, %v1300
        %1302 = vmatmul.bf16.gmra.mxu0 %v1234
        %v1303 = vpop.f32.mrf.mxu0
        %v1304 = vadd.f32 0.0, %v1303
        %v1305 = vpop.f32.mrf.mxu0
        %v1306 = vadd.f32 0.0, %v1305
        %1307 = vmatmul.bf16.gmra.mxu0 %v1235
        %v1308 = vpop.f32.mrf.mxu0
        %v1309 = vadd.f32 0.0, %v1308
        %v1310 = vpop.f32.mrf.mxu0
        %v1311 = vadd.f32 0.0, %v1310
        %1312 = vmatmul.bf16.gmra.mxu0 %v1236
        %v1313 = vpop.f32.mrf.mxu0
        %v1314 = vadd.f32 0.0, %v1313
        %v1315 = vpop.f32.mrf.mxu0
        %v1316 = vadd.f32 0.0, %v1315
        %1317 = vdwg.mxu0
        %v1318 = vadd.f32 %v1144, %v1299
        %v1319 = vadd.f32 %v1145, %v1301
        %v1320 = vadd.f32 %v1146, %v1304
        %v1321 = vadd.f32 %v1147, %v1306
        %v1322 = vadd.f32 %v1148, %v1309
        %v1323 = vadd.f32 %v1149, %v1311
        %v1324 = vadd.f32 %v1150, %v1314
        %v1325 = vadd.f32 %v1151, %v1316
        %s1326 = scalar_lea.vmem %s227, 16
        %v1327 = vld [vmem:[%s1326] sm:$0xf]
        %v1328 = vld [vmem:[%s1326 + $0x8] sm:$0xf]
        %v1329 = vld [vmem:[%s1326 + $0x10] sm:$0xf]
        %v1330 = vld [vmem:[%s1326 + $0x18] sm:$0xf]
        %v1331 = vld [vmem:[%s1326 + $0x20] sm:$0xf]
        %v1332 = vld [vmem:[%s1326 + $0x28] sm:$0xf]
        %v1333 = vld [vmem:[%s1326 + $0x30] sm:$0xf]
        %v1334 = vld [vmem:[%s1326 + $0x38] sm:$0xf]
        %s1335 = scalar_lea.vmem [#allocation2], 384
        %v1336 = vld [vmem:[%s1335] sm:$0xf]
        %v1337 = vld [vmem:[%s1335 + $0x4] sm:$0xf]
        %v1338 = vld [vmem:[%s1335 + $0x8] sm:$0xf]
        %v1339 = vld [vmem:[%s1335 + $0xc] sm:$0xf]
        %v1340 = vld [vmem:[%s1335 + $0x10] sm:$0xf]
        %v1341 = vld [vmem:[%s1335 + $0x14] sm:$0xf]
        %v1342 = vld [vmem:[%s1335 + $0x18] sm:$0xf]
        %v1343 = vld [vmem:[%s1335 + $0x1c] sm:$0xf]
        %v1344 = vld [vmem:[%s1335 + $0x20] sm:$0xf]
        %v1345 = vld [vmem:[%s1335 + $0x24] sm:$0xf]
        %v1346 = vld [vmem:[%s1335 + $0x28] sm:$0xf]
        %v1347 = vld [vmem:[%s1335 + $0x2c] sm:$0xf]
        %v1348 = vld [vmem:[%s1335 + $0x30] sm:$0xf]
        %v1349 = vld [vmem:[%s1335 + $0x34] sm:$0xf]
        %v1350 = vld [vmem:[%s1335 + $0x38] sm:$0xf]
        %v1351 = vld [vmem:[%s1335 + $0x3c] sm:$0xf]
        %v1360 = vunpack.c.l.b16 %v1327
        %v1361 = vunpack.c.l.b16 %v1328
        %v1362 = vunpack.c.l.b16 %v1329
        %v1363 = vunpack.c.l.b16 %v1330
        %v1364 = vunpack.c.l.b16 %v1331
        %v1365 = vunpack.c.l.b16 %v1332
        %v1366 = vunpack.c.l.b16 %v1333
        %v1367 = vunpack.c.l.b16 %v1334
        %v1368 = vpack.c.b16 %v1361, %v1360
        %v1369 = vpack.c.b16 %v1363, %v1362
        %v1370 = vpack.c.b16 %v1365, %v1364
        %v1371 = vpack.c.b16 %v1367, %v1366
        %v1392 = vunpack.c.l.b16 %v1336
        %v1393 = vunpack.c.l.b16 %v1337
        %v1394 = vunpack.c.l.b16 %v1338
        %v1395 = vunpack.c.l.b16 %v1339
        %v1396 = vunpack.c.l.b16 %v1340
        %v1397 = vunpack.c.l.b16 %v1341
        %v1398 = vunpack.c.l.b16 %v1342
        %v1399 = vunpack.c.l.b16 %v1343
        %v1400 = vunpack.c.l.b16 %v1344
        %v1401 = vunpack.c.l.b16 %v1345
        %v1402 = vunpack.c.l.b16 %v1346
        %v1403 = vunpack.c.l.b16 %v1347
        %v1404 = vunpack.c.l.b16 %v1348
        %v1405 = vunpack.c.l.b16 %v1349
        %v1406 = vunpack.c.l.b16 %v1350
        %v1407 = vunpack.c.l.b16 %v1351
        %v1408 = vpack.c.b16 %v1393, %v1392
        %v1409 = vpack.c.b16 %v1395, %v1394
        %v1410 = vpack.c.b16 %v1397, %v1396
        %v1411 = vpack.c.b16 %v1399, %v1398
        %v1412 = vpack.c.b16 %v1401, %v1400
        %v1413 = vpack.c.b16 %v1403, %v1402
        %v1414 = vpack.c.b16 %v1405, %v1404
        %v1415 = vpack.c.b16 %v1407, %v1406
        %1424 = vmatpush.bf16.msra.mxu0 %v1415
        %1425 = vmatpush.bf16.msra.mxu0 %v1414
        %1426 = vmatpush.bf16.msra.mxu0 %v1413
        %1427 = vmatpush.bf16.msra.mxu0 %v1412
        %1428 = vmatpush.bf16.msra.mxu0 %v1411
        %1429 = vmatpush.bf16.msra.mxu0 %v1410
        %1430 = vmatpush.bf16.msra.mxu0 %v1409
        %1431 = vmatpush.bf16.msra.mxu0 %v1408
        %1432 = vmatmul.bf16.gmra.mxu0 %v1368
        %v1433 = vpop.f32.mrf.mxu0
        %v1434 = vadd.f32 0.0, %v1433
        %v1435 = vpop.f32.mrf.mxu0
        %v1436 = vadd.f32 0.0, %v1435
        %1437 = vmatmul.bf16.gmra.mxu0 %v1369
        %v1438 = vpop.f32.mrf.mxu0
        %v1439 = vadd.f32 0.0, %v1438
        %v1440 = vpop.f32.mrf.mxu0
        %v1441 = vadd.f32 0.0, %v1440
        %1442 = vmatmul.bf16.gmra.mxu0 %v1370
        %v1443 = vpop.f32.mrf.mxu0
        %v1444 = vadd.f32 0.0, %v1443
        %v1445 = vpop.f32.mrf.mxu0
        %v1446 = vadd.f32 0.0, %v1445
        %1447 = vmatmul.bf16.gmra.mxu0 %v1371
        %v1448 = vpop.f32.mrf.mxu0
        %v1449 = vadd.f32 0.0, %v1448
        %v1450 = vpop.f32.mrf.mxu0
        %v1451 = vadd.f32 0.0, %v1450
        %1452 = vdwg.mxu0
        %v1453 = vadd.f32 %v1318, %v1434
        %v1454 = vadd.f32 %v1319, %v1436
        %v1455 = vadd.f32 %v1320, %v1439
        %v1456 = vadd.f32 %v1321, %v1441
        %v1457 = vadd.f32 %v1322, %v1444
        %v1458 = vadd.f32 %v1323, %v1446
        %v1459 = vadd.f32 %v1324, %v1449
        %v1460 = vadd.f32 %v1325, %v1451
        %v1461 = vld [vmem:[%s1326] sm:$0xf]
        %v1462 = vld [vmem:[%s1326 + $0x4] sm:$0x1]
        %v1463 = vld [vmem:[%s1326 + $0x8] sm:$0xf]
        %v1464 = vld [vmem:[%s1326 + $0xc] sm:$0x1]
        %v1465 = vld [vmem:[%s1326 + $0x10] sm:$0xf]
        %v1466 = vld [vmem:[%s1326 + $0x14] sm:$0x1]
        %v1467 = vld [vmem:[%s1326 + $0x18] sm:$0xf]
        %v1468 = vld [vmem:[%s1326 + $0x1c] sm:$0x1]
        %v1469 = vld [vmem:[%s1326 + $0x20] sm:$0xf]
        %v1470 = vld [vmem:[%s1326 + $0x24] sm:$0x1]
        %v1471 = vld [vmem:[%s1326 + $0x28] sm:$0xf]
        %v1472 = vld [vmem:[%s1326 + $0x2c] sm:$0x1]
        %v1473 = vld [vmem:[%s1326 + $0x30] sm:$0xf]
        %v1474 = vld [vmem:[%s1326 + $0x34] sm:$0x1]
        %v1475 = vld [vmem:[%s1326 + $0x38] sm:$0xf]
        %v1476 = vld [vmem:[%s1326 + $0x3c] sm:$0x1]
        %v1478 = vshrl.u32 %v1461, 16
        %v1480 = vrot.slane %v1478, 4
        %v1481 = vshll.u32 %v1461, 16
        %v1483 = vrot.slane %v1481, 5
        %v1484 = vor.u32 %v1480, %v1483
        %v1485 = vrot.slane %v1484, 4
        %v1487 = vshll.u32 %v1462, 16
        %v1489 = vrot.slane %v1487, 5
        %v1490 = vsel %vm270, %v1485, %v1489
        %v1492 = vshrl.u32 %v1463, 16
        %v1494 = vrot.slane %v1492, 4
        %v1495 = vshll.u32 %v1463, 16
        %v1497 = vrot.slane %v1495, 5
        %v1498 = vor.u32 %v1494, %v1497
        %v1499 = vrot.slane %v1498, 4
        %v1501 = vshll.u32 %v1464, 16
        %v1503 = vrot.slane %v1501, 5
        %v1504 = vsel %vm270, %v1499, %v1503
        %v1506 = vshrl.u32 %v1465, 16
        %v1508 = vrot.slane %v1506, 4
        %v1509 = vshll.u32 %v1465, 16
        %v1511 = vrot.slane %v1509, 5
        %v1512 = vor.u32 %v1508, %v1511
        %v1513 = vrot.slane %v1512, 4
        %v1515 = vshll.u32 %v1466, 16
        %v1517 = vrot.slane %v1515, 5
        %v1518 = vsel %vm270, %v1513, %v1517
        %v1520 = vshrl.u32 %v1467, 16
        %v1522 = vrot.slane %v1520, 4
        %v1523 = vshll.u32 %v1467, 16
        %v1525 = vrot.slane %v1523, 5
        %v1526 = vor.u32 %v1522, %v1525
        %v1527 = vrot.slane %v1526, 4
        %v1529 = vshll.u32 %v1468, 16
        %v1531 = vrot.slane %v1529, 5
        %v1532 = vsel %vm270, %v1527, %v1531
        %v1534 = vshrl.u32 %v1469, 16
        %v1536 = vrot.slane %v1534, 4
        %v1537 = vshll.u32 %v1469, 16
        %v1539 = vrot.slane %v1537, 5
        %v1540 = vor.u32 %v1536, %v1539
        %v1541 = vrot.slane %v1540, 4
        %v1543 = vshll.u32 %v1470, 16
        %v1545 = vrot.slane %v1543, 5
        %v1546 = vsel %vm270, %v1541, %v1545
        %v1548 = vshrl.u32 %v1471, 16
        %v1550 = vrot.slane %v1548, 4
        %v1551 = vshll.u32 %v1471, 16
        %v1553 = vrot.slane %v1551, 5
        %v1554 = vor.u32 %v1550, %v1553
        %v1555 = vrot.slane %v1554, 4
        %v1557 = vshll.u32 %v1472, 16
        %v1559 = vrot.slane %v1557, 5
        %v1560 = vsel %vm270, %v1555, %v1559
        %v1562 = vshrl.u32 %v1473, 16
        %v1564 = vrot.slane %v1562, 4
        %v1565 = vshll.u32 %v1473, 16
        %v1567 = vrot.slane %v1565, 5
        %v1568 = vor.u32 %v1564, %v1567
        %v1569 = vrot.slane %v1568, 4
        %v1571 = vshll.u32 %v1474, 16
        %v1573 = vrot.slane %v1571, 5
        %v1574 = vsel %vm270, %v1569, %v1573
        %v1576 = vshrl.u32 %v1475, 16
        %v1578 = vrot.slane %v1576, 4
        %v1579 = vshll.u32 %v1475, 16
        %v1581 = vrot.slane %v1579, 5
        %v1582 = vor.u32 %v1578, %v1581
        %v1583 = vrot.slane %v1582, 4
        %v1585 = vshll.u32 %v1476, 16
        %v1587 = vrot.slane %v1585, 5
        %v1588 = vsel %vm270, %v1583, %v1587
        %s1589 = scalar_lea.vmem [#allocation2], 448
        %v1590 = vld [vmem:[%s1589] sm:$0xf]
        %v1591 = vld [vmem:[%s1589 + $0x4] sm:$0xf]
        %v1592 = vld [vmem:[%s1589 + $0x8] sm:$0xf]
        %v1593 = vld [vmem:[%s1589 + $0xc] sm:$0xf]
        %v1594 = vld [vmem:[%s1589 + $0x10] sm:$0xf]
        %v1595 = vld [vmem:[%s1589 + $0x14] sm:$0xf]
        %v1596 = vld [vmem:[%s1589 + $0x18] sm:$0xf]
        %v1597 = vld [vmem:[%s1589 + $0x1c] sm:$0xf]
        %v1598 = vld [vmem:[%s1589 + $0x20] sm:$0xf]
        %v1599 = vld [vmem:[%s1589 + $0x24] sm:$0xf]
        %v1600 = vld [vmem:[%s1589 + $0x28] sm:$0xf]
        %v1601 = vld [vmem:[%s1589 + $0x2c] sm:$0xf]
        %v1602 = vld [vmem:[%s1589 + $0x30] sm:$0xf]
        %v1603 = vld [vmem:[%s1589 + $0x34] sm:$0xf]
        %v1604 = vld [vmem:[%s1589 + $0x38] sm:$0xf]
        %v1605 = vld [vmem:[%s1589 + $0x3c] sm:$0xf]
        %v1606 = vunpack.c.l.b16 %v1490
        %v1607 = vunpack.c.l.b16 %v1504
        %v1608 = vunpack.c.l.b16 %v1518
        %v1609 = vunpack.c.l.b16 %v1532
        %v1610 = vunpack.c.l.b16 %v1546
        %v1611 = vunpack.c.l.b16 %v1560
        %v1612 = vunpack.c.l.b16 %v1574
        %v1613 = vunpack.c.l.b16 %v1588
        %v1614 = vpack.c.b16 %v1607, %v1606
        %v1615 = vpack.c.b16 %v1609, %v1608
        %v1616 = vpack.c.b16 %v1611, %v1610
        %v1617 = vpack.c.b16 %v1613, %v1612
        %v1638 = vunpack.c.l.b16 %v1590
        %v1639 = vunpack.c.l.b16 %v1591
        %v1640 = vunpack.c.l.b16 %v1592
        %v1641 = vunpack.c.l.b16 %v1593
        %v1642 = vunpack.c.l.b16 %v1594
        %v1643 = vunpack.c.l.b16 %v1595
        %v1644 = vunpack.c.l.b16 %v1596
        %v1645 = vunpack.c.l.b16 %v1597
        %v1646 = vunpack.c.l.b16 %v1598
        %v1647 = vunpack.c.l.b16 %v1599
        %v1648 = vunpack.c.l.b16 %v1600
        %v1649 = vunpack.c.l.b16 %v1601
        %v1650 = vunpack.c.l.b16 %v1602
        %v1651 = vunpack.c.l.b16 %v1603
        %v1652 = vunpack.c.l.b16 %v1604
        %v1653 = vunpack.c.l.b16 %v1605
        %v1654 = vpack.c.b16 %v1639, %v1638
        %v1655 = vpack.c.b16 %v1641, %v1640
        %v1656 = vpack.c.b16 %v1643, %v1642
        %v1657 = vpack.c.b16 %v1645, %v1644
        %v1658 = vpack.c.b16 %v1647, %v1646
        %v1659 = vpack.c.b16 %v1649, %v1648
        %v1660 = vpack.c.b16 %v1651, %v1650
        %v1661 = vpack.c.b16 %v1653, %v1652
        %1670 = vmatpush.bf16.msra.mxu0 %v1661
        %1671 = vmatpush.bf16.msra.mxu0 %v1660
        %1672 = vmatpush.bf16.msra.mxu0 %v1659
        %1673 = vmatpush.bf16.msra.mxu0 %v1658
        %1674 = vmatpush.bf16.msra.mxu0 %v1657
        %1675 = vmatpush.bf16.msra.mxu0 %v1656
        %1676 = vmatpush.bf16.msra.mxu0 %v1655
        %1677 = vmatpush.bf16.msra.mxu0 %v1654
        %1678 = vmatmul.bf16.gmra.mxu0 %v1614
        %v1679 = vpop.f32.mrf.mxu0
        %v1680 = vadd.f32 0.0, %v1679
        %v1681 = vpop.f32.mrf.mxu0
        %v1682 = vadd.f32 0.0, %v1681
        %1683 = vmatmul.bf16.gmra.mxu0 %v1615
        %v1684 = vpop.f32.mrf.mxu0
        %v1685 = vadd.f32 0.0, %v1684
        %v1686 = vpop.f32.mrf.mxu0
        %v1687 = vadd.f32 0.0, %v1686
        %1688 = vmatmul.bf16.gmra.mxu0 %v1616
        %v1689 = vpop.f32.mrf.mxu0
        %v1690 = vadd.f32 0.0, %v1689
        %v1691 = vpop.f32.mrf.mxu0
        %v1692 = vadd.f32 0.0, %v1691
        %1693 = vmatmul.bf16.gmra.mxu0 %v1617
        %v1694 = vpop.f32.mrf.mxu0
        %v1695 = vadd.f32 0.0, %v1694
        %v1696 = vpop.f32.mrf.mxu0
        %v1697 = vadd.f32 0.0, %v1696
        %1698 = vdwg.mxu0
        %v1699 = vadd.f32 %v1453, %v1680
        %v1700 = vadd.f32 %v1454, %v1682
        %v1701 = vadd.f32 %v1455, %v1685
        %v1702 = vadd.f32 %v1456, %v1687
        %v1703 = vadd.f32 %v1457, %v1690
        %v1704 = vadd.f32 %v1458, %v1692
        %v1705 = vadd.f32 %v1459, %v1695
        %v1706 = vadd.f32 %v1460, %v1697
        %v1707 = vld [vmem:[%s1326] sm:$0xe]
        %v1708 = vld [vmem:[%s1326 + $0x8] sm:$0xe]
        %v1709 = vld [vmem:[%s1326 + $0x10] sm:$0xe]
        %v1710 = vld [vmem:[%s1326 + $0x18] sm:$0xe]
        %v1711 = vld [vmem:[%s1326 + $0x20] sm:$0xe]
        %v1712 = vld [vmem:[%s1326 + $0x28] sm:$0xe]
        %v1713 = vld [vmem:[%s1326 + $0x30] sm:$0xe]
        %v1714 = vld [vmem:[%s1326 + $0x38] sm:$0xe]
        %v1731 = vrot.slane %v1707, 5
        %v1732 = vrot.slane %v1731, 4
        %v1733 = vrot.slane %v1462, 5
        %v1734 = vsel %vm620, %v1732, %v1733
        %v1735 = vrot.slane %v1708, 5
        %v1736 = vrot.slane %v1735, 4
        %v1737 = vrot.slane %v1464, 5
        %v1738 = vsel %vm620, %v1736, %v1737
        %v1739 = vrot.slane %v1709, 5
        %v1740 = vrot.slane %v1739, 4
        %v1741 = vrot.slane %v1466, 5
        %v1742 = vsel %vm620, %v1740, %v1741
        %v1743 = vrot.slane %v1710, 5
        %v1744 = vrot.slane %v1743, 4
        %v1745 = vrot.slane %v1468, 5
        %v1746 = vsel %vm620, %v1744, %v1745
        %v1747 = vrot.slane %v1711, 5
        %v1748 = vrot.slane %v1747, 4
        %v1749 = vrot.slane %v1470, 5
        %v1750 = vsel %vm620, %v1748, %v1749
        %v1751 = vrot.slane %v1712, 5
        %v1752 = vrot.slane %v1751, 4
        %v1753 = vrot.slane %v1472, 5
        %v1754 = vsel %vm620, %v1752, %v1753
        %v1755 = vrot.slane %v1713, 5
        %v1756 = vrot.slane %v1755, 4
        %v1757 = vrot.slane %v1474, 5
        %v1758 = vsel %vm620, %v1756, %v1757
        %v1759 = vrot.slane %v1714, 5
        %v1760 = vrot.slane %v1759, 4
        %v1761 = vrot.slane %v1476, 5
        %v1762 = vsel %vm620, %v1760, %v1761
        %s1763 = scalar_lea.vmem [#allocation2], 512
        %v1764 = vld [vmem:[%s1763] sm:$0xf]
        %v1765 = vld [vmem:[%s1763 + $0x4] sm:$0xf]
        %v1766 = vld [vmem:[%s1763 + $0x8] sm:$0xf]
        %v1767 = vld [vmem:[%s1763 + $0xc] sm:$0xf]
        %v1768 = vld [vmem:[%s1763 + $0x10] sm:$0xf]
        %v1769 = vld [vmem:[%s1763 + $0x14] sm:$0xf]
        %v1770 = vld [vmem:[%s1763 + $0x18] sm:$0xf]
        %v1771 = vld [vmem:[%s1763 + $0x1c] sm:$0xf]
        %v1772 = vld [vmem:[%s1763 + $0x20] sm:$0xf]
        %v1773 = vld [vmem:[%s1763 + $0x24] sm:$0xf]
        %v1774 = vld [vmem:[%s1763 + $0x28] sm:$0xf]
        %v1775 = vld [vmem:[%s1763 + $0x2c] sm:$0xf]
        %v1776 = vld [vmem:[%s1763 + $0x30] sm:$0xf]
        %v1777 = vld [vmem:[%s1763 + $0x34] sm:$0xf]
        %v1778 = vld [vmem:[%s1763 + $0x38] sm:$0xf]
        %v1779 = vld [vmem:[%s1763 + $0x3c] sm:$0xf]
        %v1780 = vunpack.c.l.b16 %v1734
        %v1781 = vunpack.c.l.b16 %v1738
        %v1782 = vunpack.c.l.b16 %v1742
        %v1783 = vunpack.c.l.b16 %v1746
        %v1784 = vunpack.c.l.b16 %v1750
        %v1785 = vunpack.c.l.b16 %v1754
        %v1786 = vunpack.c.l.b16 %v1758
        %v1787 = vunpack.c.l.b16 %v1762
        %v1788 = vpack.c.b16 %v1781, %v1780
        %v1789 = vpack.c.b16 %v1783, %v1782
        %v1790 = vpack.c.b16 %v1785, %v1784
        %v1791 = vpack.c.b16 %v1787, %v1786
        %v1812 = vunpack.c.l.b16 %v1764
        %v1813 = vunpack.c.l.b16 %v1765
        %v1814 = vunpack.c.l.b16 %v1766
        %v1815 = vunpack.c.l.b16 %v1767
        %v1816 = vunpack.c.l.b16 %v1768
        %v1817 = vunpack.c.l.b16 %v1769
        %v1818 = vunpack.c.l.b16 %v1770
        %v1819 = vunpack.c.l.b16 %v1771
        %v1820 = vunpack.c.l.b16 %v1772
        %v1821 = vunpack.c.l.b16 %v1773
        %v1822 = vunpack.c.l.b16 %v1774
        %v1823 = vunpack.c.l.b16 %v1775
        %v1824 = vunpack.c.l.b16 %v1776
        %v1825 = vunpack.c.l.b16 %v1777
        %v1826 = vunpack.c.l.b16 %v1778
        %v1827 = vunpack.c.l.b16 %v1779
        %v1828 = vpack.c.b16 %v1813, %v1812
        %v1829 = vpack.c.b16 %v1815, %v1814
        %v1830 = vpack.c.b16 %v1817, %v1816
        %v1831 = vpack.c.b16 %v1819, %v1818
        %v1832 = vpack.c.b16 %v1821, %v1820
        %v1833 = vpack.c.b16 %v1823, %v1822
        %v1834 = vpack.c.b16 %v1825, %v1824
        %v1835 = vpack.c.b16 %v1827, %v1826
        %1844 = vmatpush.bf16.msra.mxu0 %v1835
        %1845 = vmatpush.bf16.msra.mxu0 %v1834
        %1846 = vmatpush.bf16.msra.mxu0 %v1833
        %1847 = vmatpush.bf16.msra.mxu0 %v1832
        %1848 = vmatpush.bf16.msra.mxu0 %v1831
        %1849 = vmatpush.bf16.msra.mxu0 %v1830
        %1850 = vmatpush.bf16.msra.mxu0 %v1829
        %1851 = vmatpush.bf16.msra.mxu0 %v1828
        %1852 = vmatmul.bf16.gmra.mxu0 %v1788
        %v1853 = vpop.f32.mrf.mxu0
        %v1854 = vadd.f32 0.0, %v1853
        %v1855 = vpop.f32.mrf.mxu0
        %v1856 = vadd.f32 0.0, %v1855
        %1857 = vmatmul.bf16.gmra.mxu0 %v1789
        %v1858 = vpop.f32.mrf.mxu0
        %v1859 = vadd.f32 0.0, %v1858
        %v1860 = vpop.f32.mrf.mxu0
        %v1861 = vadd.f32 0.0, %v1860
        %1862 = vmatmul.bf16.gmra.mxu0 %v1790
        %v1863 = vpop.f32.mrf.mxu0
        %v1864 = vadd.f32 0.0, %v1863
        %v1865 = vpop.f32.mrf.mxu0
        %v1866 = vadd.f32 0.0, %v1865
        %1867 = vmatmul.bf16.gmra.mxu0 %v1791
        %v1868 = vpop.f32.mrf.mxu0
        %v1869 = vadd.f32 0.0, %v1868
        %v1870 = vpop.f32.mrf.mxu0
        %v1871 = vadd.f32 0.0, %v1870
        %1872 = vdwg.mxu0
        %v1873 = vadd.f32 %v1699, %v1854
        %v1874 = vadd.f32 %v1700, %v1856
        %v1875 = vadd.f32 %v1701, %v1859
        %v1876 = vadd.f32 %v1702, %v1861
        %v1877 = vadd.f32 %v1703, %v1864
        %v1878 = vadd.f32 %v1704, %v1866
        %v1879 = vadd.f32 %v1705, %v1869
        %v1880 = vadd.f32 %v1706, %v1871
        %v1881 = vld [vmem:[#allocation4] sm:$0x1]
        %v1883 = vperm.slane %v1881, 0
        %v1885 = vadd.f32 %v1873, %v1883
        %v1886 = vadd.f32 %v1874, %v1883
        %v1887 = vadd.f32 %v1875, %v1883
        %v1888 = vadd.f32 %v1876, %v1883
        %v1889 = vadd.f32 %v1877, %v1883
        %v1890 = vadd.f32 %v1878, %v1883
        %v1891 = vadd.f32 %v1879, %v1883
        %v1892 = vadd.f32 %v1880, %v1883
        %v1893 = vmax.f32 %v1885, 0.0
        %v1894 = vmax.f32 %v1886, 0.0
        %v1895 = vmax.f32 %v1887, 0.0
        %v1896 = vmax.f32 %v1888, 0.0
        %v1897 = vmax.f32 %v1889, 0.0
        %v1898 = vmax.f32 %v1890, 0.0
        %v1899 = vmax.f32 %v1891, 0.0
        %v1900 = vmax.f32 %v1892, 0.0
        %v1901 = vpack.c.bf16 %v1893, %v1893
        %v1902 = vpack.c.bf16 %v1894, %v1894
        %v1903 = vpack.c.bf16 %v1895, %v1895
        %v1904 = vpack.c.bf16 %v1896, %v1896
        %v1905 = vpack.c.bf16 %v1897, %v1897
        %v1906 = vpack.c.bf16 %v1898, %v1898
        %v1907 = vpack.c.bf16 %v1899, %v1899
        %v1908 = vpack.c.bf16 %v1900, %v1900
        %1909 = vst [vmem:[%s235] sm:$0xf] %v1901
        %1910 = vst [vmem:[%s235 + $0x4] sm:$0xf] %v1902
        %1911 = vst [vmem:[%s235 + $0x8] sm:$0xf] %v1903
        %1912 = vst [vmem:[%s235 + $0xc] sm:$0xf] %v1904
        %1913 = vst [vmem:[%s235 + $0x10] sm:$0xf] %v1905
        %1914 = vst [vmem:[%s235 + $0x14] sm:$0xf] %v1906
        %1915 = vst [vmem:[%s235 + $0x18] sm:$0xf] %v1907
        %1916 = vst [vmem:[%s235 + $0x1c] sm:$0xf] %v1908
        %p1917 = scmp.lt.s32.totalorder %s20, 1
        %s1918 = scalar_select %p1917, %s20, 1
        %p1919 = scmp.lt.s32.totalorder %s21, 0
        %s1920 = scalar_select %p1919, %s21, 0
        %s1921 = smul.addr %s1918, 8
        %s1922 = sadd.s32 %s1920, %s1921
        %s1923 = smul.addr %s1922, 4
        %s1924 = scalar_lea.vmem %s3, %s1923
        // Predicated region
        $region41: #{_lambda_.6} parent=31 // pred_check
          %p1925 = pneg %p126
        $region42: #{_lambda_.6} parent=31 // pred_check_branch
          %1927 = sbr.rel (%p1925) target = $region44
        $region43: #{_lambda_.6} parent=31 // pred_region
          _
        $region44: #{_lambda_.6} parent=31 // pred_fallthru
          _
      $region32: #{_lambda_.6} parent=5 // pred_fallthru
        _
      %p1928 = scmp.le.s32.totalorder 2, %s11
      // Predicated region
      $region45: #{_lambda_.6} parent=5 // pred_check
        %p1929 = pneg %p1928
      $region46: #{_lambda_.6} parent=5 // pred_check_branch
        %1931 = sbr.rel (%p1929) target = $region48
      $region47: #{_lambda_.6} parent=5 // pred_region
        %s1932 = ssub.s32 %s11, 2
        // Predicated region
        $region49: #{_lambda_.6} parent=47 // pred_check
          %p1933 = pneg %p132
        $region50: #{_lambda_.6} parent=47 // pred_check_branch
          %1935 = sbr.rel (%p1933) target = $region52
        $region51: #{_lambda_.6} parent=47 // pred_region
          %p1936 = scmp.lt.s32.totalorder %s22, 1
          %s1937 = scalar_select %p1936, %s22, 1
          %p1938 = scmp.lt.s32.totalorder %s23, 0
          %s1939 = scalar_select %p1938, %s23, 0
          %s1940 = smul.addr %s1937, 8
          %s1941 = sadd.s32 %s1939, %s1940
          %s1942 = smul.addr %s1941, 4
          %s1943 = scalar_lea.vmem %s3, %s1942
        $region52: #{_lambda_.6} parent=47 // pred_fallthru
          _
      $region48: #{_lambda_.6} parent=5 // pred_fallthru
        _
    $region6: #{_lambda_.6} parent=1 // loop_footer
      %s15 = sadd.s32 1, %s11
    $region7: #{_lambda_.6} parent=1 // loop_footer_branch
      %10 = sbr.rel target = $region3
    $region8: #{_lambda_.6} parent=1 // loop_exit
      _
    %1944 = vsyncpa [#allocation3], 1
    %s1945 = scalar_lea.sflag [#allocation3], 1
    %1946 = vsyncpa %s1945, 1
    %1947 = vsyncpa [#allocation5], 1

// kernel: _lambda_.4
$region0: #{_lambda_.4}
  #allocation0 [shape = 'u32[]', space=smem, size = 0x4, offset = 0x4, fixed_abs, tag = 'smem constant byte address 0x4 - core index']
  #allocation1 [shape = 'u32[72,128]{1,0:T(1,128)}', space=vmem, size = 0x9000, scoped, tag = 'internal scratch']
  %s0 = inlined_call_operand.vmem [shape: bf16[2,18,18,128], index: 0, kind: input, shape index: {}]
  %s1 = inlined_call_operand.hbm [shape: bf16[9,128,128], index: 1, kind: input, shape index: {}]
  %s2 = inlined_call_operand.hbm [shape: f32[1,128], index: 2, kind: input, shape index: {}]
  %s3 = inlined_call_operand.vmem [shape: bf16[2,16,16,128], index: 3, kind: output, shape index: {}]
  %s4 = sld [smem:[#allocation0]]
  $region53: #{_lambda_.4} parent=0
    _
  %s6 = ssub.s32 1, %s4
  %s7 = scalar_select 0, %s6, %s4
  $region1: #{_lambda_.4} parent=0
    #allocation2 [shape = 'u8[294912]{0}', space=vmem, size = 0x48000, scoped, tag = 'input window, operand 1, single buffered']
    #allocation3 [shape = 's32[2]{0}', space=sflag, size = 0x8, scoped, tag = 'scoped memory for _lambda_.4']
    #allocation4 [shape = 'u8[512]{0}', space=vmem, size = 0x400, scoped, tag = 'input window, operand 2, single buffered']
    #allocation5 [shape = 's32[1]{0}', space=sflag, size = 0x4, scoped, tag = 'scoped memory for _lambda_.4']
    %8 = vsyncpa [#allocation3], 0
    %9 = vsyncpa [#allocation5], 0
    loop: start=0, step=1, limit=4
    $region2: #{_lambda_.4} parent=1 // loop_pre_header
      _
    $region3: #{_lambda_.4} parent=1 // loop_header
      %s11 = sphi 0, %s15
      %p12 = scmp.ge.s32.totalorder %s11, 4
      %s18 = sphi 0, %s30
      %s19 = sphi 0, %s26
      %s20 = sphi 0, %s18
      %s21 = sphi 0, %s19
      %s22 = sphi 0, %s20
      %s23 = sphi 0, %s21
      %s33 = sphi 0, %s35
      %s36 = sphi 0, %s33
      %s37 = sphi 0, %s36
      %s53 = sphi 0, %s37
      %s59 = sphi 0, %s61
      %s62 = sphi 0, %s59
      %s63 = sphi 0, %s62
      %s79 = sphi 0, %s63
      %s85 = sphi 0, %s87
      %s88 = sphi 0, %s85
      %s89 = sphi 0, %s88
      %s105 = sphi 0, %s89
      %s113 = sphi 0, %s115
      %s116 = sphi 0, %s113
      %s117 = sphi 0, %s116
      %s133 = sphi 0, %s117
    $region4: #{_lambda_.4} parent=1 // loop_header_branch
      %14 = sbr.rel (%p12) target = $region8
    $region5: #{_lambda_.4} parent=1 // loop_body
      %s16 = ssub.s32 %s11, 1
      %s17 = ssub.s32 %s11, 2
      %s24 = sadd.s32 1, %s19
      %p25 = scmp.ge.s32.totalorder %s24, 1
      %s26 = scalar_select %p25, 0, %s24
      %s27 = sadd.s32 1, %s18
      %s28 = scalar_select %p25, %s27, %s18
      %p29 = scmp.ge.s32.totalorder %s28, 2
      %s30 = scalar_select %p29, 0, %s28
      %s31 = ssub.s32 %s18, %s30
      %p32 = scmp.eq.s32.totalorder %s31, 0
      %s34 = sadd.s32 %s33, 1
      %s35 = scalar_select %p32, %s33, %s34
      %p38 = pneg %p32
      %p39 = scmp.eq.s32.totalorder %s11, 1
      %p40 = por %p38, %p39
      %p41 = scmp.ne.s32.totalorder %s33, %s36
      %p42 = scmp.eq.s32.totalorder %s11, 0
      %p43 = por %p41, %p42
      %p44 = scmp.ne.s32.totalorder %s33, %s36
      %p45 = scmp.eq.s32.totalorder %s16, 1
      %p46 = por %p44, %p45
      %p47 = scmp.ne.s32.totalorder %s36, %s37
      %p48 = scmp.eq.s32.totalorder %s16, 0
      %p49 = por %p47, %p48
      %p50 = scmp.ne.s32.totalorder %s36, %s37
      %p51 = scmp.eq.s32.totalorder %s17, 1
      %p52 = por %p50, %p51
      %p54 = scmp.ne.s32.totalorder %s37, %s53
      %p55 = scmp.eq.s32.totalorder %s17, 0
      %p56 = por %p54, %p55
      %s57 = ssub.s32 %s19, %s26
      %p58 = scmp.eq.s32.totalorder %s57, 0
      %s60 = sadd.s32 %s59, 1
      %s61 = scalar_select %p58, %s59, %s60
      %p64 = pneg %p58
      %p65 = scmp.eq.s32.totalorder %s11, 1
      %p66 = por %p64, %p65
      %p67 = scmp.ne.s32.totalorder %s59, %s62
      %p68 = scmp.eq.s32.totalorder %s11, 0
      %p69 = por %p67, %p68
      %p70 = scmp.ne.s32.totalorder %s59, %s62
      %p71 = scmp.eq.s32.totalorder %s16, 1
      %p72 = por %p70, %p71
      %p73 = scmp.ne.s32.totalorder %s62, %s63
      %p74 = scmp.eq.s32.totalorder %s16, 0
      %p75 = por %p73, %p74
      %p76 = scmp.ne.s32.totalorder %s62, %s63
      %p77 = scmp.eq.s32.totalorder %s17, 1
      %p78 = por %p76, %p77
      %p80 = scmp.ne.s32.totalorder %s63, %s79
      %p81 = scmp.eq.s32.totalorder %s17, 0
      %p82 = por %p80, %p81
      %s83 = ssub.s32 %s19, %s26
      %p84 = scmp.eq.s32.totalorder %s83, 0
      %s86 = sadd.s32 %s85, 1
      %s87 = scalar_select %p84, %s85, %s86
      %p90 = pneg %p84
      %p91 = scmp.eq.s32.totalorder %s11, 1
      %p92 = por %p90, %p91
      %p93 = scmp.ne.s32.totalorder %s85, %s88
      %p94 = scmp.eq.s32.totalorder %s11, 0
      %p95 = por %p93, %p94
      %p96 = scmp.ne.s32.totalorder %s85, %s88
      %p97 = scmp.eq.s32.totalorder %s16, 1
      %p98 = por %p96, %p97
      %p99 = scmp.ne.s32.totalorder %s88, %s89
      %p100 = scmp.eq.s32.totalorder %s16, 0
      %p101 = por %p99, %p100
      %p102 = scmp.ne.s32.totalorder %s88, %s89
      %p103 = scmp.eq.s32.totalorder %s17, 1
      %p104 = por %p102, %p103
      %p106 = scmp.ne.s32.totalorder %s89, %s105
      %p107 = scmp.eq.s32.totalorder %s17, 0
      %p108 = por %p106, %p107
      %s109 = ssub.s32 %s18, %s30
      %s110 = ssub.s32 %s19, %s26
      %s111 = sor.u32 %s109, %s110
      %p112 = scmp.eq.s32.totalorder %s111, 0
      %s114 = sadd.s32 %s113, 1
      %s115 = scalar_select %p112, %s113, %s114
      %p118 = pneg %p112
      %p119 = scmp.eq.s32.totalorder %s11, 1
      %p120 = por %p118, %p119
      %p121 = scmp.ne.s32.totalorder %s113, %s116
      %p122 = scmp.eq.s32.totalorder %s11, 0
      %p123 = por %p121, %p122
      %p124 = scmp.ne.s32.totalorder %s113, %s116
      %p125 = scmp.eq.s32.totalorder %s16, 1
      %p126 = por %p124, %p125
      %p127 = scmp.ne.s32.totalorder %s116, %s117
      %p128 = scmp.eq.s32.totalorder %s16, 0
      %p129 = por %p127, %p128
      %p130 = scmp.ne.s32.totalorder %s116, %s117
      %p131 = scmp.eq.s32.totalorder %s17, 1
      %p132 = por %p130, %p131
      %p134 = scmp.ne.s32.totalorder %s117, %s133
      %p135 = scmp.eq.s32.totalorder %s17, 0
      %p136 = por %p134, %p135
      %p137 = scmp.le.s32.totalorder 1, %s11
      %p138 = scmp.lt.s32.totalorder %s11, 3
      %p139 = pnand %p137, %p138
      %p140 = pneg %p139
      // Predicated region
      $region9: #{_lambda_.4} parent=5 // pred_check
        _
      $region10: #{_lambda_.4} parent=5 // pred_check_branch
        %142 = sbr.rel (%p139) target = $region12
      $region11: #{_lambda_.4} parent=5 // pred_region
        %s143 = ssub.s32 %s11, 1
        // Predicated region
        $region13: #{_lambda_.4} parent=11 // pred_check
          %p144 = pneg %p75
        $region14: #{_lambda_.4} parent=11 // pred_check_branch
          %146 = sbr.rel (%p144) target = $region16
        $region15: #{_lambda_.4} parent=11 // pred_region
          %148 = vsyncadd [#allocation3], 0
          %s149 = smul.addr %s21, 4
          %s150 = scalar_lea.hbm %s1, %s149
          %s151 = sshll.u32 %s150, 4
          %s152 = int_to_ptr.hbm [resolvable:$true] %s151
          %s153 = sshll.u32 [#allocation2], 4
          %s154 = int_to_ptr.vmem [resolvable:$true] %s153
          %159 = dma.hbm_to_vmem [thread:$0]  %s152, 9216, %s154, [#allocation3], 64, 64, 4
        $region16: #{_lambda_.4} parent=11 // pred_fallthru
          _
        // Predicated region
        $region17: #{_lambda_.4} parent=11 // pred_check
          %p160 = pneg %p101
        $region18: #{_lambda_.4} parent=11 // pred_check_branch
          %162 = sbr.rel (%p160) target = $region20
        $region19: #{_lambda_.4} parent=11 // pred_region
          %164 = vsyncadd [#allocation5], 0
          %s165 = scalar_lea.hbm %s2, %s21
          %s167 = sshll.u32 %s165, 4
          %s168 = int_to_ptr.hbm [resolvable:$true] %s167
          %s169 = sshll.u32 [#allocation4], 4
          %s170 = int_to_ptr.vmem [resolvable:$true] %s169
          %172 = dma.hbm_to_vmem [thread:$0]  %s168, 16, %s170, [#allocation5]
        $region20: #{_lambda_.4} parent=11 // pred_fallthru
          _
      $region12: #{_lambda_.4} parent=5 // pred_fallthru
        _
      %p173 = scmp.lt.s32.totalorder %s11, 2
      // Predicated region
      $region21: #{_lambda_.4} parent=5 // pred_check
        %p174 = pneg %p173
      $region22: #{_lambda_.4} parent=5 // pred_check_branch
        %176 = sbr.rel (%p174) target = $region24
      $region23: #{_lambda_.4} parent=5 // pred_region
        // Predicated region
        $region25: #{_lambda_.4} parent=23 // pred_check
          %p177 = pneg %p43
        $region26: #{_lambda_.4} parent=23 // pred_check_branch
          %179 = sbr.rel (%p177) target = $region28
        $region27: #{_lambda_.4} parent=23 // pred_region
          %p180 = scmp.lt.s32.totalorder %s18, 1
          %s181 = scalar_select %p180, %s18, 1
          %s182 = smul.addr %s181, 54
          %s183 = smul.addr %s182, 4
          %s184 = scalar_lea.vmem %s0, %s183
        $region28: #{_lambda_.4} parent=23 // pred_fallthru
          _
      $region24: #{_lambda_.4} parent=5 // pred_fallthru
        _
      %p185 = scmp.le.s32.totalorder 1, %s11
      %p186 = scmp.lt.s32.totalorder %s11, 3
      %p187 = pnand %p185, %p186
      %p188 = pneg %p187
      // Predicated region
      $region29: #{_lambda_.4} parent=5 // pred_check
        _
      $region30: #{_lambda_.4} parent=5 // pred_check_branch
        %190 = sbr.rel (%p187) target = $region32
      $region31: #{_lambda_.4} parent=5 // pred_region
        %s191 = ssub.s32 %s11, 1
        // Predicated region
        $region33: #{_lambda_.4} parent=31 // pred_check
          %p192 = pneg %p75
        $region34: #{_lambda_.4} parent=31 // pred_check_branch
          %194 = sbr.rel (%p192) target = $region36
        $region35: #{_lambda_.4} parent=31 // pred_region
          %196 = dma.done [#allocation3], 9216
        $region36: #{_lambda_.4} parent=31 // pred_fallthru
          _
        // Predicated region
        $region37: #{_lambda_.4} parent=31 // pred_check
          %p197 = pneg %p101
        $region38: #{_lambda_.4} parent=31 // pred_check_branch
          %199 = sbr.rel (%p197) target = $region40
        $region39: #{_lambda_.4} parent=31 // pred_region
          %201 = dma.done [#allocation5], 16
        $region40: #{_lambda_.4} parent=31 // pred_fallthru
          _
        %p202 = scmp.lt.s32.totalorder %s20, 1
        %s203 = scalar_select %p202, %s20, 1
        %s204 = smul.addr %s203, 54
        %s205 = smul.addr %s204, 4
        %s206 = scalar_lea.vmem %s0, %s205
        %p207 = pneg %p49
        %p208 = pneg %p46
        %p209 = pneg %p75
        %p210 = pneg %p72
        %p211 = pneg %p101
        %p212 = pneg %p98
        %p213 = pneg %p129
        %p214 = pneg %p126
        %p215 = scmp.lt.s32.totalorder %s20, 1
        %s216 = scalar_select %p215, %s20, 1
        %p217 = scmp.lt.s32.totalorder %s21, 0
        %s218 = scalar_select %p217, %s21, 0
        %s219 = smul.addr %s216, 32
        %s220 = sadd.s32 %s218, %s219
        %s221 = smul.addr %s220, 4
        %s222 = scalar_lea.vmem %s3, %s221
        %p223 = scmp.lt.s32.totalorder %s20, 1
        %s224 = scalar_select %p223, %s20, 1
        %s225 = smul.addr %s224, 54
        %s226 = smul.addr %s225, 4
        %s227 = scalar_lea.vmem %s0, %s226
        %p228 = scmp.lt.s32.totalorder %s20, 1
        %s229 = scalar_select %p228, %s20, 1
        %p230 = scmp.lt.s32.totalorder %s21, 0
        %s231 = scalar_select %p230, %s21, 0
        %s232 = smul.addr %s229, 32
        %s233 = sadd.s32 %s231, %s232
        %s234 = smul.addr %s233, 4
        %s235 = scalar_lea.vmem %s3, %s234
        %v236 = vld [vmem:[%s227] sm:$0xf]
        %v237 = vld [vmem:[%s227 + $0x4] sm:$0xf]
        %v238 = vld [vmem:[%s227 + $0xc] sm:$0xf]
        %v239 = vld [vmem:[%s227 + $0x10] sm:$0xf]
        %v240 = vld [vmem:[%s227 + $0x18] sm:$0xf]
        %v241 = vld [vmem:[%s227 + $0x1c] sm:$0xf]
        %v242 = vld [vmem:[%s227 + $0x24] sm:$0xf]
        %v243 = vld [vmem:[%s227 + $0x28] sm:$0xf]
        %v244 = vld [vmem:[%s227 + $0x30] sm:$0xf]
        %v245 = vld [vmem:[%s227 + $0x34] sm:$0xf]
        %v246 = vld [vmem:[%s227 + $0x3c] sm:$0xf]
        %v247 = vld [vmem:[%s227 + $0x40] sm:$0xf]
        %v248 = vld [vmem:[%s227 + $0x48] sm:$0xf]
        %v249 = vld [vmem:[%s227 + $0x4c] sm:$0xf]
        %v250 = vld [vmem:[%s227 + $0x54] sm:$0xf]
        %v251 = vld [vmem:[%s227 + $0x58] sm:$0xf]
        %v252 = vld [vmem:[%s227 + $0x60] sm:$0xf]
        %v253 = vld [vmem:[%s227 + $0x64] sm:$0xf]
        %v254 = vld [vmem:[%s227 + $0x6c] sm:$0xf]
        %v255 = vld [vmem:[%s227 + $0x70] sm:$0xf]
        %v256 = vld [vmem:[%s227 + $0x78] sm:$0xf]
        %v257 = vld [vmem:[%s227 + $0x7c] sm:$0xf]
        %v258 = vld [vmem:[%s227 + $0x84] sm:$0xf]
        %v259 = vld [vmem:[%s227 + $0x88] sm:$0xf]
        %v260 = vld [vmem:[%s227 + $0x90] sm:$0xf]
        %v261 = vld [vmem:[%s227 + $0x94] sm:$0xf]
        %v262 = vld [vmem:[%s227 + $0x9c] sm:$0xf]
        %v263 = vld [vmem:[%s227 + $0xa0] sm:$0xf]
        %v264 = vld [vmem:[%s227 + $0xa8] sm:$0xf]
        %v265 = vld [vmem:[%s227 + $0xac] sm:$0xf]
        %v266 = vld [vmem:[%s227 + $0xb4] sm:$0xf]
        %v267 = vld [vmem:[%s227 + $0xb8] sm:$0xf]
        %v268 = vld [vmem:[#allocation2] sm:$0xf]
        %v269 = vld [vmem:[#allocation2 + $0x4] sm:$0xf]
        %v270 = vld [vmem:[#allocation2 + $0x8] sm:$0xf]
        %v271 = vld [vmem:[#allocation2 + $0xc] sm:$0xf]
        %v272 = vld [vmem:[#allocation2 + $0x10] sm:$0xf]
        %v273 = vld [vmem:[#allocation2 + $0x14] sm:$0xf]
        %v274 = vld [vmem:[#allocation2 + $0x18] sm:$0xf]
        %v275 = vld [vmem:[#allocation2 + $0x1c] sm:$0xf]
        %v276 = vld [vmem:[#allocation2 + $0x20] sm:$0xf]
        %v277 = vld [vmem:[#allocation2 + $0x24] sm:$0xf]
        %v278 = vld [vmem:[#allocation2 + $0x28] sm:$0xf]
        %v279 = vld [vmem:[#allocation2 + $0x2c] sm:$0xf]
        %v280 = vld [vmem:[#allocation2 + $0x30] sm:$0xf]
        %v281 = vld [vmem:[#allocation2 + $0x34] sm:$0xf]
        %v282 = vld [vmem:[#allocation2 + $0x38] sm:$0xf]
        %v283 = vld [vmem:[#allocation2 + $0x3c] sm:$0xf]
        %v284 = vld [vmem:[%s227 + $0x8] sm:$0x1]
        %v285 = vld [vmem:[%s227 + $0x14] sm:$0x1]
        %v286 = vld [vmem:[%s227 + $0x20] sm:$0x1]
        %v287 = vld [vmem:[%s227 + $0x2c] sm:$0x1]
        %v288 = vld [vmem:[%s227 + $0x38] sm:$0x1]
        %v289 = vld [vmem:[%s227 + $0x44] sm:$0x1]
        %v290 = vld [vmem:[%s227 + $0x50] sm:$0x1]
        %v291 = vld [vmem:[%s227 + $0x5c] sm:$0x1]
        %v292 = vld [vmem:[%s227 + $0x68] sm:$0x1]
        %v293 = vld [vmem:[%s227 + $0x74] sm:$0x1]
        %v294 = vld [vmem:[%s227 + $0x80] sm:$0x1]
        %v295 = vld [vmem:[%s227 + $0x8c] sm:$0x1]
        %v296 = vld [vmem:[%s227 + $0x98] sm:$0x1]
        %v297 = vld [vmem:[%s227 + $0xa4] sm:$0x1]
        %v298 = vld [vmem:[%s227 + $0xb0] sm:$0x1]
        %v299 = vld [vmem:[%s227 + $0xbc] sm:$0x1]
        %vm300 = vsmask.f32 3328
        %vm301 = vsmask.f32 7440
        %vm302 = vmor %vm300, %vm301
        %v304 = vshrl.u32 %v236, 16
        %v306 = vrot.slane %v304, 4
        %v307 = vshll.u32 %v236, 16
        %v309 = vrot.slane %v307, 5
        %v310 = vor.u32 %v306, %v309
        %v311 = vrot.slane %v310, 4
        %v313 = vshll.u32 %v237, 16
        %v315 = vrot.slane %v313, 5
        %v316 = vsel %vm302, %v311, %v315
        %v317 = vshrl.u32 %v237, 16
        %v319 = vrot.slane %v317, 4
        %v320 = vor.u32 %v319, %v315
        %v321 = vrot.slane %v320, 4
        %v323 = vshll.u32 %v284, 16
        %v325 = vrot.slane %v323, 5
        %v326 = vsel %vm302, %v321, %v325
        %v328 = vshrl.u32 %v238, 16
        %v330 = vrot.slane %v328, 4
        %v331 = vshll.u32 %v238, 16
        %v333 = vrot.slane %v331, 5
        %v334 = vor.u32 %v330, %v333
        %v335 = vrot.slane %v334, 4
        %v337 = vshll.u32 %v239, 16
        %v339 = vrot.slane %v337, 5
        %v340 = vsel %vm302, %v335, %v339
        %v341 = vshrl.u32 %v239, 16
        %v343 = vrot.slane %v341, 4
        %v344 = vor.u32 %v343, %v339
        %v345 = vrot.slane %v344, 4
        %v347 = vshll.u32 %v285, 16
        %v349 = vrot.slane %v347, 5
        %v350 = vsel %vm302, %v345, %v349
        %v352 = vshrl.u32 %v240, 16
        %v354 = vrot.slane %v352, 4
        %v355 = vshll.u32 %v240, 16
        %v357 = vrot.slane %v355, 5
        %v358 = vor.u32 %v354, %v357
        %v359 = vrot.slane %v358, 4
        %v361 = vshll.u32 %v241, 16
        %v363 = vrot.slane %v361, 5
        %v364 = vsel %vm302, %v359, %v363
        %v365 = vshrl.u32 %v241, 16
        %v367 = vrot.slane %v365, 4
        %v368 = vor.u32 %v367, %v363
        %v369 = vrot.slane %v368, 4
        %v371 = vshll.u32 %v286, 16
        %v373 = vrot.slane %v371, 5
        %v374 = vsel %vm302, %v369, %v373
        %v376 = vshrl.u32 %v242, 16
        %v378 = vrot.slane %v376, 4
        %v379 = vshll.u32 %v242, 16
        %v381 = vrot.slane %v379, 5
        %v382 = vor.u32 %v378, %v381
        %v383 = vrot.slane %v382, 4
        %v385 = vshll.u32 %v243, 16
        %v387 = vrot.slane %v385, 5
        %v388 = vsel %vm302, %v383, %v387
        %v389 = vshrl.u32 %v243, 16
        %v391 = vrot.slane %v389, 4
        %v392 = vor.u32 %v391, %v387
        %v393 = vrot.slane %v392, 4
        %v395 = vshll.u32 %v287, 16
        %v397 = vrot.slane %v395, 5
        %v398 = vsel %vm302, %v393, %v397
        %v400 = vshrl.u32 %v244, 16
        %v402 = vrot.slane %v400, 4
        %v403 = vshll.u32 %v244, 16
        %v405 = vrot.slane %v403, 5
        %v406 = vor.u32 %v402, %v405
        %v407 = vrot.slane %v406, 4
        %v409 = vshll.u32 %v245, 16
        %v411 = vrot.slane %v409, 5
        %v412 = vsel %vm302, %v407, %v411
        %v413 = vshrl.u32 %v245, 16
        %v415 = vrot.slane %v413, 4
        %v416 = vor.u32 %v415, %v411
        %v417 = vrot.slane %v416, 4
        %v419 = vshll.u32 %v288, 16
        %v421 = vrot.slane %v419, 5
        %v422 = vsel %vm302, %v417, %v421
        %v424 = vshrl.u32 %v246, 16
        %v426 = vrot.slane %v424, 4
        %v427 = vshll.u32 %v246, 16
        %v429 = vrot.slane %v427, 5
        %v430 = vor.u32 %v426, %v429
        %v431 = vrot.slane %v430, 4
        %v433 = vshll.u32 %v247, 16
        %v435 = vrot.slane %v433, 5
        %v436 = vsel %vm302, %v431, %v435
        %v437 = vshrl.u32 %v247, 16
        %v439 = vrot.slane %v437, 4
        %v440 = vor.u32 %v439, %v435
        %v441 = vrot.slane %v440, 4
        %v443 = vshll.u32 %v289, 16
        %v445 = vrot.slane %v443, 5
        %v446 = vsel %vm302, %v441, %v445
        %v448 = vshrl.u32 %v248, 16
        %v450 = vrot.slane %v448, 4
        %v451 = vshll.u32 %v248, 16
        %v453 = vrot.slane %v451, 5
        %v454 = vor.u32 %v450, %v453
        %v455 = vrot.slane %v454, 4
        %v457 = vshll.u32 %v249, 16
        %v459 = vrot.slane %v457, 5
        %v460 = vsel %vm302, %v455, %v459
        %v461 = vshrl.u32 %v249, 16
        %v463 = vrot.slane %v461, 4
        %v464 = vor.u32 %v463, %v459
        %v465 = vrot.slane %v464, 4
        %v467 = vshll.u32 %v290, 16
        %v469 = vrot.slane %v467, 5
        %v470 = vsel %vm302, %v465, %v469
        %v472 = vshrl.u32 %v250, 16
        %v474 = vrot.slane %v472, 4
        %v475 = vshll.u32 %v250, 16
        %v477 = vrot.slane %v475, 5
        %v478 = vor.u32 %v474, %v477
        %v479 = vrot.slane %v478, 4
        %v481 = vshll.u32 %v251, 16
        %v483 = vrot.slane %v481, 5
        %v484 = vsel %vm302, %v479, %v483
        %v485 = vshrl.u32 %v251, 16
        %v487 = vrot.slane %v485, 4
        %v488 = vor.u32 %v487, %v483
        %v489 = vrot.slane %v488, 4
        %v491 = vshll.u32 %v291, 16
        %v493 = vrot.slane %v491, 5
        %v494 = vsel %vm302, %v489, %v493
        %v496 = vshrl.u32 %v252, 16
        %v498 = vrot.slane %v496, 4
        %v499 = vshll.u32 %v252, 16
        %v501 = vrot.slane %v499, 5
        %v502 = vor.u32 %v498, %v501
        %v503 = vrot.slane %v502, 4
        %v505 = vshll.u32 %v253, 16
        %v507 = vrot.slane %v505, 5
        %v508 = vsel %vm302, %v503, %v507
        %v509 = vshrl.u32 %v253, 16
        %v511 = vrot.slane %v509, 4
        %v512 = vor.u32 %v511, %v507
        %v513 = vrot.slane %v512, 4
        %v515 = vshll.u32 %v292, 16
        %v517 = vrot.slane %v515, 5
        %v518 = vsel %vm302, %v513, %v517
        %v520 = vshrl.u32 %v254, 16
        %v522 = vrot.slane %v520, 4
        %v523 = vshll.u32 %v254, 16
        %v525 = vrot.slane %v523, 5
        %v526 = vor.u32 %v522, %v525
        %v527 = vrot.slane %v526, 4
        %v529 = vshll.u32 %v255, 16
        %v531 = vrot.slane %v529, 5
        %v532 = vsel %vm302, %v527, %v531
        %v533 = vshrl.u32 %v255, 16
        %v535 = vrot.slane %v533, 4
        %v536 = vor.u32 %v535, %v531
        %v537 = vrot.slane %v536, 4
        %v539 = vshll.u32 %v293, 16
        %v541 = vrot.slane %v539, 5
        %v542 = vsel %vm302, %v537, %v541
        %v544 = vshrl.u32 %v256, 16
        %v546 = vrot.slane %v544, 4
        %v547 = vshll.u32 %v256, 16
        %v549 = vrot.slane %v547, 5
        %v550 = vor.u32 %v546, %v549
        %v551 = vrot.slane %v550, 4
        %v553 = vshll.u32 %v257, 16
        %v555 = vrot.slane %v553, 5
        %v556 = vsel %vm302, %v551, %v555
        %v557 = vshrl.u32 %v257, 16
        %v559 = vrot.slane %v557, 4
        %v560 = vor.u32 %v559, %v555
        %v561 = vrot.slane %v560, 4
        %v563 = vshll.u32 %v294, 16
        %v565 = vrot.slane %v563, 5
        %v566 = vsel %vm302, %v561, %v565
        %v568 = vshrl.u32 %v258, 16
        %v570 = vrot.slane %v568, 4
        %v571 = vshll.u32 %v258, 16
        %v573 = vrot.slane %v571, 5
        %v574 = vor.u32 %v570, %v573
        %v575 = vrot.slane %v574, 4
        %v577 = vshll.u32 %v259, 16
        %v579 = vrot.slane %v577, 5
        %v580 = vsel %vm302, %v575, %v579
        %v581 = vshrl.u32 %v259, 16
        %v583 = vrot.slane %v581, 4
        %v584 = vor.u32 %v583, %v579
        %v585 = vrot.slane %v584, 4
        %v587 = vshll.u32 %v295, 16
        %v589 = vrot.slane %v587, 5
        %v590 = vsel %vm302, %v585, %v589
        %v592 = vshrl.u32 %v260, 16
        %v594 = vrot.slane %v592, 4
        %v595 = vshll.u32 %v260, 16
        %v597 = vrot.slane %v595, 5
        %v598 = vor.u32 %v594, %v597
        %v599 = vrot.slane %v598, 4
        %v601 = vshll.u32 %v261, 16
        %v603 = vrot.slane %v601, 5
        %v604 = vsel %vm302, %v599, %v603
        %v605 = vshrl.u32 %v261, 16
        %v607 = vrot.slane %v605, 4
        %v608 = vor.u32 %v607, %v603
        %v609 = vrot.slane %v608, 4
        %v611 = vshll.u32 %v296, 16
        %v613 = vrot.slane %v611, 5
        %v614 = vsel %vm302, %v609, %v613
        %v616 = vshrl.u32 %v262, 16
        %v618 = vrot.slane %v616, 4
        %v619 = vshll.u32 %v262, 16
        %v621 = vrot.slane %v619, 5
        %v622 = vor.u32 %v618, %v621
        %v623 = vrot.slane %v622, 4
        %v625 = vshll.u32 %v263, 16
        %v627 = vrot.slane %v625, 5
        %v628 = vsel %vm302, %v623, %v627
        %v629 = vshrl.u32 %v263, 16
        %v631 = vrot.slane %v629, 4
        %v632 = vor.u32 %v631, %v627
        %v633 = vrot.slane %v632, 4
        %v635 = vshll.u32 %v297, 16
        %v637 = vrot.slane %v635, 5
        %v638 = vsel %vm302, %v633, %v637
        %v640 = vshrl.u32 %v264, 16
        %v642 = vrot.slane %v640, 4
        %v643 = vshll.u32 %v264, 16
        %v645 = vrot.slane %v643, 5
        %v646 = vor.u32 %v642, %v645
        %v647 = vrot.slane %v646, 4
        %v649 = vshll.u32 %v265, 16
        %v651 = vrot.slane %v649, 5
        %v652 = vsel %vm302, %v647, %v651
        %v653 = vshrl.u32 %v265, 16
        %v655 = vrot.slane %v653, 4
        %v656 = vor.u32 %v655, %v651
        %v657 = vrot.slane %v656, 4
        %v659 = vshll.u32 %v298, 16
        %v661 = vrot.slane %v659, 5
        %v662 = vsel %vm302, %v657, %v661
        %v664 = vshrl.u32 %v266, 16
        %v666 = vrot.slane %v664, 4
        %v667 = vshll.u32 %v266, 16
        %v669 = vrot.slane %v667, 5
        %v670 = vor.u32 %v666, %v669
        %v671 = vrot.slane %v670, 4
        %v673 = vshll.u32 %v267, 16
        %v675 = vrot.slane %v673, 5
        %v676 = vsel %vm302, %v671, %v675
        %v677 = vshrl.u32 %v267, 16
        %v679 = vrot.slane %v677, 4
        %v680 = vor.u32 %v679, %v675
        %v681 = vrot.slane %v680, 4
        %v683 = vshll.u32 %v299, 16
        %v685 = vrot.slane %v683, 5
        %v686 = vsel %vm302, %v681, %v685
        %s687 = scalar_lea.vmem [#allocation2], 64
        %v688 = vld [vmem:[%s687] sm:$0xf]
        %v689 = vld [vmem:[%s687 + $0x4] sm:$0xf]
        %v690 = vld [vmem:[%s687 + $0x8] sm:$0xf]
        %v691 = vld [vmem:[%s687 + $0xc] sm:$0xf]
        %v692 = vld [vmem:[%s687 + $0x10] sm:$0xf]
        %v693 = vld [vmem:[%s687 + $0x14] sm:$0xf]
        %v694 = vld [vmem:[%s687 + $0x18] sm:$0xf]
        %v695 = vld [vmem:[%s687 + $0x1c] sm:$0xf]
        %v696 = vld [vmem:[%s687 + $0x20] sm:$0xf]
        %v697 = vld [vmem:[%s687 + $0x24] sm:$0xf]
        %v698 = vld [vmem:[%s687 + $0x28] sm:$0xf]
        %v699 = vld [vmem:[%s687 + $0x2c] sm:$0xf]
        %v700 = vld [vmem:[%s687 + $0x30] sm:$0xf]
        %v701 = vld [vmem:[%s687 + $0x34] sm:$0xf]
        %v702 = vld [vmem:[%s687 + $0x38] sm:$0xf]
        %v703 = vld [vmem:[%s687 + $0x3c] sm:$0xf]
        %v704 = vunpack.c.l.b16 %v316
        %v705 = vunpack.c.l.b16 %v326
        %v706 = vunpack.c.l.b16 %v340
        %v707 = vunpack.c.l.b16 %v350
        %v708 = vunpack.c.l.b16 %v364
        %v709 = vunpack.c.l.b16 %v374
        %v710 = vunpack.c.l.b16 %v388
        %v711 = vunpack.c.l.b16 %v398
        %v712 = vunpack.c.l.b16 %v412
        %v713 = vunpack.c.l.b16 %v422
        %v714 = vunpack.c.l.b16 %v436
        %v715 = vunpack.c.l.b16 %v446
        %v716 = vunpack.c.l.b16 %v460
        %v717 = vunpack.c.l.b16 %v470
        %v718 = vunpack.c.l.b16 %v484
        %v719 = vunpack.c.l.b16 %v494
        %v720 = vunpack.c.l.b16 %v508
        %v721 = vunpack.c.l.b16 %v518
        %v722 = vunpack.c.l.b16 %v532
        %v723 = vunpack.c.l.b16 %v542
        %v724 = vunpack.c.l.b16 %v556
        %v725 = vunpack.c.l.b16 %v566
        %v726 = vunpack.c.l.b16 %v580
        %v727 = vunpack.c.l.b16 %v590
        %v728 = vunpack.c.l.b16 %v604
        %v729 = vunpack.c.l.b16 %v614
        %v730 = vunpack.c.l.b16 %v628
        %v731 = vunpack.c.l.b16 %v638
        %v732 = vunpack.c.l.b16 %v652
        %v733 = vunpack.c.l.b16 %v662
        %v734 = vunpack.c.l.b16 %v676
        %v735 = vunpack.c.l.b16 %v686
        %v736 = vpack.c.b16 %v705, %v704
        %v737 = vpack.c.b16 %v707, %v706
        %v738 = vpack.c.b16 %v709, %v708
        %v739 = vpack.c.b16 %v711, %v710
        %v740 = vpack.c.b16 %v713, %v712
        %v741 = vpack.c.b16 %v715, %v714
        %v742 = vpack.c.b16 %v717, %v716
        %v743 = vpack.c.b16 %v719, %v718
        %v744 = vpack.c.b16 %v721, %v720
        %v745 = vpack.c.b16 %v723, %v722
        %v746 = vpack.c.b16 %v725, %v724
        %v747 = vpack.c.b16 %v727, %v726
        %v748 = vpack.c.b16 %v729, %v728
        %v749 = vpack.c.b16 %v731, %v730
        %v750 = vpack.c.b16 %v733, %v732
        %v751 = vpack.c.b16 %v735, %v734
        %v784 = vunpack.c.l.b16 %v688
        %v785 = vunpack.c.l.b16 %v689
        %v786 = vunpack.c.l.b16 %v690
        %v787 = vunpack.c.l.b16 %v691
        %v788 = vunpack.c.l.b16 %v692
        %v789 = vunpack.c.l.b16 %v693
        %v790 = vunpack.c.l.b16 %v694
        %v791 = vunpack.c.l.b16 %v695
        %v792 = vunpack.c.l.b16 %v696
        %v793 = vunpack.c.l.b16 %v697
        %v794 = vunpack.c.l.b16 %v698
        %v795 = vunpack.c.l.b16 %v699
        %v796 = vunpack.c.l.b16 %v700
        %v797 = vunpack.c.l.b16 %v701
        %v798 = vunpack.c.l.b16 %v702
        %v799 = vunpack.c.l.b16 %v703
        %v800 = vpack.c.b16 %v785, %v784
        %v801 = vpack.c.b16 %v787, %v786
        %v802 = vpack.c.b16 %v789, %v788
        %v803 = vpack.c.b16 %v791, %v790
        %v804 = vpack.c.b16 %v793, %v792
        %v805 = vpack.c.b16 %v795, %v794
        %v806 = vpack.c.b16 %v797, %v796
        %v807 = vpack.c.b16 %v799, %v798
        %816 = vmatpush.bf16.msra.mxu0 %v807
        %817 = vmatpush.bf16.msra.mxu0 %v806
        %818 = vmatpush.bf16.msra.mxu0 %v805
        %819 = vmatpush.bf16.msra.mxu0 %v804
        %820 = vmatpush.bf16.msra.mxu0 %v803
        %821 = vmatpush.bf16.msra.mxu0 %v802
        %822 = vmatpush.bf16.msra.mxu0 %v801
        %823 = vmatpush.bf16.msra.mxu0 %v800
        %824 = vmatmul.bf16.gmra.mxu0 %v736
        %v825 = vpop.f32.mrf.mxu0
        %v826 = vadd.f32 0.0, %v825
        %v827 = vpop.f32.mrf.mxu0
        %v828 = vadd.f32 0.0, %v827
        %829 = vmatmul.bf16.gmra.mxu0 %v737
        %v830 = vpop.f32.mrf.mxu0
        %v831 = vadd.f32 0.0, %v830
        %v832 = vpop.f32.mrf.mxu0
        %v833 = vadd.f32 0.0, %v832
        %834 = vmatmul.bf16.gmra.mxu0 %v738
        %v835 = vpop.f32.mrf.mxu0
        %v836 = vadd.f32 0.0, %v835
        %v837 = vpop.f32.mrf.mxu0
        %v838 = vadd.f32 0.0, %v837
        %839 = vmatmul.bf16.gmra.mxu0 %v739
        %v840 = vpop.f32.mrf.mxu0
        %v841 = vadd.f32 0.0, %v840
        %v842 = vpop.f32.mrf.mxu0
        %v843 = vadd.f32 0.0, %v842
        %844 = vmatmul.bf16.gmra.mxu0 %v740
        %v845 = vpop.f32.mrf.mxu0
        %v846 = vadd.f32 0.0, %v845
        %v847 = vpop.f32.mrf.mxu0
        %v848 = vadd.f32 0.0, %v847
        %849 = vmatmul.bf16.gmra.mxu0 %v741
        %v850 = vpop.f32.mrf.mxu0
        %v851 = vadd.f32 0.0, %v850
        %v852 = vpop.f32.mrf.mxu0
        %v853 = vadd.f32 0.0, %v852
        %854 = vmatmul.bf16.gmra.mxu0 %v742
        %v855 = vpop.f32.mrf.mxu0
        %v856 = vadd.f32 0.0, %v855
        %v857 = vpop.f32.mrf.mxu0
        %v858 = vadd.f32 0.0, %v857
        %859 = vmatmul.bf16.gmra.mxu0 %v743
        %v860 = vpop.f32.mrf.mxu0
        %v861 = vadd.f32 0.0, %v860
        %v862 = vpop.f32.mrf.mxu0
        %v863 = vadd.f32 0.0, %v862
        %864 = vmatmul.bf16.gmra.mxu0 %v744
        %v865 = vpop.f32.mrf.mxu0
        %v866 = vadd.f32 0.0, %v865
        %v867 = vpop.f32.mrf.mxu0
        %v868 = vadd.f32 0.0, %v867
        %869 = vmatmul.bf16.gmra.mxu0 %v745
        %v870 = vpop.f32.mrf.mxu0
        %v871 = vadd.f32 0.0, %v870
        %v872 = vpop.f32.mrf.mxu0
        %v873 = vadd.f32 0.0, %v872
        %874 = vmatmul.bf16.gmra.mxu0 %v746
        %v875 = vpop.f32.mrf.mxu0
        %v876 = vadd.f32 0.0, %v875
        %v877 = vpop.f32.mrf.mxu0
        %v878 = vadd.f32 0.0, %v877
        %879 = vmatmul.bf16.gmra.mxu0 %v747
        %v880 = vpop.f32.mrf.mxu0
        %v881 = vadd.f32 0.0, %v880
        %v882 = vpop.f32.mrf.mxu0
        %v883 = vadd.f32 0.0, %v882
        %884 = vmatmul.bf16.gmra.mxu0 %v748
        %v885 = vpop.f32.mrf.mxu0
        %v886 = vadd.f32 0.0, %v885
        %v887 = vpop.f32.mrf.mxu0
        %v888 = vadd.f32 0.0, %v887
        %889 = vmatmul.bf16.gmra.mxu0 %v749
        %v890 = vpop.f32.mrf.mxu0
        %v891 = vadd.f32 0.0, %v890
        %v892 = vpop.f32.mrf.mxu0
        %v893 = vadd.f32 0.0, %v892
        %894 = vmatmul.bf16.gmra.mxu0 %v750
        %v895 = vpop.f32.mrf.mxu0
        %v896 = vadd.f32 0.0, %v895
        %v897 = vpop.f32.mrf.mxu0
        %v898 = vadd.f32 0.0, %v897
        %899 = vmatmul.bf16.gmra.mxu0 %v751
        %v900 = vpop.f32.mrf.mxu0
        %v901 = vadd.f32 0.0, %v900
        %v902 = vpop.f32.mrf.mxu0
        %v903 = vadd.f32 0.0, %v902
        %904 = vdwg.mxu0
        %v937 = vunpack.c.l.b16 %v236
        %v938 = vunpack.c.l.b16 %v237
        %v939 = vunpack.c.l.b16 %v238
        %v940 = vunpack.c.l.b16 %v239
        %v941 = vunpack.c.l.b16 %v240
        %v942 = vunpack.c.l.b16 %v241
        %v943 = vunpack.c.l.b16 %v242
        %v944 = vunpack.c.l.b16 %v243
        %v945 = vunpack.c.l.b16 %v244
        %v946 = vunpack.c.l.b16 %v245
        %v947 = vunpack.c.l.b16 %v246
        %v948 = vunpack.c.l.b16 %v247
        %v949 = vunpack.c.l.b16 %v248
        %v950 = vunpack.c.l.b16 %v249
        %v951 = vunpack.c.l.b16 %v250
        %v952 = vunpack.c.l.b16 %v251
        %v953 = vunpack.c.l.b16 %v252
        %v954 = vunpack.c.l.b16 %v253
        %v955 = vunpack.c.l.b16 %v254
        %v956 = vunpack.c.l.b16 %v255
        %v957 = vunpack.c.l.b16 %v256
        %v958 = vunpack.c.l.b16 %v257
        %v959 = vunpack.c.l.b16 %v258
        %v960 = vunpack.c.l.b16 %v259
        %v961 = vunpack.c.l.b16 %v260
        %v962 = vunpack.c.l.b16 %v261
        %v963 = vunpack.c.l.b16 %v262
        %v964 = vunpack.c.l.b16 %v263
        %v965 = vunpack.c.l.b16 %v264
        %v966 = vunpack.c.l.b16 %v265
        %v967 = vunpack.c.l.b16 %v266
        %v968 = vunpack.c.l.b16 %v267
        %v969 = vpack.c.b16 %v938, %v937
        %v970 = vpack.c.b16 %v940, %v939
        %v971 = vpack.c.b16 %v942, %v941
        %v972 = vpack.c.b16 %v944, %v943
        %v973 = vpack.c.b16 %v946, %v945
        %v974 = vpack.c.b16 %v948, %v947
        %v975 = vpack.c.b16 %v950, %v949
        %v976 = vpack.c.b16 %v952, %v951
        %v977 = vpack.c.b16 %v954, %v953
        %v978 = vpack.c.b16 %v956, %v955
        %v979 = vpack.c.b16 %v958, %v957
        %v980 = vpack.c.b16 %v960, %v959
        %v981 = vpack.c.b16 %v962, %v961
        %v982 = vpack.c.b16 %v964, %v963
        %v983 = vpack.c.b16 %v966, %v965
        %v984 = vpack.c.b16 %v968, %v967
        %v1017 = vunpack.c.l.b16 %v268
        %v1018 = vunpack.c.l.b16 %v269
        %v1019 = vunpack.c.l.b16 %v270
        %v1020 = vunpack.c.l.b16 %v271
        %v1021 = vunpack.c.l.b16 %v272
        %v1022 = vunpack.c.l.b16 %v273
        %v1023 = vunpack.c.l.b16 %v274
        %v1024 = vunpack.c.l.b16 %v275
        %v1025 = vunpack.c.l.b16 %v276
        %v1026 = vunpack.c.l.b16 %v277
        %v1027 = vunpack.c.l.b16 %v278
        %v1028 = vunpack.c.l.b16 %v279
        %v1029 = vunpack.c.l.b16 %v280
        %v1030 = vunpack.c.l.b16 %v281
        %v1031 = vunpack.c.l.b16 %v282
        %v1032 = vunpack.c.l.b16 %v283
        %v1033 = vpack.c.b16 %v1018, %v1017
        %v1034 = vpack.c.b16 %v1020, %v1019
        %v1035 = vpack.c.b16 %v1022, %v1021
        %v1036 = vpack.c.b16 %v1024, %v1023
        %v1037 = vpack.c.b16 %v1026, %v1025
        %v1038 = vpack.c.b16 %v1028, %v1027
        %v1039 = vpack.c.b16 %v1030, %v1029
        %v1040 = vpack.c.b16 %v1032, %v1031
        %1049 = vmatpush.bf16.msra.mxu0 %v1040
        %1050 = vmatpush.bf16.msra.mxu0 %v1039
        %1051 = vmatpush.bf16.msra.mxu0 %v1038
        %1052 = vmatpush.bf16.msra.mxu0 %v1037
        %1053 = vmatpush.bf16.msra.mxu0 %v1036
        %1054 = vmatpush.bf16.msra.mxu0 %v1035
        %1055 = vmatpush.bf16.msra.mxu0 %v1034
        %1056 = vmatpush.bf16.msra.mxu0 %v1033
        %1057 = vmatmul.bf16.gmra.mxu0 %v969
        %v1058 = vpop.f32.mrf.mxu0
        %v1059 = vadd.f32 %v826, %v1058
        %v1060 = vpop.f32.mrf.mxu0
        %v1061 = vadd.f32 %v828, %v1060
        %1062 = vmatmul.bf16.gmra.mxu0 %v970
        %v1063 = vpop.f32.mrf.mxu0
        %v1064 = vadd.f32 %v831, %v1063
        %v1065 = vpop.f32.mrf.mxu0
        %v1066 = vadd.f32 %v833, %v1065
        %1067 = vmatmul.bf16.gmra.mxu0 %v971
        %v1068 = vpop.f32.mrf.mxu0
        %v1069 = vadd.f32 %v836, %v1068
        %v1070 = vpop.f32.mrf.mxu0
        %v1071 = vadd.f32 %v838, %v1070
        %1072 = vmatmul.bf16.gmra.mxu0 %v972
        %v1073 = vpop.f32.mrf.mxu0
        %v1074 = vadd.f32 %v841, %v1073
        %v1075 = vpop.f32.mrf.mxu0
        %v1076 = vadd.f32 %v843, %v1075
        %1077 = vmatmul.bf16.gmra.mxu0 %v973
        %v1078 = vpop.f32.mrf.mxu0
        %v1079 = vadd.f32 %v846, %v1078
        %v1080 = vpop.f32.mrf.mxu0
        %v1081 = vadd.f32 %v848, %v1080
        %1082 = vmatmul.bf16.gmra.mxu0 %v974
        %v1083 = vpop.f32.mrf.mxu0
        %v1084 = vadd.f32 %v851, %v1083
        %v1085 = vpop.f32.mrf.mxu0
        %v1086 = vadd.f32 %v853, %v1085
        %1087 = vmatmul.bf16.gmra.mxu0 %v975
        %v1088 = vpop.f32.mrf.mxu0
        %v1089 = vadd.f32 %v856, %v1088
        %v1090 = vpop.f32.mrf.mxu0
        %v1091 = vadd.f32 %v858, %v1090
        %1092 = vmatmul.bf16.gmra.mxu0 %v976
        %v1093 = vpop.f32.mrf.mxu0
        %v1094 = vadd.f32 %v861, %v1093
        %v1095 = vpop.f32.mrf.mxu0
        %v1096 = vadd.f32 %v863, %v1095
        %1097 = vmatmul.bf16.gmra.mxu0 %v977
        %v1098 = vpop.f32.mrf.mxu0
        %v1099 = vadd.f32 %v866, %v1098
        %v1100 = vpop.f32.mrf.mxu0
        %v1101 = vadd.f32 %v868, %v1100
        %1102 = vmatmul.bf16.gmra.mxu0 %v978
        %v1103 = vpop.f32.mrf.mxu0
        %v1104 = vadd.f32 %v871, %v1103
        %v1105 = vpop.f32.mrf.mxu0
        %v1106 = vadd.f32 %v873, %v1105
        %1107 = vmatmul.bf16.gmra.mxu0 %v979
        %v1108 = vpop.f32.mrf.mxu0
        %v1109 = vadd.f32 %v876, %v1108
        %v1110 = vpop.f32.mrf.mxu0
        %v1111 = vadd.f32 %v878, %v1110
        %1112 = vmatmul.bf16.gmra.mxu0 %v980
        %v1113 = vpop.f32.mrf.mxu0
        %v1114 = vadd.f32 %v881, %v1113
        %v1115 = vpop.f32.mrf.mxu0
        %v1116 = vadd.f32 %v883, %v1115
        %1117 = vmatmul.bf16.gmra.mxu0 %v981
        %v1118 = vpop.f32.mrf.mxu0
        %v1119 = vadd.f32 %v886, %v1118
        %v1120 = vpop.f32.mrf.mxu0
        %v1121 = vadd.f32 %v888, %v1120
        %1122 = vmatmul.bf16.gmra.mxu0 %v982
        %v1123 = vpop.f32.mrf.mxu0
        %v1124 = vadd.f32 %v891, %v1123
        %v1125 = vpop.f32.mrf.mxu0
        %v1126 = vadd.f32 %v893, %v1125
        %1127 = vmatmul.bf16.gmra.mxu0 %v983
        %v1128 = vpop.f32.mrf.mxu0
        %v1129 = vadd.f32 %v896, %v1128
        %v1130 = vpop.f32.mrf.mxu0
        %v1131 = vadd.f32 %v898, %v1130
        %1132 = vmatmul.bf16.gmra.mxu0 %v984
        %v1133 = vpop.f32.mrf.mxu0
        %v1134 = vadd.f32 %v901, %v1133
        %v1135 = vpop.f32.mrf.mxu0
        %v1136 = vadd.f32 %v903, %v1135
        %1137 = vdwg.mxu0
        %v1138 = vld [vmem:[%s227] sm:$0xe]
        %v1139 = vld [vmem:[%s227 + $0xc] sm:$0xe]
        %v1140 = vld [vmem:[%s227 + $0x18] sm:$0xe]
        %v1141 = vld [vmem:[%s227 + $0x24] sm:$0xe]
        %v1142 = vld [vmem:[%s227 + $0x30] sm:$0xe]
        %v1143 = vld [vmem:[%s227 + $0x3c] sm:$0xe]
        %v1144 = vld [vmem:[%s227 + $0x48] sm:$0xe]
        %v1145 = vld [vmem:[%s227 + $0x54] sm:$0xe]
        %v1146 = vld [vmem:[%s227 + $0x60] sm:$0xe]
        %v1147 = vld [vmem:[%s227 + $0x6c] sm:$0xe]
        %v1148 = vld [vmem:[%s227 + $0x78] sm:$0xe]
        %v1149 = vld [vmem:[%s227 + $0x84] sm:$0xe]
        %v1150 = vld [vmem:[%s227 + $0x90] sm:$0xe]
        %v1151 = vld [vmem:[%s227 + $0x9c] sm:$0xe]
        %v1152 = vld [vmem:[%s227 + $0xa8] sm:$0xe]
        %v1153 = vld [vmem:[%s227 + $0xb4] sm:$0xe]
        %vm1186 = vcmask 1042432
        %vm1187 = vcmask 1046532
        %vm1188 = vmor %vm1186, %vm1187
        %v1189 = vrot.slane %v1138, 5
        %v1190 = vrot.slane %v1189, 4
        %v1191 = vrot.slane %v237, 5
        %v1192 = vsel %vm1188, %v1190, %v1191
        %v1193 = vrot.slane %v1191, 4
        %v1194 = vrot.slane %v284, 5
        %v1195 = vsel %vm1188, %v1193, %v1194
        %v1196 = vrot.slane %v1139, 5
        %v1197 = vrot.slane %v1196, 4
        %v1198 = vrot.slane %v239, 5
        %v1199 = vsel %vm1188, %v1197, %v1198
        %v1200 = vrot.slane %v1198, 4
        %v1201 = vrot.slane %v285, 5
        %v1202 = vsel %vm1188, %v1200, %v1201
        %v1203 = vrot.slane %v1140, 5
        %v1204 = vrot.slane %v1203, 4
        %v1205 = vrot.slane %v241, 5
        %v1206 = vsel %vm1188, %v1204, %v1205
        %v1207 = vrot.slane %v1205, 4
        %v1208 = vrot.slane %v286, 5
        %v1209 = vsel %vm1188, %v1207, %v1208
        %v1210 = vrot.slane %v1141, 5
        %v1211 = vrot.slane %v1210, 4
        %v1212 = vrot.slane %v243, 5
        %v1213 = vsel %vm1188, %v1211, %v1212
        %v1214 = vrot.slane %v1212, 4
        %v1215 = vrot.slane %v287, 5
        %v1216 = vsel %vm1188, %v1214, %v1215
        %v1217 = vrot.slane %v1142, 5
        %v1218 = vrot.slane %v1217, 4
        %v1219 = vrot.slane %v245, 5
        %v1220 = vsel %vm1188, %v1218, %v1219
        %v1221 = vrot.slane %v1219, 4
        %v1222 = vrot.slane %v288, 5
        %v1223 = vsel %vm1188, %v1221, %v1222
        %v1224 = vrot.slane %v1143, 5
        %v1225 = vrot.slane %v1224, 4
        %v1226 = vrot.slane %v247, 5
        %v1227 = vsel %vm1188, %v1225, %v1226
        %v1228 = vrot.slane %v1226, 4
        %v1229 = vrot.slane %v289, 5
        %v1230 = vsel %vm1188, %v1228, %v1229
        %v1231 = vrot.slane %v1144, 5
        %v1232 = vrot.slane %v1231, 4
        %v1233 = vrot.slane %v249, 5
        %v1234 = vsel %vm1188, %v1232, %v1233
        %v1235 = vrot.slane %v1233, 4
        %v1236 = vrot.slane %v290, 5
        %v1237 = vsel %vm1188, %v1235, %v1236
        %v1238 = vrot.slane %v1145, 5
        %v1239 = vrot.slane %v1238, 4
        %v1240 = vrot.slane %v251, 5
        %v1241 = vsel %vm1188, %v1239, %v1240
        %v1242 = vrot.slane %v1240, 4
        %v1243 = vrot.slane %v291, 5
        %v1244 = vsel %vm1188, %v1242, %v1243
        %v1245 = vrot.slane %v1146, 5
        %v1246 = vrot.slane %v1245, 4
        %v1247 = vrot.slane %v253, 5
        %v1248 = vsel %vm1188, %v1246, %v1247
        %v1249 = vrot.slane %v1247, 4
        %v1250 = vrot.slane %v292, 5
        %v1251 = vsel %vm1188, %v1249, %v1250
        %v1252 = vrot.slane %v1147, 5
        %v1253 = vrot.slane %v1252, 4
        %v1254 = vrot.slane %v255, 5
        %v1255 = vsel %vm1188, %v1253, %v1254
        %v1256 = vrot.slane %v1254, 4
        %v1257 = vrot.slane %v293, 5
        %v1258 = vsel %vm1188, %v1256, %v1257
        %v1259 = vrot.slane %v1148, 5
        %v1260 = vrot.slane %v1259, 4
        %v1261 = vrot.slane %v257, 5
        %v1262 = vsel %vm1188, %v1260, %v1261
        %v1263 = vrot.slane %v1261, 4
        %v1264 = vrot.slane %v294, 5
        %v1265 = vsel %vm1188, %v1263, %v1264
        %v1266 = vrot.slane %v1149, 5
        %v1267 = vrot.slane %v1266, 4
        %v1268 = vrot.slane %v259, 5
        %v1269 = vsel %vm1188, %v1267, %v1268
        %v1270 = vrot.slane %v1268, 4
        %v1271 = vrot.slane %v295, 5
        %v1272 = vsel %vm1188, %v1270, %v1271
        %v1273 = vrot.slane %v1150, 5
        %v1274 = vrot.slane %v1273, 4
        %v1275 = vrot.slane %v261, 5
        %v1276 = vsel %vm1188, %v1274, %v1275
        %v1277 = vrot.slane %v1275, 4
        %v1278 = vrot.slane %v296, 5
        %v1279 = vsel %vm1188, %v1277, %v1278
        %v1280 = vrot.slane %v1151, 5
        %v1281 = vrot.slane %v1280, 4
        %v1282 = vrot.slane %v263, 5
        %v1283 = vsel %vm1188, %v1281, %v1282
        %v1284 = vrot.slane %v1282, 4
        %v1285 = vrot.slane %v297, 5
        %v1286 = vsel %vm1188, %v1284, %v1285
        %v1287 = vrot.slane %v1152, 5
        %v1288 = vrot.slane %v1287, 4
        %v1289 = vrot.slane %v265, 5
        %v1290 = vsel %vm1188, %v1288, %v1289
        %v1291 = vrot.slane %v1289, 4
        %v1292 = vrot.slane %v298, 5
        %v1293 = vsel %vm1188, %v1291, %v1292
        %v1294 = vrot.slane %v1153, 5
        %v1295 = vrot.slane %v1294, 4
        %v1296 = vrot.slane %v267, 5
        %v1297 = vsel %vm1188, %v1295, %v1296
        %v1298 = vrot.slane %v1296, 4
        %v1299 = vrot.slane %v299, 5
        %v1300 = vsel %vm1188, %v1298, %v1299
        %s1301 = scalar_lea.vmem [#allocation2], 128
        %v1302 = vld [vmem:[%s1301] sm:$0xf]
        %v1303 = vld [vmem:[%s1301 + $0x4] sm:$0xf]
        %v1304 = vld [vmem:[%s1301 + $0x8] sm:$0xf]
        %v1305 = vld [vmem:[%s1301 + $0xc] sm:$0xf]
        %v1306 = vld [vmem:[%s1301 + $0x10] sm:$0xf]
        %v1307 = vld [vmem:[%s1301 + $0x14] sm:$0xf]
        %v1308 = vld [vmem:[%s1301 + $0x18] sm:$0xf]
        %v1309 = vld [vmem:[%s1301 + $0x1c] sm:$0xf]
        %v1310 = vld [vmem:[%s1301 + $0x20] sm:$0xf]
        %v1311 = vld [vmem:[%s1301 + $0x24] sm:$0xf]
        %v1312 = vld [vmem:[%s1301 + $0x28] sm:$0xf]
        %v1313 = vld [vmem:[%s1301 + $0x2c] sm:$0xf]
        %v1314 = vld [vmem:[%s1301 + $0x30] sm:$0xf]
        %v1315 = vld [vmem:[%s1301 + $0x34] sm:$0xf]
        %v1316 = vld [vmem:[%s1301 + $0x38] sm:$0xf]
        %v1317 = vld [vmem:[%s1301 + $0x3c] sm:$0xf]
        %v1318 = vunpack.c.l.b16 %v1192
        %v1319 = vunpack.c.l.b16 %v1195
        %v1320 = vunpack.c.l.b16 %v1199
        %v1321 = vunpack.c.l.b16 %v1202
        %v1322 = vunpack.c.l.b16 %v1206
        %v1323 = vunpack.c.l.b16 %v1209
        %v1324 = vunpack.c.l.b16 %v1213
        %v1325 = vunpack.c.l.b16 %v1216
        %v1326 = vunpack.c.l.b16 %v1220
        %v1327 = vunpack.c.l.b16 %v1223
        %v1328 = vunpack.c.l.b16 %v1227
        %v1329 = vunpack.c.l.b16 %v1230
        %v1330 = vunpack.c.l.b16 %v1234
        %v1331 = vunpack.c.l.b16 %v1237
        %v1332 = vunpack.c.l.b16 %v1241
        %v1333 = vunpack.c.l.b16 %v1244
        %v1334 = vunpack.c.l.b16 %v1248
        %v1335 = vunpack.c.l.b16 %v1251
        %v1336 = vunpack.c.l.b16 %v1255
        %v1337 = vunpack.c.l.b16 %v1258
        %v1338 = vunpack.c.l.b16 %v1262
        %v1339 = vunpack.c.l.b16 %v1265
        %v1340 = vunpack.c.l.b16 %v1269
        %v1341 = vunpack.c.l.b16 %v1272
        %v1342 = vunpack.c.l.b16 %v1276
        %v1343 = vunpack.c.l.b16 %v1279
        %v1344 = vunpack.c.l.b16 %v1283
        %v1345 = vunpack.c.l.b16 %v1286
        %v1346 = vunpack.c.l.b16 %v1290
        %v1347 = vunpack.c.l.b16 %v1293
        %v1348 = vunpack.c.l.b16 %v1297
        %v1349 = vunpack.c.l.b16 %v1300
        %v1350 = vpack.c.b16 %v1319, %v1318
        %v1351 = vpack.c.b16 %v1321, %v1320
        %v1352 = vpack.c.b16 %v1323, %v1322
        %v1353 = vpack.c.b16 %v1325, %v1324
        %v1354 = vpack.c.b16 %v1327, %v1326
        %v1355 = vpack.c.b16 %v1329, %v1328
        %v1356 = vpack.c.b16 %v1331, %v1330
        %v1357 = vpack.c.b16 %v1333, %v1332
        %v1358 = vpack.c.b16 %v1335, %v1334
        %v1359 = vpack.c.b16 %v1337, %v1336
        %v1360 = vpack.c.b16 %v1339, %v1338
        %v1361 = vpack.c.b16 %v1341, %v1340
        %v1362 = vpack.c.b16 %v1343, %v1342
        %v1363 = vpack.c.b16 %v1345, %v1344
        %v1364 = vpack.c.b16 %v1347, %v1346
        %v1365 = vpack.c.b16 %v1349, %v1348
        %v1398 = vunpack.c.l.b16 %v1302
        %v1399 = vunpack.c.l.b16 %v1303
        %v1400 = vunpack.c.l.b16 %v1304
        %v1401 = vunpack.c.l.b16 %v1305
        %v1402 = vunpack.c.l.b16 %v1306
        %v1403 = vunpack.c.l.b16 %v1307
        %v1404 = vunpack.c.l.b16 %v1308
        %v1405 = vunpack.c.l.b16 %v1309
        %v1406 = vunpack.c.l.b16 %v1310
        %v1407 = vunpack.c.l.b16 %v1311
        %v1408 = vunpack.c.l.b16 %v1312
        %v1409 = vunpack.c.l.b16 %v1313
        %v1410 = vunpack.c.l.b16 %v1314
        %v1411 = vunpack.c.l.b16 %v1315
        %v1412 = vunpack.c.l.b16 %v1316
        %v1413 = vunpack.c.l.b16 %v1317
        %v1414 = vpack.c.b16 %v1399, %v1398
        %v1415 = vpack.c.b16 %v1401, %v1400
        %v1416 = vpack.c.b16 %v1403, %v1402
        %v1417 = vpack.c.b16 %v1405, %v1404
        %v1418 = vpack.c.b16 %v1407, %v1406
        %v1419 = vpack.c.b16 %v1409, %v1408
        %v1420 = vpack.c.b16 %v1411, %v1410
        %v1421 = vpack.c.b16 %v1413, %v1412
        %1430 = vmatpush.bf16.msra.mxu0 %v1421
        %1431 = vmatpush.bf16.msra.mxu0 %v1420
        %1432 = vmatpush.bf16.msra.mxu0 %v1419
        %1433 = vmatpush.bf16.msra.mxu0 %v1418
        %1434 = vmatpush.bf16.msra.mxu0 %v1417
        %1435 = vmatpush.bf16.msra.mxu0 %v1416
        %1436 = vmatpush.bf16.msra.mxu0 %v1415
        %1437 = vmatpush.bf16.msra.mxu0 %v1414
        %1438 = vmatmul.bf16.gmra.mxu0 %v1350
        %v1439 = vpop.f32.mrf.mxu0
        %v1440 = vadd.f32 0.0, %v1439
        %v1441 = vpop.f32.mrf.mxu0
        %v1442 = vadd.f32 0.0, %v1441
        %1443 = vmatmul.bf16.gmra.mxu0 %v1351
        %v1444 = vpop.f32.mrf.mxu0
        %v1445 = vadd.f32 0.0, %v1444
        %v1446 = vpop.f32.mrf.mxu0
        %v1447 = vadd.f32 0.0, %v1446
        %1448 = vmatmul.bf16.gmra.mxu0 %v1352
        %v1449 = vpop.f32.mrf.mxu0
        %v1450 = vadd.f32 0.0, %v1449
        %v1451 = vpop.f32.mrf.mxu0
        %v1452 = vadd.f32 0.0, %v1451
        %1453 = vmatmul.bf16.gmra.mxu0 %v1353
        %v1454 = vpop.f32.mrf.mxu0
        %v1455 = vadd.f32 0.0, %v1454
        %v1456 = vpop.f32.mrf.mxu0
        %v1457 = vadd.f32 0.0, %v1456
        %1458 = vmatmul.bf16.gmra.mxu0 %v1354
        %v1459 = vpop.f32.mrf.mxu0
        %v1460 = vadd.f32 0.0, %v1459
        %v1461 = vpop.f32.mrf.mxu0
        %v1462 = vadd.f32 0.0, %v1461
        %1463 = vmatmul.bf16.gmra.mxu0 %v1355
        %v1464 = vpop.f32.mrf.mxu0
        %v1465 = vadd.f32 0.0, %v1464
        %v1466 = vpop.f32.mrf.mxu0
        %v1467 = vadd.f32 0.0, %v1466
        %1468 = vmatmul.bf16.gmra.mxu0 %v1356
        %v1469 = vpop.f32.mrf.mxu0
        %v1470 = vadd.f32 0.0, %v1469
        %v1471 = vpop.f32.mrf.mxu0
        %v1472 = vadd.f32 0.0, %v1471
        %1473 = vmatmul.bf16.gmra.mxu0 %v1357
        %v1474 = vpop.f32.mrf.mxu0
        %v1475 = vadd.f32 0.0, %v1474
        %v1476 = vpop.f32.mrf.mxu0
        %v1477 = vadd.f32 0.0, %v1476
        %1478 = vmatmul.bf16.gmra.mxu0 %v1358
        %v1479 = vpop.f32.mrf.mxu0
        %v1480 = vadd.f32 0.0, %v1479
        %v1481 = vpop.f32.mrf.mxu0
        %v1482 = vadd.f32 0.0, %v1481
        %1483 = vmatmul.bf16.gmra.mxu0 %v1359
        %v1484 = vpop.f32.mrf.mxu0
        %v1485 = vadd.f32 0.0, %v1484
        %v1486 = vpop.f32.mrf.mxu0
        %v1487 = vadd.f32 0.0, %v1486
        %1488 = vmatmul.bf16.gmra.mxu0 %v1360
        %v1489 = vpop.f32.mrf.mxu0
        %v1490 = vadd.f32 0.0, %v1489
        %v1491 = vpop.f32.mrf.mxu0
        %v1492 = vadd.f32 0.0, %v1491
        %1493 = vmatmul.bf16.gmra.mxu0 %v1361
        %v1494 = vpop.f32.mrf.mxu0
        %v1495 = vadd.f32 0.0, %v1494
        %v1496 = vpop.f32.mrf.mxu0
        %v1497 = vadd.f32 0.0, %v1496
        %1498 = vmatmul.bf16.gmra.mxu0 %v1362
        %v1499 = vpop.f32.mrf.mxu0
        %v1500 = vadd.f32 0.0, %v1499
        %v1501 = vpop.f32.mrf.mxu0
        %v1502 = vadd.f32 0.0, %v1501
        %1503 = vmatmul.bf16.gmra.mxu0 %v1363
        %v1504 = vpop.f32.mrf.mxu0
        %v1505 = vadd.f32 0.0, %v1504
        %v1506 = vpop.f32.mrf.mxu0
        %v1507 = vadd.f32 0.0, %v1506
        %1508 = vmatmul.bf16.gmra.mxu0 %v1364
        %v1509 = vpop.f32.mrf.mxu0
        %v1510 = vadd.f32 0.0, %v1509
        %v1511 = vpop.f32.mrf.mxu0
        %v1512 = vadd.f32 0.0, %v1511
        %1513 = vmatmul.bf16.gmra.mxu0 %v1365
        %v1514 = vpop.f32.mrf.mxu0
        %v1515 = vadd.f32 0.0, %v1514
        %v1516 = vpop.f32.mrf.mxu0
        %v1517 = vadd.f32 0.0, %v1516
        %1518 = vdwg.mxu0
        %v1519 = vadd.f32 %v1059, %v1440
        %v1520 = vadd.f32 %v1061, %v1442
        %v1521 = vadd.f32 %v1064, %v1445
        %v1522 = vadd.f32 %v1066, %v1447
        %v1523 = vadd.f32 %v1069, %v1450
        %v1524 = vadd.f32 %v1071, %v1452
        %v1525 = vadd.f32 %v1074, %v1455
        %v1526 = vadd.f32 %v1076, %v1457
        %v1527 = vadd.f32 %v1079, %v1460
        %v1528 = vadd.f32 %v1081, %v1462
        %v1529 = vadd.f32 %v1084, %v1465
        %v1530 = vadd.f32 %v1086, %v1467
        %v1531 = vadd.f32 %v1089, %v1470
        %v1532 = vadd.f32 %v1091, %v1472
        %v1533 = vadd.f32 %v1094, %v1475
        %v1534 = vadd.f32 %v1096, %v1477
        %v1535 = vadd.f32 %v1099, %v1480
        %v1536 = vadd.f32 %v1101, %v1482
        %v1537 = vadd.f32 %v1104, %v1485
        %v1538 = vadd.f32 %v1106, %v1487
        %v1539 = vadd.f32 %v1109, %v1490
        %v1540 = vadd.f32 %v1111, %v1492
        %v1541 = vadd.f32 %v1114, %v1495
        %v1542 = vadd.f32 %v1116, %v1497
        %v1543 = vadd.f32 %v1119, %v1500
        %v1544 = vadd.f32 %v1121, %v1502
        %v1545 = vadd.f32 %v1124, %v1505
        %v1546 = vadd.f32 %v1126, %v1507
        %v1547 = vadd.f32 %v1129, %v1510
        %v1548 = vadd.f32 %v1131, %v1512
        %v1549 = vadd.f32 %v1134, %v1515
        %v1550 = vadd.f32 %v1136, %v1517
        %s1551 = scalar_lea.vmem %s227, 12
        %v1552 = vld [vmem:[%s1551] sm:$0xf]
        %v1553 = vld [vmem:[%s1551 + $0x4] sm:$0xf]
        %v1554 = vld [vmem:[%s1551 + $0xc] sm:$0xf]
        %v1555 = vld [vmem:[%s1551 + $0x10] sm:$0xf]
        %v1556 = vld [vmem:[%s1551 + $0x18] sm:$0xf]
        %v1557 = vld [vmem:[%s1551 + $0x1c] sm:$0xf]
        %v1558 = vld [vmem:[%s1551 + $0x24] sm:$0xf]
        %v1559 = vld [vmem:[%s1551 + $0x28] sm:$0xf]
        %v1560 = vld [vmem:[%s1551 + $0x30] sm:$0xf]
        %v1561 = vld [vmem:[%s1551 + $0x34] sm:$0xf]
        %v1562 = vld [vmem:[%s1551 + $0x3c] sm:$0xf]
        %v1563 = vld [vmem:[%s1551 + $0x40] sm:$0xf]
        %v1564 = vld [vmem:[%s1551 + $0x48] sm:$0xf]
        %v1565 = vld [vmem:[%s1551 + $0x4c] sm:$0xf]
        %v1566 = vld [vmem:[%s1551 + $0x54] sm:$0xf]
        %v1567 = vld [vmem:[%s1551 + $0x58] sm:$0xf]
        %v1568 = vld [vmem:[%s1551 + $0x60] sm:$0xf]
        %v1569 = vld [vmem:[%s1551 + $0x64] sm:$0xf]
        %v1570 = vld [vmem:[%s1551 + $0x6c] sm:$0xf]
        %v1571 = vld [vmem:[%s1551 + $0x70] sm:$0xf]
        %v1572 = vld [vmem:[%s1551 + $0x78] sm:$0xf]
        %v1573 = vld [vmem:[%s1551 + $0x7c] sm:$0xf]
        %v1574 = vld [vmem:[%s1551 + $0x84] sm:$0xf]
        %v1575 = vld [vmem:[%s1551 + $0x88] sm:$0xf]
        %v1576 = vld [vmem:[%s1551 + $0x90] sm:$0xf]
        %v1577 = vld [vmem:[%s1551 + $0x94] sm:$0xf]
        %v1578 = vld [vmem:[%s1551 + $0x9c] sm:$0xf]
        %v1579 = vld [vmem:[%s1551 + $0xa0] sm:$0xf]
        %v1580 = vld [vmem:[%s1551 + $0xa8] sm:$0xf]
        %v1581 = vld [vmem:[%s1551 + $0xac] sm:$0xf]
        %v1582 = vld [vmem:[%s1551 + $0xb4] sm:$0xf]
        %v1583 = vld [vmem:[%s1551 + $0xb8] sm:$0xf]
        %s1584 = scalar_lea.vmem [#allocation2], 192
        %v1585 = vld [vmem:[%s1584] sm:$0xf]
        %v1586 = vld [vmem:[%s1584 + $0x4] sm:$0xf]
        %v1587 = vld [vmem:[%s1584 + $0x8] sm:$0xf]
        %v1588 = vld [vmem:[%s1584 + $0xc] sm:$0xf]
        %v1589 = vld [vmem:[%s1584 + $0x10] sm:$0xf]
        %v1590 = vld [vmem:[%s1584 + $0x14] sm:$0xf]
        %v1591 = vld [vmem:[%s1584 + $0x18] sm:$0xf]
        %v1592 = vld [vmem:[%s1584 + $0x1c] sm:$0xf]
        %v1593 = vld [vmem:[%s1584 + $0x20] sm:$0xf]
        %v1594 = vld [vmem:[%s1584 + $0x24] sm:$0xf]
        %v1595 = vld [vmem:[%s1584 + $0x28] sm:$0xf]
        %v1596 = vld [vmem:[%s1584 + $0x2c] sm:$0xf]
        %v1597 = vld [vmem:[%s1584 + $0x30] sm:$0xf]
        %v1598 = vld [vmem:[%s1584 + $0x34] sm:$0xf]
        %v1599 = vld [vmem:[%s1584 + $0x38] sm:$0xf]
        %v1600 = vld [vmem:[%s1584 + $0x3c] sm:$0xf]
        %v1633 = vunpack.c.l.b16 %v1552
        %v1634 = vunpack.c.l.b16 %v1553
        %v1635 = vunpack.c.l.b16 %v1554
        %v1636 = vunpack.c.l.b16 %v1555
        %v1637 = vunpack.c.l.b16 %v1556
        %v1638 = vunpack.c.l.b16 %v1557
        %v1639 = vunpack.c.l.b16 %v1558
        %v1640 = vunpack.c.l.b16 %v1559
        %v1641 = vunpack.c.l.b16 %v1560
        %v1642 = vunpack.c.l.b16 %v1561
        %v1643 = vunpack.c.l.b16 %v1562
        %v1644 = vunpack.c.l.b16 %v1563
        %v1645 = vunpack.c.l.b16 %v1564
        %v1646 = vunpack.c.l.b16 %v1565
        %v1647 = vunpack.c.l.b16 %v1566
        %v1648 = vunpack.c.l.b16 %v1567
        %v1649 = vunpack.c.l.b16 %v1568
        %v1650 = vunpack.c.l.b16 %v1569
        %v1651 = vunpack.c.l.b16 %v1570
        %v1652 = vunpack.c.l.b16 %v1571
        %v1653 = vunpack.c.l.b16 %v1572
        %v1654 = vunpack.c.l.b16 %v1573
        %v1655 = vunpack.c.l.b16 %v1574
        %v1656 = vunpack.c.l.b16 %v1575
        %v1657 = vunpack.c.l.b16 %v1576
        %v1658 = vunpack.c.l.b16 %v1577
        %v1659 = vunpack.c.l.b16 %v1578
        %v1660 = vunpack.c.l.b16 %v1579
        %v1661 = vunpack.c.l.b16 %v1580
        %v1662 = vunpack.c.l.b16 %v1581
        %v1663 = vunpack.c.l.b16 %v1582
        %v1664 = vunpack.c.l.b16 %v1583
        %v1665 = vpack.c.b16 %v1634, %v1633
        %v1666 = vpack.c.b16 %v1636, %v1635
        %v1667 = vpack.c.b16 %v1638, %v1637
        %v1668 = vpack.c.b16 %v1640, %v1639
        %v1669 = vpack.c.b16 %v1642, %v1641
        %v1670 = vpack.c.b16 %v1644, %v1643
        %v1671 = vpack.c.b16 %v1646, %v1645
        %v1672 = vpack.c.b16 %v1648, %v1647
        %v1673 = vpack.c.b16 %v1650, %v1649
        %v1674 = vpack.c.b16 %v1652, %v1651
        %v1675 = vpack.c.b16 %v1654, %v1653
        %v1676 = vpack.c.b16 %v1656, %v1655
        %v1677 = vpack.c.b16 %v1658, %v1657
        %v1678 = vpack.c.b16 %v1660, %v1659
        %v1679 = vpack.c.b16 %v1662, %v1661
        %v1680 = vpack.c.b16 %v1664, %v1663
        %v1713 = vunpack.c.l.b16 %v1585
        %v1714 = vunpack.c.l.b16 %v1586
        %v1715 = vunpack.c.l.b16 %v1587
        %v1716 = vunpack.c.l.b16 %v1588
        %v1717 = vunpack.c.l.b16 %v1589
        %v1718 = vunpack.c.l.b16 %v1590
        %v1719 = vunpack.c.l.b16 %v1591
        %v1720 = vunpack.c.l.b16 %v1592
        %v1721 = vunpack.c.l.b16 %v1593
        %v1722 = vunpack.c.l.b16 %v1594
        %v1723 = vunpack.c.l.b16 %v1595
        %v1724 = vunpack.c.l.b16 %v1596
        %v1725 = vunpack.c.l.b16 %v1597
        %v1726 = vunpack.c.l.b16 %v1598
        %v1727 = vunpack.c.l.b16 %v1599
        %v1728 = vunpack.c.l.b16 %v1600
        %v1729 = vpack.c.b16 %v1714, %v1713
        %v1730 = vpack.c.b16 %v1716, %v1715
        %v1731 = vpack.c.b16 %v1718, %v1717
        %v1732 = vpack.c.b16 %v1720, %v1719
        %v1733 = vpack.c.b16 %v1722, %v1721
        %v1734 = vpack.c.b16 %v1724, %v1723
        %v1735 = vpack.c.b16 %v1726, %v1725
        %v1736 = vpack.c.b16 %v1728, %v1727
        %1745 = vmatpush.bf16.msra.mxu0 %v1736
        %1746 = vmatpush.bf16.msra.mxu0 %v1735
        %1747 = vmatpush.bf16.msra.mxu0 %v1734
        %1748 = vmatpush.bf16.msra.mxu0 %v1733
        %1749 = vmatpush.bf16.msra.mxu0 %v1732
        %1750 = vmatpush.bf16.msra.mxu0 %v1731
        %1751 = vmatpush.bf16.msra.mxu0 %v1730
        %1752 = vmatpush.bf16.msra.mxu0 %v1729
        %1753 = vmatmul.bf16.gmra.mxu0 %v1665
        %v1754 = vpop.f32.mrf.mxu0
        %v1755 = vadd.f32 0.0, %v1754
        %v1756 = vpop.f32.mrf.mxu0
        %v1757 = vadd.f32 0.0, %v1756
        %1758 = vmatmul.bf16.gmra.mxu0 %v1666
        %v1759 = vpop.f32.mrf.mxu0
        %v1760 = vadd.f32 0.0, %v1759
        %v1761 = vpop.f32.mrf.mxu0
        %v1762 = vadd.f32 0.0, %v1761
        %1763 = vmatmul.bf16.gmra.mxu0 %v1667
        %v1764 = vpop.f32.mrf.mxu0
        %v1765 = vadd.f32 0.0, %v1764
        %v1766 = vpop.f32.mrf.mxu0
        %v1767 = vadd.f32 0.0, %v1766
        %1768 = vmatmul.bf16.gmra.mxu0 %v1668
        %v1769 = vpop.f32.mrf.mxu0
        %v1770 = vadd.f32 0.0, %v1769
        %v1771 = vpop.f32.mrf.mxu0
        %v1772 = vadd.f32 0.0, %v1771
        %1773 = vmatmul.bf16.gmra.mxu0 %v1669
        %v1774 = vpop.f32.mrf.mxu0
        %v1775 = vadd.f32 0.0, %v1774
        %v1776 = vpop.f32.mrf.mxu0
        %v1777 = vadd.f32 0.0, %v1776
        %1778 = vmatmul.bf16.gmra.mxu0 %v1670
        %v1779 = vpop.f32.mrf.mxu0
        %v1780 = vadd.f32 0.0, %v1779
        %v1781 = vpop.f32.mrf.mxu0
        %v1782 = vadd.f32 0.0, %v1781
        %1783 = vmatmul.bf16.gmra.mxu0 %v1671
        %v1784 = vpop.f32.mrf.mxu0
        %v1785 = vadd.f32 0.0, %v1784
        %v1786 = vpop.f32.mrf.mxu0
        %v1787 = vadd.f32 0.0, %v1786
        %1788 = vmatmul.bf16.gmra.mxu0 %v1672
        %v1789 = vpop.f32.mrf.mxu0
        %v1790 = vadd.f32 0.0, %v1789
        %v1791 = vpop.f32.mrf.mxu0
        %v1792 = vadd.f32 0.0, %v1791
        %1793 = vmatmul.bf16.gmra.mxu0 %v1673
        %v1794 = vpop.f32.mrf.mxu0
        %v1795 = vadd.f32 0.0, %v1794
        %v1796 = vpop.f32.mrf.mxu0
        %v1797 = vadd.f32 0.0, %v1796
        %1798 = vmatmul.bf16.gmra.mxu0 %v1674
        %v1799 = vpop.f32.mrf.mxu0
        %v1800 = vadd.f32 0.0, %v1799
        %v1801 = vpop.f32.mrf.mxu0
        %v1802 = vadd.f32 0.0, %v1801
        %1803 = vmatmul.bf16.gmra.mxu0 %v1675
        %v1804 = vpop.f32.mrf.mxu0
        %v1805 = vadd.f32 0.0, %v1804
        %v1806 = vpop.f32.mrf.mxu0
        %v1807 = vadd.f32 0.0, %v1806
        %1808 = vmatmul.bf16.gmra.mxu0 %v1676
        %v1809 = vpop.f32.mrf.mxu0
        %v1810 = vadd.f32 0.0, %v1809
        %v1811 = vpop.f32.mrf.mxu0
        %v1812 = vadd.f32 0.0, %v1811
        %1813 = vmatmul.bf16.gmra.mxu0 %v1677
        %v1814 = vpop.f32.mrf.mxu0
        %v1815 = vadd.f32 0.0, %v1814
        %v1816 = vpop.f32.mrf.mxu0
        %v1817 = vadd.f32 0.0, %v1816
        %1818 = vmatmul.bf16.gmra.mxu0 %v1678
        %v1819 = vpop.f32.mrf.mxu0
        %v1820 = vadd.f32 0.0, %v1819
        %v1821 = vpop.f32.mrf.mxu0
        %v1822 = vadd.f32 0.0, %v1821
        %1823 = vmatmul.bf16.gmra.mxu0 %v1679
        %v1824 = vpop.f32.mrf.mxu0
        %v1825 = vadd.f32 0.0, %v1824
        %v1826 = vpop.f32.mrf.mxu0
        %v1827 = vadd.f32 0.0, %v1826
        %1828 = vmatmul.bf16.gmra.mxu0 %v1680
        %v1829 = vpop.f32.mrf.mxu0
        %v1830 = vadd.f32 0.0, %v1829
        %v1831 = vpop.f32.mrf.mxu0
        %v1832 = vadd.f32 0.0, %v1831
        %1833 = vdwg.mxu0
        %v1834 = vadd.f32 %v1519, %v1755
        %v1835 = vadd.f32 %v1520, %v1757
        %v1836 = vadd.f32 %v1521, %v1760
        %v1837 = vadd.f32 %v1522, %v1762
        %v1838 = vadd.f32 %v1523, %v1765
        %v1839 = vadd.f32 %v1524, %v1767
        %v1840 = vadd.f32 %v1525, %v1770
        %v1841 = vadd.f32 %v1526, %v1772
        %v1842 = vadd.f32 %v1527, %v1775
        %v1843 = vadd.f32 %v1528, %v1777
        %v1844 = vadd.f32 %v1529, %v1780
        %v1845 = vadd.f32 %v1530, %v1782
        %v1846 = vadd.f32 %v1531, %v1785
        %v1847 = vadd.f32 %v1532, %v1787
        %v1848 = vadd.f32 %v1533, %v1790
        %v1849 = vadd.f32 %v1534, %v1792
        %v1850 = vadd.f32 %v1535, %v1795
        %v1851 = vadd.f32 %v1536, %v1797
        %v1852 = vadd.f32 %v1537, %v1800
        %v1853 = vadd.f32 %v1538, %v1802
        %v1854 = vadd.f32 %v1539, %v1805
        %v1855 = vadd.f32 %v1540, %v1807
        %v1856 = vadd.f32 %v1541, %v1810
        %v1857 = vadd.f32 %v1542, %v1812
        %v1858 = vadd.f32 %v1543, %v1815
        %v1859 = vadd.f32 %v1544, %v1817
        %v1860 = vadd.f32 %v1545, %v1820
        %v1861 = vadd.f32 %v1546, %v1822
        %v1862 = vadd.f32 %v1547, %v1825
        %v1863 = vadd.f32 %v1548, %v1827
        %v1864 = vadd.f32 %v1549, %v1830
        %v1865 = vadd.f32 %v1550, %v1832
        %v1866 = vld [vmem:[%s1551] sm:$0xf]
        %v1867 = vld [vmem:[%s1551 + $0x4] sm:$0xf]
        %v1868 = vld [vmem:[%s1551 + $0x8] sm:$0x1]
        %v1869 = vld [vmem:[%s1551 + $0xc] sm:$0xf]
        %v1870 = vld [vmem:[%s1551 + $0x10] sm:$0xf]
        %v1871 = vld [vmem:[%s1551 + $0x14] sm:$0x1]
        %v1872 = vld [vmem:[%s1551 + $0x18] sm:$0xf]
        %v1873 = vld [vmem:[%s1551 + $0x1c] sm:$0xf]
        %v1874 = vld [vmem:[%s1551 + $0x20] sm:$0x1]
        %v1875 = vld [vmem:[%s1551 + $0x24] sm:$0xf]
        %v1876 = vld [vmem:[%s1551 + $0x28] sm:$0xf]
        %v1877 = vld [vmem:[%s1551 + $0x2c] sm:$0x1]
        %v1878 = vld [vmem:[%s1551 + $0x30] sm:$0xf]
        %v1879 = vld [vmem:[%s1551 + $0x34] sm:$0xf]
        %v1880 = vld [vmem:[%s1551 + $0x38] sm:$0x1]
        %v1881 = vld [vmem:[%s1551 + $0x3c] sm:$0xf]
        %v1882 = vld [vmem:[%s1551 + $0x40] sm:$0xf]
        %v1883 = vld [vmem:[%s1551 + $0x44] sm:$0x1]
        %v1884 = vld [vmem:[%s1551 + $0x48] sm:$0xf]
        %v1885 = vld [vmem:[%s1551 + $0x4c] sm:$0xf]
        %v1886 = vld [vmem:[%s1551 + $0x50] sm:$0x1]
        %v1887 = vld [vmem:[%s1551 + $0x54] sm:$0xf]
        %v1888 = vld [vmem:[%s1551 + $0x58] sm:$0xf]
        %v1889 = vld [vmem:[%s1551 + $0x5c] sm:$0x1]
        %v1890 = vld [vmem:[%s1551 + $0x60] sm:$0xf]
        %v1891 = vld [vmem:[%s1551 + $0x64] sm:$0xf]
        %v1892 = vld [vmem:[%s1551 + $0x68] sm:$0x1]
        %v1893 = vld [vmem:[%s1551 + $0x6c] sm:$0xf]
        %v1894 = vld [vmem:[%s1551 + $0x70] sm:$0xf]
        %v1895 = vld [vmem:[%s1551 + $0x74] sm:$0x1]
        %v1896 = vld [vmem:[%s1551 + $0x78] sm:$0xf]
        %v1897 = vld [vmem:[%s1551 + $0x7c] sm:$0xf]
        %v1898 = vld [vmem:[%s1551 + $0x80] sm:$0x1]
        %v1899 = vld [vmem:[%s1551 + $0x84] sm:$0xf]
        %v1900 = vld [vmem:[%s1551 + $0x88] sm:$0xf]
        %v1901 = vld [vmem:[%s1551 + $0x8c] sm:$0x1]
        %v1902 = vld [vmem:[%s1551 + $0x90] sm:$0xf]
        %v1903 = vld [vmem:[%s1551 + $0x94] sm:$0xf]
        %v1904 = vld [vmem:[%s1551 + $0x98] sm:$0x1]
        %v1905 = vld [vmem:[%s1551 + $0x9c] sm:$0xf]
        %v1906 = vld [vmem:[%s1551 + $0xa0] sm:$0xf]
        %v1907 = vld [vmem:[%s1551 + $0xa4] sm:$0x1]
        %v1908 = vld [vmem:[%s1551 + $0xa8] sm:$0xf]
        %v1909 = vld [vmem:[%s1551 + $0xac] sm:$0xf]
        %v1910 = vld [vmem:[%s1551 + $0xb0] sm:$0x1]
        %v1911 = vld [vmem:[%s1551 + $0xb4] sm:$0xf]
        %v1912 = vld [vmem:[%s1551 + $0xb8] sm:$0xf]
        %v1913 = vld [vmem:[%s1551 + $0xbc] sm:$0x1]
        %v1915 = vshrl.u32 %v1866, 16
        %v1917 = vrot.slane %v1915, 4
        %v1918 = vshll.u32 %v1866, 16
        %v1920 = vrot.slane %v1918, 5
        %v1921 = vor.u32 %v1917, %v1920
        %v1922 = vrot.slane %v1921, 4
        %v1924 = vshll.u32 %v1867, 16
        %v1926 = vrot.slane %v1924, 5
        %v1927 = vsel %vm302, %v1922, %v1926
        %v1928 = vshrl.u32 %v1867, 16
        %v1930 = vrot.slane %v1928, 4
        %v1931 = vor.u32 %v1930, %v1926
        %v1932 = vrot.slane %v1931, 4
        %v1934 = vshll.u32 %v1868, 16
        %v1936 = vrot.slane %v1934, 5
        %v1937 = vsel %vm302, %v1932, %v1936
        %v1939 = vshrl.u32 %v1869, 16
        %v1941 = vrot.slane %v1939, 4
        %v1942 = vshll.u32 %v1869, 16
        %v1944 = vrot.slane %v1942, 5
        %v1945 = vor.u32 %v1941, %v1944
        %v1946 = vrot.slane %v1945, 4
        %v1948 = vshll.u32 %v1870, 16
        %v1950 = vrot.slane %v1948, 5
        %v1951 = vsel %vm302, %v1946, %v1950
        %v1952 = vshrl.u32 %v1870, 16
        %v1954 = vrot.slane %v1952, 4
        %v1955 = vor.u32 %v1954, %v1950
        %v1956 = vrot.slane %v1955, 4
        %v1958 = vshll.u32 %v1871, 16
        %v1960 = vrot.slane %v1958, 5
        %v1961 = vsel %vm302, %v1956, %v1960
        %v1963 = vshrl.u32 %v1872, 16
        %v1965 = vrot.slane %v1963, 4
        %v1966 = vshll.u32 %v1872, 16
        %v1968 = vrot.slane %v1966, 5
        %v1969 = vor.u32 %v1965, %v1968
        %v1970 = vrot.slane %v1969, 4
        %v1972 = vshll.u32 %v1873, 16
        %v1974 = vrot.slane %v1972, 5
        %v1975 = vsel %vm302, %v1970, %v1974
        %v1976 = vshrl.u32 %v1873, 16
        %v1978 = vrot.slane %v1976, 4
        %v1979 = vor.u32 %v1978, %v1974
        %v1980 = vrot.slane %v1979, 4
        %v1982 = vshll.u32 %v1874, 16
        %v1984 = vrot.slane %v1982, 5
        %v1985 = vsel %vm302, %v1980, %v1984
        %v1987 = vshrl.u32 %v1875, 16
        %v1989 = vrot.slane %v1987, 4
        %v1990 = vshll.u32 %v1875, 16
        %v1992 = vrot.slane %v1990, 5
        %v1993 = vor.u32 %v1989, %v1992
        %v1994 = vrot.slane %v1993, 4
        %v1996 = vshll.u32 %v1876, 16
        %v1998 = vrot.slane %v1996, 5
        %v1999 = vsel %vm302, %v1994, %v1998
        %v2000 = vshrl.u32 %v1876, 16
        %v2002 = vrot.slane %v2000, 4
        %v2003 = vor.u32 %v2002, %v1998
        %v2004 = vrot.slane %v2003, 4
        %v2006 = vshll.u32 %v1877, 16
        %v2008 = vrot.slane %v2006, 5
        %v2009 = vsel %vm302, %v2004, %v2008
        %v2011 = vshrl.u32 %v1878, 16
        %v2013 = vrot.slane %v2011, 4
        %v2014 = vshll.u32 %v1878, 16
        %v2016 = vrot.slane %v2014, 5
        %v2017 = vor.u32 %v2013, %v2016
        %v2018 = vrot.slane %v2017, 4
        %v2020 = vshll.u32 %v1879, 16
        %v2022 = vrot.slane %v2020, 5
        %v2023 = vsel %vm302, %v2018, %v2022
        %v2024 = vshrl.u32 %v1879, 16
        %v2026 = vrot.slane %v2024, 4
        %v2027 = vor.u32 %v2026, %v2022
        %v2028 = vrot.slane %v2027, 4
        %v2030 = vshll.u32 %v1880, 16
        %v2032 = vrot.slane %v2030, 5
        %v2033 = vsel %vm302, %v2028, %v2032
        %v2035 = vshrl.u32 %v1881, 16
        %v2037 = vrot.slane %v2035, 4
        %v2038 = vshll.u32 %v1881, 16
        %v2040 = vrot.slane %v2038, 5
        %v2041 = vor.u32 %v2037, %v2040
        %v2042 = vrot.slane %v2041, 4
        %v2044 = vshll.u32 %v1882, 16
        %v2046 = vrot.slane %v2044, 5
        %v2047 = vsel %vm302, %v2042, %v2046
        %v2048 = vshrl.u32 %v1882, 16
        %v2050 = vrot.slane %v2048, 4
        %v2051 = vor.u32 %v2050, %v2046
        %v2052 = vrot.slane %v2051, 4
        %v2054 = vshll.u32 %v1883, 16
        %v2056 = vrot.slane %v2054, 5
        %v2057 = vsel %vm302, %v2052, %v2056
        %v2059 = vshrl.u32 %v1884, 16
        %v2061 = vrot.slane %v2059, 4
        %v2062 = vshll.u32 %v1884, 16
        %v2064 = vrot.slane %v2062, 5
        %v2065 = vor.u32 %v2061, %v2064
        %v2066 = vrot.slane %v2065, 4
        %v2068 = vshll.u32 %v1885, 16
        %v2070 = vrot.slane %v2068, 5
        %v2071 = vsel %vm302, %v2066, %v2070
        %v2072 = vshrl.u32 %v1885, 16
        %v2074 = vrot.slane %v2072, 4
        %v2075 = vor.u32 %v2074, %v2070
        %v2076 = vrot.slane %v2075, 4
        %v2078 = vshll.u32 %v1886, 16
        %v2080 = vrot.slane %v2078, 5
        %v2081 = vsel %vm302, %v2076, %v2080
        %v2083 = vshrl.u32 %v1887, 16
        %v2085 = vrot.slane %v2083, 4
        %v2086 = vshll.u32 %v1887, 16
        %v2088 = vrot.slane %v2086, 5
        %v2089 = vor.u32 %v2085, %v2088
        %v2090 = vrot.slane %v2089, 4
        %v2092 = vshll.u32 %v1888, 16
        %v2094 = vrot.slane %v2092, 5
        %v2095 = vsel %vm302, %v2090, %v2094
        %v2096 = vshrl.u32 %v1888, 16
        %v2098 = vrot.slane %v2096, 4
        %v2099 = vor.u32 %v2098, %v2094
        %v2100 = vrot.slane %v2099, 4
        %v2102 = vshll.u32 %v1889, 16
        %v2104 = vrot.slane %v2102, 5
        %v2105 = vsel %vm302, %v2100, %v2104
        %v2107 = vshrl.u32 %v1890, 16
        %v2109 = vrot.slane %v2107, 4
        %v2110 = vshll.u32 %v1890, 16
        %v2112 = vrot.slane %v2110, 5
        %v2113 = vor.u32 %v2109, %v2112
        %v2114 = vrot.slane %v2113, 4
        %v2116 = vshll.u32 %v1891, 16
        %v2118 = vrot.slane %v2116, 5
        %v2119 = vsel %vm302, %v2114, %v2118
        %v2120 = vshrl.u32 %v1891, 16
        %v2122 = vrot.slane %v2120, 4
        %v2123 = vor.u32 %v2122, %v2118
        %v2124 = vrot.slane %v2123, 4
        %v2126 = vshll.u32 %v1892, 16
        %v2128 = vrot.slane %v2126, 5
        %v2129 = vsel %vm302, %v2124, %v2128
        %v2131 = vshrl.u32 %v1893, 16
        %v2133 = vrot.slane %v2131, 4
        %v2134 = vshll.u32 %v1893, 16
        %v2136 = vrot.slane %v2134, 5
        %v2137 = vor.u32 %v2133, %v2136
        %v2138 = vrot.slane %v2137, 4
        %v2140 = vshll.u32 %v1894, 16
        %v2142 = vrot.slane %v2140, 5
        %v2143 = vsel %vm302, %v2138, %v2142
        %v2144 = vshrl.u32 %v1894, 16
        %v2146 = vrot.slane %v2144, 4
        %v2147 = vor.u32 %v2146, %v2142
        %v2148 = vrot.slane %v2147, 4
        %v2150 = vshll.u32 %v1895, 16
        %v2152 = vrot.slane %v2150, 5
        %v2153 = vsel %vm302, %v2148, %v2152
        %v2155 = vshrl.u32 %v1896, 16
        %v2157 = vrot.slane %v2155, 4
        %v2158 = vshll.u32 %v1896, 16
        %v2160 = vrot.slane %v2158, 5
        %v2161 = vor.u32 %v2157, %v2160
        %v2162 = vrot.slane %v2161, 4
        %v2164 = vshll.u32 %v1897, 16
        %v2166 = vrot.slane %v2164, 5
        %v2167 = vsel %vm302, %v2162, %v2166
        %v2168 = vshrl.u32 %v1897, 16
        %v2170 = vrot.slane %v2168, 4
        %v2171 = vor.u32 %v2170, %v2166
        %v2172 = vrot.slane %v2171, 4
        %v2174 = vshll.u32 %v1898, 16
        %v2176 = vrot.slane %v2174, 5
        %v2177 = vsel %vm302, %v2172, %v2176
        %v2179 = vshrl.u32 %v1899, 16
        %v2181 = vrot.slane %v2179, 4
        %v2182 = vshll.u32 %v1899, 16
        %v2184 = vrot.slane %v2182, 5
        %v2185 = vor.u32 %v2181, %v2184
        %v2186 = vrot.slane %v2185, 4
        %v2188 = vshll.u32 %v1900, 16
        %v2190 = vrot.slane %v2188, 5
        %v2191 = vsel %vm302, %v2186, %v2190
        %v2192 = vshrl.u32 %v1900, 16
        %v2194 = vrot.slane %v2192, 4
        %v2195 = vor.u32 %v2194, %v2190
        %v2196 = vrot.slane %v2195, 4
        %v2198 = vshll.u32 %v1901, 16
        %v2200 = vrot.slane %v2198, 5
        %v2201 = vsel %vm302, %v2196, %v2200
        %v2203 = vshrl.u32 %v1902, 16
        %v2205 = vrot.slane %v2203, 4
        %v2206 = vshll.u32 %v1902, 16
        %v2208 = vrot.slane %v2206, 5
        %v2209 = vor.u32 %v2205, %v2208
        %v2210 = vrot.slane %v2209, 4
        %v2212 = vshll.u32 %v1903, 16
        %v2214 = vrot.slane %v2212, 5
        %v2215 = vsel %vm302, %v2210, %v2214
        %v2216 = vshrl.u32 %v1903, 16
        %v2218 = vrot.slane %v2216, 4
        %v2219 = vor.u32 %v2218, %v2214
        %v2220 = vrot.slane %v2219, 4
        %v2222 = vshll.u32 %v1904, 16
        %v2224 = vrot.slane %v2222, 5
        %v2225 = vsel %vm302, %v2220, %v2224
        %v2227 = vshrl.u32 %v1905, 16
        %v2229 = vrot.slane %v2227, 4
        %v2230 = vshll.u32 %v1905, 16
        %v2232 = vrot.slane %v2230, 5
        %v2233 = vor.u32 %v2229, %v2232
        %v2234 = vrot.slane %v2233, 4
        %v2236 = vshll.u32 %v1906, 16
        %v2238 = vrot.slane %v2236, 5
        %v2239 = vsel %vm302, %v2234, %v2238
        %v2240 = vshrl.u32 %v1906, 16
        %v2242 = vrot.slane %v2240, 4
        %v2243 = vor.u32 %v2242, %v2238
        %v2244 = vrot.slane %v2243, 4
        %v2246 = vshll.u32 %v1907, 16
        %v2248 = vrot.slane %v2246, 5
        %v2249 = vsel %vm302, %v2244, %v2248
        %v2251 = vshrl.u32 %v1908, 16
        %v2253 = vrot.slane %v2251, 4
        %v2254 = vshll.u32 %v1908, 16
        %v2256 = vrot.slane %v2254, 5
        %v2257 = vor.u32 %v2253, %v2256
        %v2258 = vrot.slane %v2257, 4
        %v2260 = vshll.u32 %v1909, 16
        %v2262 = vrot.slane %v2260, 5
        %v2263 = vsel %vm302, %v2258, %v2262
        %v2264 = vshrl.u32 %v1909, 16
        %v2266 = vrot.slane %v2264, 4
        %v2267 = vor.u32 %v2266, %v2262
        %v2268 = vrot.slane %v2267, 4
        %v2270 = vshll.u32 %v1910, 16
        %v2272 = vrot.slane %v2270, 5
        %v2273 = vsel %vm302, %v2268, %v2272
        %v2275 = vshrl.u32 %v1911, 16
        %v2277 = vrot.slane %v2275, 4
        %v2278 = vshll.u32 %v1911, 16
        %v2280 = vrot.slane %v2278, 5
        %v2281 = vor.u32 %v2277, %v2280
        %v2282 = vrot.slane %v2281, 4
        %v2284 = vshll.u32 %v1912, 16
        %v2286 = vrot.slane %v2284, 5
        %v2287 = vsel %vm302, %v2282, %v2286
        %v2288 = vshrl.u32 %v1912, 16
        %v2290 = vrot.slane %v2288, 4
        %v2291 = vor.u32 %v2290, %v2286
        %v2292 = vrot.slane %v2291, 4
        %v2294 = vshll.u32 %v1913, 16
        %v2296 = vrot.slane %v2294, 5
        %v2297 = vsel %vm302, %v2292, %v2296
        %s2298 = scalar_lea.vmem [#allocation2], 256
        %v2299 = vld [vmem:[%s2298] sm:$0xf]
        %v2300 = vld [vmem:[%s2298 + $0x4] sm:$0xf]
        %v2301 = vld [vmem:[%s2298 + $0x8] sm:$0xf]
        %v2302 = vld [vmem:[%s2298 + $0xc] sm:$0xf]
        %v2303 = vld [vmem:[%s2298 + $0x10] sm:$0xf]
        %v2304 = vld [vmem:[%s2298 + $0x14] sm:$0xf]
        %v2305 = vld [vmem:[%s2298 + $0x18] sm:$0xf]
        %v2306 = vld [vmem:[%s2298 + $0x1c] sm:$0xf]
        %v2307 = vld [vmem:[%s2298 + $0x20] sm:$0xf]
        %v2308 = vld [vmem:[%s2298 + $0x24] sm:$0xf]
        %v2309 = vld [vmem:[%s2298 + $0x28] sm:$0xf]
        %v2310 = vld [vmem:[%s2298 + $0x2c] sm:$0xf]
        %v2311 = vld [vmem:[%s2298 + $0x30] sm:$0xf]
        %v2312 = vld [vmem:[%s2298 + $0x34] sm:$0xf]
        %v2313 = vld [vmem:[%s2298 + $0x38] sm:$0xf]
        %v2314 = vld [vmem:[%s2298 + $0x3c] sm:$0xf]
        %v2315 = vunpack.c.l.b16 %v1927
        %v2316 = vunpack.c.l.b16 %v1937
        %v2317 = vunpack.c.l.b16 %v1951
        %v2318 = vunpack.c.l.b16 %v1961
        %v2319 = vunpack.c.l.b16 %v1975
        %v2320 = vunpack.c.l.b16 %v1985
        %v2321 = vunpack.c.l.b16 %v1999
        %v2322 = vunpack.c.l.b16 %v2009
        %v2323 = vunpack.c.l.b16 %v2023
        %v2324 = vunpack.c.l.b16 %v2033
        %v2325 = vunpack.c.l.b16 %v2047
        %v2326 = vunpack.c.l.b16 %v2057
        %v2327 = vunpack.c.l.b16 %v2071
        %v2328 = vunpack.c.l.b16 %v2081
        %v2329 = vunpack.c.l.b16 %v2095
        %v2330 = vunpack.c.l.b16 %v2105
        %v2331 = vunpack.c.l.b16 %v2119
        %v2332 = vunpack.c.l.b16 %v2129
        %v2333 = vunpack.c.l.b16 %v2143
        %v2334 = vunpack.c.l.b16 %v2153
        %v2335 = vunpack.c.l.b16 %v2167
        %v2336 = vunpack.c.l.b16 %v2177
        %v2337 = vunpack.c.l.b16 %v2191
        %v2338 = vunpack.c.l.b16 %v2201
        %v2339 = vunpack.c.l.b16 %v2215
        %v2340 = vunpack.c.l.b16 %v2225
        %v2341 = vunpack.c.l.b16 %v2239
        %v2342 = vunpack.c.l.b16 %v2249
        %v2343 = vunpack.c.l.b16 %v2263
        %v2344 = vunpack.c.l.b16 %v2273
        %v2345 = vunpack.c.l.b16 %v2287
        %v2346 = vunpack.c.l.b16 %v2297
        %v2347 = vpack.c.b16 %v2316, %v2315
        %v2348 = vpack.c.b16 %v2318, %v2317
        %v2349 = vpack.c.b16 %v2320, %v2319
        %v2350 = vpack.c.b16 %v2322, %v2321
        %v2351 = vpack.c.b16 %v2324, %v2323
        %v2352 = vpack.c.b16 %v2326, %v2325
        %v2353 = vpack.c.b16 %v2328, %v2327
        %v2354 = vpack.c.b16 %v2330, %v2329
        %v2355 = vpack.c.b16 %v2332, %v2331
        %v2356 = vpack.c.b16 %v2334, %v2333
        %v2357 = vpack.c.b16 %v2336, %v2335
        %v2358 = vpack.c.b16 %v2338, %v2337
        %v2359 = vpack.c.b16 %v2340, %v2339
        %v2360 = vpack.c.b16 %v2342, %v2341
        %v2361 = vpack.c.b16 %v2344, %v2343
        %v2362 = vpack.c.b16 %v2346, %v2345
        %v2395 = vunpack.c.l.b16 %v2299
        %v2396 = vunpack.c.l.b16 %v2300
        %v2397 = vunpack.c.l.b16 %v2301
        %v2398 = vunpack.c.l.b16 %v2302
        %v2399 = vunpack.c.l.b16 %v2303
        %v2400 = vunpack.c.l.b16 %v2304
        %v2401 = vunpack.c.l.b16 %v2305
        %v2402 = vunpack.c.l.b16 %v2306
        %v2403 = vunpack.c.l.b16 %v2307
        %v2404 = vunpack.c.l.b16 %v2308
        %v2405 = vunpack.c.l.b16 %v2309
        %v2406 = vunpack.c.l.b16 %v2310
        %v2407 = vunpack.c.l.b16 %v2311
        %v2408 = vunpack.c.l.b16 %v2312
        %v2409 = vunpack.c.l.b16 %v2313
        %v2410 = vunpack.c.l.b16 %v2314
        %v2411 = vpack.c.b16 %v2396, %v2395
        %v2412 = vpack.c.b16 %v2398, %v2397
        %v2413 = vpack.c.b16 %v2400, %v2399
        %v2414 = vpack.c.b16 %v2402, %v2401
        %v2415 = vpack.c.b16 %v2404, %v2403
        %v2416 = vpack.c.b16 %v2406, %v2405
        %v2417 = vpack.c.b16 %v2408, %v2407
        %v2418 = vpack.c.b16 %v2410, %v2409
        %2427 = vmatpush.bf16.msra.mxu0 %v2418
        %2428 = vmatpush.bf16.msra.mxu0 %v2417
        %2429 = vmatpush.bf16.msra.mxu0 %v2416
        %2430 = vmatpush.bf16.msra.mxu0 %v2415
        %2431 = vmatpush.bf16.msra.mxu0 %v2414
        %2432 = vmatpush.bf16.msra.mxu0 %v2413
        %2433 = vmatpush.bf16.msra.mxu0 %v2412
        %2434 = vmatpush.bf16.msra.mxu0 %v2411
        %2435 = vmatmul.bf16.gmra.mxu0 %v2347
        %v2436 = vpop.f32.mrf.mxu0
        %v2437 = vadd.f32 0.0, %v2436
        %v2438 = vpop.f32.mrf.mxu0
        %v2439 = vadd.f32 0.0, %v2438
        %2440 = vmatmul.bf16.gmra.mxu0 %v2348
        %v2441 = vpop.f32.mrf.mxu0
        %v2442 = vadd.f32 0.0, %v2441
        %v2443 = vpop.f32.mrf.mxu0
        %v2444 = vadd.f32 0.0, %v2443
        %2445 = vmatmul.bf16.gmra.mxu0 %v2349
        %v2446 = vpop.f32.mrf.mxu0
        %v2447 = vadd.f32 0.0, %v2446
        %v2448 = vpop.f32.mrf.mxu0
        %v2449 = vadd.f32 0.0, %v2448
        %2450 = vmatmul.bf16.gmra.mxu0 %v2350
        %v2451 = vpop.f32.mrf.mxu0
        %v2452 = vadd.f32 0.0, %v2451
        %v2453 = vpop.f32.mrf.mxu0
        %v2454 = vadd.f32 0.0, %v2453
        %2455 = vmatmul.bf16.gmra.mxu0 %v2351
        %v2456 = vpop.f32.mrf.mxu0
        %v2457 = vadd.f32 0.0, %v2456
        %v2458 = vpop.f32.mrf.mxu0
        %v2459 = vadd.f32 0.0, %v2458
        %2460 = vmatmul.bf16.gmra.mxu0 %v2352
        %v2461 = vpop.f32.mrf.mxu0
        %v2462 = vadd.f32 0.0, %v2461
        %v2463 = vpop.f32.mrf.mxu0
        %v2464 = vadd.f32 0.0, %v2463
        %2465 = vmatmul.bf16.gmra.mxu0 %v2353
        %v2466 = vpop.f32.mrf.mxu0
        %v2467 = vadd.f32 0.0, %v2466
        %v2468 = vpop.f32.mrf.mxu0
        %v2469 = vadd.f32 0.0, %v2468
        %2470 = vmatmul.bf16.gmra.mxu0 %v2354
        %v2471 = vpop.f32.mrf.mxu0
        %v2472 = vadd.f32 0.0, %v2471
        %v2473 = vpop.f32.mrf.mxu0
        %v2474 = vadd.f32 0.0, %v2473
        %2475 = vmatmul.bf16.gmra.mxu0 %v2355
        %v2476 = vpop.f32.mrf.mxu0
        %v2477 = vadd.f32 0.0, %v2476
        %v2478 = vpop.f32.mrf.mxu0
        %v2479 = vadd.f32 0.0, %v2478
        %2480 = vmatmul.bf16.gmra.mxu0 %v2356
        %v2481 = vpop.f32.mrf.mxu0
        %v2482 = vadd.f32 0.0, %v2481
        %v2483 = vpop.f32.mrf.mxu0
        %v2484 = vadd.f32 0.0, %v2483
        %2485 = vmatmul.bf16.gmra.mxu0 %v2357
        %v2486 = vpop.f32.mrf.mxu0
        %v2487 = vadd.f32 0.0, %v2486
        %v2488 = vpop.f32.mrf.mxu0
        %v2489 = vadd.f32 0.0, %v2488
        %2490 = vmatmul.bf16.gmra.mxu0 %v2358
        %v2491 = vpop.f32.mrf.mxu0
        %v2492 = vadd.f32 0.0, %v2491
        %v2493 = vpop.f32.mrf.mxu0
        %v2494 = vadd.f32 0.0, %v2493
        %2495 = vmatmul.bf16.gmra.mxu0 %v2359
        %v2496 = vpop.f32.mrf.mxu0
        %v2497 = vadd.f32 0.0, %v2496
        %v2498 = vpop.f32.mrf.mxu0
        %v2499 = vadd.f32 0.0, %v2498
        %2500 = vmatmul.bf16.gmra.mxu0 %v2360
        %v2501 = vpop.f32.mrf.mxu0
        %v2502 = vadd.f32 0.0, %v2501
        %v2503 = vpop.f32.mrf.mxu0
        %v2504 = vadd.f32 0.0, %v2503
        %2505 = vmatmul.bf16.gmra.mxu0 %v2361
        %v2506 = vpop.f32.mrf.mxu0
        %v2507 = vadd.f32 0.0, %v2506
        %v2508 = vpop.f32.mrf.mxu0
        %v2509 = vadd.f32 0.0, %v2508
        %2510 = vmatmul.bf16.gmra.mxu0 %v2362
        %v2511 = vpop.f32.mrf.mxu0
        %v2512 = vadd.f32 0.0, %v2511
        %v2513 = vpop.f32.mrf.mxu0
        %v2514 = vadd.f32 0.0, %v2513
        %2515 = vdwg.mxu0
        %v2516 = vadd.f32 %v1834, %v2437
        %v2517 = vadd.f32 %v1835, %v2439
        %v2518 = vadd.f32 %v1836, %v2442
        %v2519 = vadd.f32 %v1837, %v2444
        %v2520 = vadd.f32 %v1838, %v2447
        %v2521 = vadd.f32 %v1839, %v2449
        %v2522 = vadd.f32 %v1840, %v2452
        %v2523 = vadd.f32 %v1841, %v2454
        %v2524 = vadd.f32 %v1842, %v2457
        %v2525 = vadd.f32 %v1843, %v2459
        %v2526 = vadd.f32 %v1844, %v2462
        %v2527 = vadd.f32 %v1845, %v2464
        %v2528 = vadd.f32 %v1846, %v2467
        %v2529 = vadd.f32 %v1847, %v2469
        %v2530 = vadd.f32 %v1848, %v2472
        %v2531 = vadd.f32 %v1849, %v2474
        %v2532 = vadd.f32 %v1850, %v2477
        %v2533 = vadd.f32 %v1851, %v2479
        %v2534 = vadd.f32 %v1852, %v2482
        %v2535 = vadd.f32 %v1853, %v2484
        %v2536 = vadd.f32 %v1854, %v2487
        %v2537 = vadd.f32 %v1855, %v2489
        %v2538 = vadd.f32 %v1856, %v2492
        %v2539 = vadd.f32 %v1857, %v2494
        %v2540 = vadd.f32 %v1858, %v2497
        %v2541 = vadd.f32 %v1859, %v2499
        %v2542 = vadd.f32 %v1860, %v2502
        %v2543 = vadd.f32 %v1861, %v2504
        %v2544 = vadd.f32 %v1862, %v2507
        %v2545 = vadd.f32 %v1863, %v2509
        %v2546 = vadd.f32 %v1864, %v2512
        %v2547 = vadd.f32 %v1865, %v2514
        %v2548 = vld [vmem:[%s1551] sm:$0xe]
        %v2549 = vld [vmem:[%s1551 + $0xc] sm:$0xe]
        %v2550 = vld [vmem:[%s1551 + $0x18] sm:$0xe]
        %v2551 = vld [vmem:[%s1551 + $0x24] sm:$0xe]
        %v2552 = vld [vmem:[%s1551 + $0x30] sm:$0xe]
        %v2553 = vld [vmem:[%s1551 + $0x3c] sm:$0xe]
        %v2554 = vld [vmem:[%s1551 + $0x48] sm:$0xe]
        %v2555 = vld [vmem:[%s1551 + $0x54] sm:$0xe]
        %v2556 = vld [vmem:[%s1551 + $0x60] sm:$0xe]
        %v2557 = vld [vmem:[%s1551 + $0x6c] sm:$0xe]
        %v2558 = vld [vmem:[%s1551 + $0x78] sm:$0xe]
        %v2559 = vld [vmem:[%s1551 + $0x84] sm:$0xe]
        %v2560 = vld [vmem:[%s1551 + $0x90] sm:$0xe]
        %v2561 = vld [vmem:[%s1551 + $0x9c] sm:$0xe]
        %v2562 = vld [vmem:[%s1551 + $0xa8] sm:$0xe]
        %v2563 = vld [vmem:[%s1551 + $0xb4] sm:$0xe]
        %v2612 = vrot.slane %v2548, 5
        %v2613 = vrot.slane %v2612, 4
        %v2614 = vrot.slane %v1867, 5
        %v2615 = vsel %vm1188, %v2613, %v2614
        %v2616 = vrot.slane %v2614, 4
        %v2617 = vrot.slane %v1868, 5
        %v2618 = vsel %vm1188, %v2616, %v2617
        %v2619 = vrot.slane %v2549, 5
        %v2620 = vrot.slane %v2619, 4
        %v2621 = vrot.slane %v1870, 5
        %v2622 = vsel %vm1188, %v2620, %v2621
        %v2623 = vrot.slane %v2621, 4
        %v2624 = vrot.slane %v1871, 5
        %v2625 = vsel %vm1188, %v2623, %v2624
        %v2626 = vrot.slane %v2550, 5
        %v2627 = vrot.slane %v2626, 4
        %v2628 = vrot.slane %v1873, 5
        %v2629 = vsel %vm1188, %v2627, %v2628
        %v2630 = vrot.slane %v2628, 4
        %v2631 = vrot.slane %v1874, 5
        %v2632 = vsel %vm1188, %v2630, %v2631
        %v2633 = vrot.slane %v2551, 5
        %v2634 = vrot.slane %v2633, 4
        %v2635 = vrot.slane %v1876, 5
        %v2636 = vsel %vm1188, %v2634, %v2635
        %v2637 = vrot.slane %v2635, 4
        %v2638 = vrot.slane %v1877, 5
        %v2639 = vsel %vm1188, %v2637, %v2638
        %v2640 = vrot.slane %v2552, 5
        %v2641 = vrot.slane %v2640, 4
        %v2642 = vrot.slane %v1879, 5
        %v2643 = vsel %vm1188, %v2641, %v2642
        %v2644 = vrot.slane %v2642, 4
        %v2645 = vrot.slane %v1880, 5
        %v2646 = vsel %vm1188, %v2644, %v2645
        %v2647 = vrot.slane %v2553, 5
        %v2648 = vrot.slane %v2647, 4
        %v2649 = vrot.slane %v1882, 5
        %v2650 = vsel %vm1188, %v2648, %v2649
        %v2651 = vrot.slane %v2649, 4
        %v2652 = vrot.slane %v1883, 5
        %v2653 = vsel %vm1188, %v2651, %v2652
        %v2654 = vrot.slane %v2554, 5
        %v2655 = vrot.slane %v2654, 4
        %v2656 = vrot.slane %v1885, 5
        %v2657 = vsel %vm1188, %v2655, %v2656
        %v2658 = vrot.slane %v2656, 4
        %v2659 = vrot.slane %v1886, 5
        %v2660 = vsel %vm1188, %v2658, %v2659
        %v2661 = vrot.slane %v2555, 5
        %v2662 = vrot.slane %v2661, 4
        %v2663 = vrot.slane %v1888, 5
        %v2664 = vsel %vm1188, %v2662, %v2663
        %v2665 = vrot.slane %v2663, 4
        %v2666 = vrot.slane %v1889, 5
        %v2667 = vsel %vm1188, %v2665, %v2666
        %v2668 = vrot.slane %v2556, 5
        %v2669 = vrot.slane %v2668, 4
        %v2670 = vrot.slane %v1891, 5
        %v2671 = vsel %vm1188, %v2669, %v2670
        %v2672 = vrot.slane %v2670, 4
        %v2673 = vrot.slane %v1892, 5
        %v2674 = vsel %vm1188, %v2672, %v2673
        %v2675 = vrot.slane %v2557, 5
        %v2676 = vrot.slane %v2675, 4
        %v2677 = vrot.slane %v1894, 5
        %v2678 = vsel %vm1188, %v2676, %v2677
        %v2679 = vrot.slane %v2677, 4
        %v2680 = vrot.slane %v1895, 5
        %v2681 = vsel %vm1188, %v2679, %v2680
        %v2682 = vrot.slane %v2558, 5
        %v2683 = vrot.slane %v2682, 4
        %v2684 = vrot.slane %v1897, 5
        %v2685 = vsel %vm1188, %v2683, %v2684
        %v2686 = vrot.slane %v2684, 4
        %v2687 = vrot.slane %v1898, 5
        %v2688 = vsel %vm1188, %v2686, %v2687
        %v2689 = vrot.slane %v2559, 5
        %v2690 = vrot.slane %v2689, 4
        %v2691 = vrot.slane %v1900, 5
        %v2692 = vsel %vm1188, %v2690, %v2691
        %v2693 = vrot.slane %v2691, 4
        %v2694 = vrot.slane %v1901, 5
        %v2695 = vsel %vm1188, %v2693, %v2694
        %v2696 = vrot.slane %v2560, 5
        %v2697 = vrot.slane %v2696, 4
        %v2698 = vrot.slane %v1903, 5
        %v2699 = vsel %vm1188, %v2697, %v2698
        %v2700 = vrot.slane %v2698, 4
        %v2701 = vrot.slane %v1904, 5
        %v2702 = vsel %vm1188, %v2700, %v2701
        %v2703 = vrot.slane %v2561, 5
        %v2704 = vrot.slane %v2703, 4
        %v2705 = vrot.slane %v1906, 5
        %v2706 = vsel %vm1188, %v2704, %v2705
        %v2707 = vrot.slane %v2705, 4
        %v2708 = vrot.slane %v1907, 5
        %v2709 = vsel %vm1188, %v2707, %v2708
        %v2710 = vrot.slane %v2562, 5
        %v2711 = vrot.slane %v2710, 4
        %v2712 = vrot.slane %v1909, 5
        %v2713 = vsel %vm1188, %v2711, %v2712
        %v2714 = vrot.slane %v2712, 4
        %v2715 = vrot.slane %v1910, 5
        %v2716 = vsel %vm1188, %v2714, %v2715
        %v2717 = vrot.slane %v2563, 5
        %v2718 = vrot.slane %v2717, 4
        %v2719 = vrot.slane %v1912, 5
        %v2720 = vsel %vm1188, %v2718, %v2719
        %v2721 = vrot.slane %v2719, 4
        %v2722 = vrot.slane %v1913, 5
        %v2723 = vsel %vm1188, %v2721, %v2722
        %s2724 = scalar_lea.vmem [#allocation2], 320
        %v2725 = vld [vmem:[%s2724] sm:$0xf]
        %v2726 = vld [vmem:[%s2724 + $0x4] sm:$0xf]
        %v2727 = vld [vmem:[%s2724 + $0x8] sm:$0xf]
        %v2728 = vld [vmem:[%s2724 + $0xc] sm:$0xf]
        %v2729 = vld [vmem:[%s2724 + $0x10] sm:$0xf]
        %v2730 = vld [vmem:[%s2724 + $0x14] sm:$0xf]
        %v2731 = vld [vmem:[%s2724 + $0x18] sm:$0xf]
        %v2732 = vld [vmem:[%s2724 + $0x1c] sm:$0xf]
        %v2733 = vld [vmem:[%s2724 + $0x20] sm:$0xf]
        %v2734 = vld [vmem:[%s2724 + $0x24] sm:$0xf]
        %v2735 = vld [vmem:[%s2724 + $0x28] sm:$0xf]
        %v2736 = vld [vmem:[%s2724 + $0x2c] sm:$0xf]
        %v2737 = vld [vmem:[%s2724 + $0x30] sm:$0xf]
        %v2738 = vld [vmem:[%s2724 + $0x34] sm:$0xf]
        %v2739 = vld [vmem:[%s2724 + $0x38] sm:$0xf]
        %v2740 = vld [vmem:[%s2724 + $0x3c] sm:$0xf]
        %v2741 = vunpack.c.l.b16 %v2615
        %v2742 = vunpack.c.l.b16 %v2618
        %v2743 = vunpack.c.l.b16 %v2622
        %v2744 = vunpack.c.l.b16 %v2625
        %v2745 = vunpack.c.l.b16 %v2629
        %v2746 = vunpack.c.l.b16 %v2632
        %v2747 = vunpack.c.l.b16 %v2636
        %v2748 = vunpack.c.l.b16 %v2639
        %v2749 = vunpack.c.l.b16 %v2643
        %v2750 = vunpack.c.l.b16 %v2646
        %v2751 = vunpack.c.l.b16 %v2650
        %v2752 = vunpack.c.l.b16 %v2653
        %v2753 = vunpack.c.l.b16 %v2657
        %v2754 = vunpack.c.l.b16 %v2660
        %v2755 = vunpack.c.l.b16 %v2664
        %v2756 = vunpack.c.l.b16 %v2667
        %v2757 = vunpack.c.l.b16 %v2671
        %v2758 = vunpack.c.l.b16 %v2674
        %v2759 = vunpack.c.l.b16 %v2678
        %v2760 = vunpack.c.l.b16 %v2681
        %v2761 = vunpack.c.l.b16 %v2685
        %v2762 = vunpack.c.l.b16 %v2688
        %v2763 = vunpack.c.l.b16 %v2692
        %v2764 = vunpack.c.l.b16 %v2695
        %v2765 = vunpack.c.l.b16 %v2699
        %v2766 = vunpack.c.l.b16 %v2702
        %v2767 = vunpack.c.l.b16 %v2706
        %v2768 = vunpack.c.l.b16 %v2709
        %v2769 = vunpack.c.l.b16 %v2713
        %v2770 = vunpack.c.l.b16 %v2716
        %v2771 = vunpack.c.l.b16 %v2720
        %v2772 = vunpack.c.l.b16 %v2723
        %v2773 = vpack.c.b16 %v2742, %v2741
        %v2774 = vpack.c.b16 %v2744, %v2743
        %v2775 = vpack.c.b16 %v2746, %v2745
        %v2776 = vpack.c.b16 %v2748, %v2747
        %v2777 = vpack.c.b16 %v2750, %v2749
        %v2778 = vpack.c.b16 %v2752, %v2751
        %v2779 = vpack.c.b16 %v2754, %v2753
        %v2780 = vpack.c.b16 %v2756, %v2755
        %v2781 = vpack.c.b16 %v2758, %v2757
        %v2782 = vpack.c.b16 %v2760, %v2759
        %v2783 = vpack.c.b16 %v2762, %v2761
        %v2784 = vpack.c.b16 %v2764, %v2763
        %v2785 = vpack.c.b16 %v2766, %v2765
        %v2786 = vpack.c.b16 %v2768, %v2767
        %v2787 = vpack.c.b16 %v2770, %v2769
        %v2788 = vpack.c.b16 %v2772, %v2771
        %v2821 = vunpack.c.l.b16 %v2725
        %v2822 = vunpack.c.l.b16 %v2726
        %v2823 = vunpack.c.l.b16 %v2727
        %v2824 = vunpack.c.l.b16 %v2728
        %v2825 = vunpack.c.l.b16 %v2729
        %v2826 = vunpack.c.l.b16 %v2730
        %v2827 = vunpack.c.l.b16 %v2731
        %v2828 = vunpack.c.l.b16 %v2732
        %v2829 = vunpack.c.l.b16 %v2733
        %v2830 = vunpack.c.l.b16 %v2734
        %v2831 = vunpack.c.l.b16 %v2735
        %v2832 = vunpack.c.l.b16 %v2736
        %v2833 = vunpack.c.l.b16 %v2737
        %v2834 = vunpack.c.l.b16 %v2738
        %v2835 = vunpack.c.l.b16 %v2739
        %v2836 = vunpack.c.l.b16 %v2740
        %v2837 = vpack.c.b16 %v2822, %v2821
        %v2838 = vpack.c.b16 %v2824, %v2823
        %v2839 = vpack.c.b16 %v2826, %v2825
        %v2840 = vpack.c.b16 %v2828, %v2827
        %v2841 = vpack.c.b16 %v2830, %v2829
        %v2842 = vpack.c.b16 %v2832, %v2831
        %v2843 = vpack.c.b16 %v2834, %v2833
        %v2844 = vpack.c.b16 %v2836, %v2835
        %2853 = vmatpush.bf16.msra.mxu0 %v2844
        %2854 = vmatpush.bf16.msra.mxu0 %v2843
        %2855 = vmatpush.bf16.msra.mxu0 %v2842
        %2856 = vmatpush.bf16.msra.mxu0 %v2841
        %2857 = vmatpush.bf16.msra.mxu0 %v2840
        %2858 = vmatpush.bf16.msra.mxu0 %v2839
        %2859 = vmatpush.bf16.msra.mxu0 %v2838
        %2860 = vmatpush.bf16.msra.mxu0 %v2837
        %2861 = vmatmul.bf16.gmra.mxu0 %v2773
        %v2862 = vpop.f32.mrf.mxu0
        %v2863 = vadd.f32 0.0, %v2862
        %v2864 = vpop.f32.mrf.mxu0
        %v2865 = vadd.f32 0.0, %v2864
        %2866 = vmatmul.bf16.gmra.mxu0 %v2774
        %v2867 = vpop.f32.mrf.mxu0
        %v2868 = vadd.f32 0.0, %v2867
        %v2869 = vpop.f32.mrf.mxu0
        %v2870 = vadd.f32 0.0, %v2869
        %2871 = vmatmul.bf16.gmra.mxu0 %v2775
        %v2872 = vpop.f32.mrf.mxu0
        %v2873 = vadd.f32 0.0, %v2872
        %v2874 = vpop.f32.mrf.mxu0
        %v2875 = vadd.f32 0.0, %v2874
        %2876 = vmatmul.bf16.gmra.mxu0 %v2776
        %v2877 = vpop.f32.mrf.mxu0
        %v2878 = vadd.f32 0.0, %v2877
        %v2879 = vpop.f32.mrf.mxu0
        %v2880 = vadd.f32 0.0, %v2879
        %2881 = vmatmul.bf16.gmra.mxu0 %v2777
        %v2882 = vpop.f32.mrf.mxu0
        %v2883 = vadd.f32 0.0, %v2882
        %v2884 = vpop.f32.mrf.mxu0
        %v2885 = vadd.f32 0.0, %v2884
        %2886 = vmatmul.bf16.gmra.mxu0 %v2778
        %v2887 = vpop.f32.mrf.mxu0
        %v2888 = vadd.f32 0.0, %v2887
        %v2889 = vpop.f32.mrf.mxu0
        %v2890 = vadd.f32 0.0, %v2889
        %2891 = vmatmul.bf16.gmra.mxu0 %v2779
        %v2892 = vpop.f32.mrf.mxu0
        %v2893 = vadd.f32 0.0, %v2892
        %v2894 = vpop.f32.mrf.mxu0
        %v2895 = vadd.f32 0.0, %v2894
        %2896 = vmatmul.bf16.gmra.mxu0 %v2780
        %v2897 = vpop.f32.mrf.mxu0
        %v2898 = vadd.f32 0.0, %v2897
        %v2899 = vpop.f32.mrf.mxu0
        %v2900 = vadd.f32 0.0, %v2899
        %2901 = vmatmul.bf16.gmra.mxu0 %v2781
        %v2902 = vpop.f32.mrf.mxu0
        %v2903 = vadd.f32 0.0, %v2902
        %v2904 = vpop.f32.mrf.mxu0
        %v2905 = vadd.f32 0.0, %v2904
        %2906 = vmatmul.bf16.gmra.mxu0 %v2782
        %v2907 = vpop.f32.mrf.mxu0
        %v2908 = vadd.f32 0.0, %v2907
        %v2909 = vpop.f32.mrf.mxu0
        %v2910 = vadd.f32 0.0, %v2909
        %2911 = vmatmul.bf16.gmra.mxu0 %v2783
        %v2912 = vpop.f32.mrf.mxu0
        %v2913 = vadd.f32 0.0, %v2912
        %v2914 = vpop.f32.mrf.mxu0
        %v2915 = vadd.f32 0.0, %v2914
        %2916 = vmatmul.bf16.gmra.mxu0 %v2784
        %v2917 = vpop.f32.mrf.mxu0
        %v2918 = vadd.f32 0.0, %v2917
        %v2919 = vpop.f32.mrf.mxu0
        %v2920 = vadd.f32 0.0, %v2919
        %2921 = vmatmul.bf16.gmra.mxu0 %v2785
        %v2922 = vpop.f32.mrf.mxu0
        %v2923 = vadd.f32 0.0, %v2922
        %v2924 = vpop.f32.mrf.mxu0
        %v2925 = vadd.f32 0.0, %v2924
        %2926 = vmatmul.bf16.gmra.mxu0 %v2786
        %v2927 = vpop.f32.mrf.mxu0
        %v2928 = vadd.f32 0.0, %v2927
        %v2929 = vpop.f32.mrf.mxu0
        %v2930 = vadd.f32 0.0, %v2929
        %2931 = vmatmul.bf16.gmra.mxu0 %v2787
        %v2932 = vpop.f32.mrf.mxu0
        %v2933 = vadd.f32 0.0, %v2932
        %v2934 = vpop.f32.mrf.mxu0
        %v2935 = vadd.f32 0.0, %v2934
        %2936 = vmatmul.bf16.gmra.mxu0 %v2788
        %v2937 = vpop.f32.mrf.mxu0
        %v2938 = vadd.f32 0.0, %v2937
        %v2939 = vpop.f32.mrf.mxu0
        %v2940 = vadd.f32 0.0, %v2939
        %2941 = vdwg.mxu0
        %v2942 = vadd.f32 %v2516, %v2863
        %v2943 = vadd.f32 %v2517, %v2865
        %v2944 = vadd.f32 %v2518, %v2868
        %v2945 = vadd.f32 %v2519, %v2870
        %v2946 = vadd.f32 %v2520, %v2873
        %v2947 = vadd.f32 %v2521, %v2875
        %v2948 = vadd.f32 %v2522, %v2878
        %v2949 = vadd.f32 %v2523, %v2880
        %v2950 = vadd.f32 %v2524, %v2883
        %v2951 = vadd.f32 %v2525, %v2885
        %v2952 = vadd.f32 %v2526, %v2888
        %v2953 = vadd.f32 %v2527, %v2890
        %v2954 = vadd.f32 %v2528, %v2893
        %v2955 = vadd.f32 %v2529, %v2895
        %v2956 = vadd.f32 %v2530, %v2898
        %v2957 = vadd.f32 %v2531, %v2900
        %v2958 = vadd.f32 %v2532, %v2903
        %v2959 = vadd.f32 %v2533, %v2905
        %v2960 = vadd.f32 %v2534, %v2908
        %v2961 = vadd.f32 %v2535, %v2910
        %v2962 = vadd.f32 %v2536, %v2913
        %v2963 = vadd.f32 %v2537, %v2915
        %v2964 = vadd.f32 %v2538, %v2918
        %v2965 = vadd.f32 %v2539, %v2920
        %v2966 = vadd.f32 %v2540, %v2923
        %v2967 = vadd.f32 %v2541, %v2925
        %v2968 = vadd.f32 %v2542, %v2928
        %v2969 = vadd.f32 %v2543, %v2930
        %v2970 = vadd.f32 %v2544, %v2933
        %v2971 = vadd.f32 %v2545, %v2935
        %v2972 = vadd.f32 %v2546, %v2938
        %v2973 = vadd.f32 %v2547, %v2940
        %s2974 = scalar_lea.vmem %s227, 24
        %v2975 = vld [vmem:[%s2974] sm:$0xf]
        %v2976 = vld [vmem:[%s2974 + $0x4] sm:$0xf]
        %v2977 = vld [vmem:[%s2974 + $0xc] sm:$0xf]
        %v2978 = vld [vmem:[%s2974 + $0x10] sm:$0xf]
        %v2979 = vld [vmem:[%s2974 + $0x18] sm:$0xf]
        %v2980 = vld [vmem:[%s2974 + $0x1c] sm:$0xf]
        %v2981 = vld [vmem:[%s2974 + $0x24] sm:$0xf]
        %v2982 = vld [vmem:[%s2974 + $0x28] sm:$0xf]
        %v2983 = vld [vmem:[%s2974 + $0x30] sm:$0xf]
        %v2984 = vld [vmem:[%s2974 + $0x34] sm:$0xf]
        %v2985 = vld [vmem:[%s2974 + $0x3c] sm:$0xf]
        %v2986 = vld [vmem:[%s2974 + $0x40] sm:$0xf]
        %v2987 = vld [vmem:[%s2974 + $0x48] sm:$0xf]
        %v2988 = vld [vmem:[%s2974 + $0x4c] sm:$0xf]
        %v2989 = vld [vmem:[%s2974 + $0x54] sm:$0xf]
        %v2990 = vld [vmem:[%s2974 + $0x58] sm:$0xf]
        %v2991 = vld [vmem:[%s2974 + $0x60] sm:$0xf]
        %v2992 = vld [vmem:[%s2974 + $0x64] sm:$0xf]
        %v2993 = vld [vmem:[%s2974 + $0x6c] sm:$0xf]
        %v2994 = vld [vmem:[%s2974 + $0x70] sm:$0xf]
        %v2995 = vld [vmem:[%s2974 + $0x78] sm:$0xf]
        %v2996 = vld [vmem:[%s2974 + $0x7c] sm:$0xf]
        %v2997 = vld [vmem:[%s2974 + $0x84] sm:$0xf]
        %v2998 = vld [vmem:[%s2974 + $0x88] sm:$0xf]
        %v2999 = vld [vmem:[%s2974 + $0x90] sm:$0xf]
        %v3000 = vld [vmem:[%s2974 + $0x94] sm:$0xf]
        %v3001 = vld [vmem:[%s2974 + $0x9c] sm:$0xf]
        %v3002 = vld [vmem:[%s2974 + $0xa0] sm:$0xf]
        %v3003 = vld [vmem:[%s2974 + $0xa8] sm:$0xf]
        %v3004 = vld [vmem:[%s2974 + $0xac] sm:$0xf]
        %v3005 = vld [vmem:[%s2974 + $0xb4] sm:$0xf]
        %v3006 = vld [vmem:[%s2974 + $0xb8] sm:$0xf]
        %s3007 = scalar_lea.vmem [#allocation2], 384
        %v3008 = vld [vmem:[%s3007] sm:$0xf]
        %v3009 = vld [vmem:[%s3007 + $0x4] sm:$0xf]
        %v3010 = vld [vmem:[%s3007 + $0x8] sm:$0xf]
        %v3011 = vld [vmem:[%s3007 + $0xc] sm:$0xf]
        %v3012 = vld [vmem:[%s3007 + $0x10] sm:$0xf]
        %v3013 = vld [vmem:[%s3007 + $0x14] sm:$0xf]
        %v3014 = vld [vmem:[%s3007 + $0x18] sm:$0xf]
        %v3015 = vld [vmem:[%s3007 + $0x1c] sm:$0xf]
        %v3016 = vld [vmem:[%s3007 + $0x20] sm:$0xf]
        %v3017 = vld [vmem:[%s3007 + $0x24] sm:$0xf]
        %v3018 = vld [vmem:[%s3007 + $0x28] sm:$0xf]
        %v3019 = vld [vmem:[%s3007 + $0x2c] sm:$0xf]
        %v3020 = vld [vmem:[%s3007 + $0x30] sm:$0xf]
        %v3021 = vld [vmem:[%s3007 + $0x34] sm:$0xf]
        %v3022 = vld [vmem:[%s3007 + $0x38] sm:$0xf]
        %v3023 = vld [vmem:[%s3007 + $0x3c] sm:$0xf]
        %v3056 = vunpack.c.l.b16 %v2975
        %v3057 = vunpack.c.l.b16 %v2976
        %v3058 = vunpack.c.l.b16 %v2977
        %v3059 = vunpack.c.l.b16 %v2978
        %v3060 = vunpack.c.l.b16 %v2979
        %v3061 = vunpack.c.l.b16 %v2980
        %v3062 = vunpack.c.l.b16 %v2981
        %v3063 = vunpack.c.l.b16 %v2982
        %v3064 = vunpack.c.l.b16 %v2983
        %v3065 = vunpack.c.l.b16 %v2984
        %v3066 = vunpack.c.l.b16 %v2985
        %v3067 = vunpack.c.l.b16 %v2986
        %v3068 = vunpack.c.l.b16 %v2987
        %v3069 = vunpack.c.l.b16 %v2988
        %v3070 = vunpack.c.l.b16 %v2989
        %v3071 = vunpack.c.l.b16 %v2990
        %v3072 = vunpack.c.l.b16 %v2991
        %v3073 = vunpack.c.l.b16 %v2992
        %v3074 = vunpack.c.l.b16 %v2993
        %v3075 = vunpack.c.l.b16 %v2994
        %v3076 = vunpack.c.l.b16 %v2995
        %v3077 = vunpack.c.l.b16 %v2996
        %v3078 = vunpack.c.l.b16 %v2997
        %v3079 = vunpack.c.l.b16 %v2998
        %v3080 = vunpack.c.l.b16 %v2999
        %v3081 = vunpack.c.l.b16 %v3000
        %v3082 = vunpack.c.l.b16 %v3001
        %v3083 = vunpack.c.l.b16 %v3002
        %v3084 = vunpack.c.l.b16 %v3003
        %v3085 = vunpack.c.l.b16 %v3004
        %v3086 = vunpack.c.l.b16 %v3005
        %v3087 = vunpack.c.l.b16 %v3006
        %v3088 = vpack.c.b16 %v3057, %v3056
        %v3089 = vpack.c.b16 %v3059, %v3058
        %v3090 = vpack.c.b16 %v3061, %v3060
        %v3091 = vpack.c.b16 %v3063, %v3062
        %v3092 = vpack.c.b16 %v3065, %v3064
        %v3093 = vpack.c.b16 %v3067, %v3066
        %v3094 = vpack.c.b16 %v3069, %v3068
        %v3095 = vpack.c.b16 %v3071, %v3070
        %v3096 = vpack.c.b16 %v3073, %v3072
        %v3097 = vpack.c.b16 %v3075, %v3074
        %v3098 = vpack.c.b16 %v3077, %v3076
        %v3099 = vpack.c.b16 %v3079, %v3078
        %v3100 = vpack.c.b16 %v3081, %v3080
        %v3101 = vpack.c.b16 %v3083, %v3082
        %v3102 = vpack.c.b16 %v3085, %v3084
        %v3103 = vpack.c.b16 %v3087, %v3086
        %v3136 = vunpack.c.l.b16 %v3008
        %v3137 = vunpack.c.l.b16 %v3009
        %v3138 = vunpack.c.l.b16 %v3010
        %v3139 = vunpack.c.l.b16 %v3011
        %v3140 = vunpack.c.l.b16 %v3012
        %v3141 = vunpack.c.l.b16 %v3013
        %v3142 = vunpack.c.l.b16 %v3014
        %v3143 = vunpack.c.l.b16 %v3015
        %v3144 = vunpack.c.l.b16 %v3016
        %v3145 = vunpack.c.l.b16 %v3017
        %v3146 = vunpack.c.l.b16 %v3018
        %v3147 = vunpack.c.l.b16 %v3019
        %v3148 = vunpack.c.l.b16 %v3020
        %v3149 = vunpack.c.l.b16 %v3021
        %v3150 = vunpack.c.l.b16 %v3022
        %v3151 = vunpack.c.l.b16 %v3023
        %v3152 = vpack.c.b16 %v3137, %v3136
        %v3153 = vpack.c.b16 %v3139, %v3138
        %v3154 = vpack.c.b16 %v3141, %v3140
        %v3155 = vpack.c.b16 %v3143, %v3142
        %v3156 = vpack.c.b16 %v3145, %v3144
        %v3157 = vpack.c.b16 %v3147, %v3146
        %v3158 = vpack.c.b16 %v3149, %v3148
        %v3159 = vpack.c.b16 %v3151, %v3150
        %3168 = vmatpush.bf16.msra.mxu0 %v3159
        %3169 = vmatpush.bf16.msra.mxu0 %v3158
        %3170 = vmatpush.bf16.msra.mxu0 %v3157
        %3171 = vmatpush.bf16.msra.mxu0 %v3156
        %3172 = vmatpush.bf16.msra.mxu0 %v3155
        %3173 = vmatpush.bf16.msra.mxu0 %v3154
        %3174 = vmatpush.bf16.msra.mxu0 %v3153
        %3175 = vmatpush.bf16.msra.mxu0 %v3152
        %3176 = vmatmul.bf16.gmra.mxu0 %v3088
        %v3177 = vpop.f32.mrf.mxu0
        %v3178 = vadd.f32 0.0, %v3177
        %v3179 = vpop.f32.mrf.mxu0
        %v3180 = vadd.f32 0.0, %v3179
        %3181 = vmatmul.bf16.gmra.mxu0 %v3089
        %v3182 = vpop.f32.mrf.mxu0
        %v3183 = vadd.f32 0.0, %v3182
        %v3184 = vpop.f32.mrf.mxu0
        %v3185 = vadd.f32 0.0, %v3184
        %3186 = vmatmul.bf16.gmra.mxu0 %v3090
        %v3187 = vpop.f32.mrf.mxu0
        %v3188 = vadd.f32 0.0, %v3187
        %v3189 = vpop.f32.mrf.mxu0
        %v3190 = vadd.f32 0.0, %v3189
        %3191 = vmatmul.bf16.gmra.mxu0 %v3091
        %v3192 = vpop.f32.mrf.mxu0
        %v3193 = vadd.f32 0.0, %v3192
        %v3194 = vpop.f32.mrf.mxu0
        %v3195 = vadd.f32 0.0, %v3194
        %3196 = vmatmul.bf16.gmra.mxu0 %v3092
        %v3197 = vpop.f32.mrf.mxu0
        %v3198 = vadd.f32 0.0, %v3197
        %v3199 = vpop.f32.mrf.mxu0
        %v3200 = vadd.f32 0.0, %v3199
        %3201 = vmatmul.bf16.gmra.mxu0 %v3093
        %v3202 = vpop.f32.mrf.mxu0
        %v3203 = vadd.f32 0.0, %v3202
        %v3204 = vpop.f32.mrf.mxu0
        %v3205 = vadd.f32 0.0, %v3204
        %3206 = vmatmul.bf16.gmra.mxu0 %v3094
        %v3207 = vpop.f32.mrf.mxu0
        %v3208 = vadd.f32 0.0, %v3207
        %v3209 = vpop.f32.mrf.mxu0
        %v3210 = vadd.f32 0.0, %v3209
        %3211 = vmatmul.bf16.gmra.mxu0 %v3095
        %v3212 = vpop.f32.mrf.mxu0
        %v3213 = vadd.f32 0.0, %v3212
        %v3214 = vpop.f32.mrf.mxu0
        %v3215 = vadd.f32 0.0, %v3214
        %3216 = vmatmul.bf16.gmra.mxu0 %v3096
        %v3217 = vpop.f32.mrf.mxu0
        %v3218 = vadd.f32 0.0, %v3217
        %v3219 = vpop.f32.mrf.mxu0
        %v3220 = vadd.f32 0.0, %v3219
        %3221 = vmatmul.bf16.gmra.mxu0 %v3097
        %v3222 = vpop.f32.mrf.mxu0
        %v3223 = vadd.f32 0.0, %v3222
        %v3224 = vpop.f32.mrf.mxu0
        %v3225 = vadd.f32 0.0, %v3224
        %3226 = vmatmul.bf16.gmra.mxu0 %v3098
        %v3227 = vpop.f32.mrf.mxu0
        %v3228 = vadd.f32 0.0, %v3227
        %v3229 = vpop.f32.mrf.mxu0
        %v3230 = vadd.f32 0.0, %v3229
        %3231 = vmatmul.bf16.gmra.mxu0 %v3099
        %v3232 = vpop.f32.mrf.mxu0
        %v3233 = vadd.f32 0.0, %v3232
        %v3234 = vpop.f32.mrf.mxu0
        %v3235 = vadd.f32 0.0, %v3234
        %3236 = vmatmul.bf16.gmra.mxu0 %v3100
        %v3237 = vpop.f32.mrf.mxu0
        %v3238 = vadd.f32 0.0, %v3237
        %v3239 = vpop.f32.mrf.mxu0
        %v3240 = vadd.f32 0.0, %v3239
        %3241 = vmatmul.bf16.gmra.mxu0 %v3101
        %v3242 = vpop.f32.mrf.mxu0
        %v3243 = vadd.f32 0.0, %v3242
        %v3244 = vpop.f32.mrf.mxu0
        %v3245 = vadd.f32 0.0, %v3244
        %3246 = vmatmul.bf16.gmra.mxu0 %v3102
        %v3247 = vpop.f32.mrf.mxu0
        %v3248 = vadd.f32 0.0, %v3247
        %v3249 = vpop.f32.mrf.mxu0
        %v3250 = vadd.f32 0.0, %v3249
        %3251 = vmatmul.bf16.gmra.mxu0 %v3103
        %v3252 = vpop.f32.mrf.mxu0
        %v3253 = vadd.f32 0.0, %v3252
        %v3254 = vpop.f32.mrf.mxu0
        %v3255 = vadd.f32 0.0, %v3254
        %3256 = vdwg.mxu0
        %v3257 = vadd.f32 %v2942, %v3178
        %v3258 = vadd.f32 %v2943, %v3180
        %v3259 = vadd.f32 %v2944, %v3183
        %v3260 = vadd.f32 %v2945, %v3185
        %v3261 = vadd.f32 %v2946, %v3188
        %v3262 = vadd.f32 %v2947, %v3190
        %v3263 = vadd.f32 %v2948, %v3193
        %v3264 = vadd.f32 %v2949, %v3195
        %v3265 = vadd.f32 %v2950, %v3198
        %v3266 = vadd.f32 %v2951, %v3200
        %v3267 = vadd.f32 %v2952, %v3203
        %v3268 = vadd.f32 %v2953, %v3205
        %v3269 = vadd.f32 %v2954, %v3208
        %v3270 = vadd.f32 %v2955, %v3210
        %v3271 = vadd.f32 %v2956, %v3213
        %v3272 = vadd.f32 %v2957, %v3215
        %v3273 = vadd.f32 %v2958, %v3218
        %v3274 = vadd.f32 %v2959, %v3220
        %v3275 = vadd.f32 %v2960, %v3223
        %v3276 = vadd.f32 %v2961, %v3225
        %v3277 = vadd.f32 %v2962, %v3228
        %v3278 = vadd.f32 %v2963, %v3230
        %v3279 = vadd.f32 %v2964, %v3233
        %v3280 = vadd.f32 %v2965, %v3235
        %v3281 = vadd.f32 %v2966, %v3238
        %v3282 = vadd.f32 %v2967, %v3240
        %v3283 = vadd.f32 %v2968, %v3243
        %v3284 = vadd.f32 %v2969, %v3245
        %v3285 = vadd.f32 %v2970, %v3248
        %v3286 = vadd.f32 %v2971, %v3250
        %v3287 = vadd.f32 %v2972, %v3253
        %v3288 = vadd.f32 %v2973, %v3255
        %v3289 = vld [vmem:[%s2974] sm:$0xf]
        %v3290 = vld [vmem:[%s2974 + $0x4] sm:$0xf]
        %v3291 = vld [vmem:[%s2974 + $0x8] sm:$0x1]
        %v3292 = vld [vmem:[%s2974 + $0xc] sm:$0xf]
        %v3293 = vld [vmem:[%s2974 + $0x10] sm:$0xf]
        %v3294 = vld [vmem:[%s2974 + $0x14] sm:$0x1]
        %v3295 = vld [vmem:[%s2974 + $0x18] sm:$0xf]
        %v3296 = vld [vmem:[%s2974 + $0x1c] sm:$0xf]
        %v3297 = vld [vmem:[%s2974 + $0x20] sm:$0x1]
        %v3298 = vld [vmem:[%s2974 + $0x24] sm:$0xf]
        %v3299 = vld [vmem:[%s2974 + $0x28] sm:$0xf]
        %v3300 = vld [vmem:[%s2974 + $0x2c] sm:$0x1]
        %v3301 = vld [vmem:[%s2974 + $0x30] sm:$0xf]
        %v3302 = vld [vmem:[%s2974 + $0x34] sm:$0xf]
        %v3303 = vld [vmem:[%s2974 + $0x38] sm:$0x1]
        %v3304 = vld [vmem:[%s2974 + $0x3c] sm:$0xf]
        %v3305 = vld [vmem:[%s2974 + $0x40] sm:$0xf]
        %v3306 = vld [vmem:[%s2974 + $0x44] sm:$0x1]
        %v3307 = vld [vmem:[%s2974 + $0x48] sm:$0xf]
        %v3308 = vld [vmem:[%s2974 + $0x4c] sm:$0xf]
        %v3309 = vld [vmem:[%s2974 + $0x50] sm:$0x1]
        %v3310 = vld [vmem:[%s2974 + $0x54] sm:$0xf]
        %v3311 = vld [vmem:[%s2974 + $0x58] sm:$0xf]
        %v3312 = vld [vmem:[%s2974 + $0x5c] sm:$0x1]
        %v3313 = vld [vmem:[%s2974 + $0x60] sm:$0xf]
        %v3314 = vld [vmem:[%s2974 + $0x64] sm:$0xf]
        %v3315 = vld [vmem:[%s2974 + $0x68] sm:$0x1]
        %v3316 = vld [vmem:[%s2974 + $0x6c] sm:$0xf]
        %v3317 = vld [vmem:[%s2974 + $0x70] sm:$0xf]
        %v3318 = vld [vmem:[%s2974 + $0x74] sm:$0x1]
        %v3319 = vld [vmem:[%s2974 + $0x78] sm:$0xf]
        %v3320 = vld [vmem:[%s2974 + $0x7c] sm:$0xf]
        %v3321 = vld [vmem:[%s2974 + $0x80] sm:$0x1]
        %v3322 = vld [vmem:[%s2974 + $0x84] sm:$0xf]
        %v3323 = vld [vmem:[%s2974 + $0x88] sm:$0xf]
        %v3324 = vld [vmem:[%s2974 + $0x8c] sm:$0x1]
        %v3325 = vld [vmem:[%s2974 + $0x90] sm:$0xf]
        %v3326 = vld [vmem:[%s2974 + $0x94] sm:$0xf]
        %v3327 = vld [vmem:[%s2974 + $0x98] sm:$0x1]
        %v3328 = vld [vmem:[%s2974 + $0x9c] sm:$0xf]
        %v3329 = vld [vmem:[%s2974 + $0xa0] sm:$0xf]
        %v3330 = vld [vmem:[%s2974 + $0xa4] sm:$0x1]
        %v3331 = vld [vmem:[%s2974 + $0xa8] sm:$0xf]
        %v3332 = vld [vmem:[%s2974 + $0xac] sm:$0xf]
        %v3333 = vld [vmem:[%s2974 + $0xb0] sm:$0x1]
        %v3334 = vld [vmem:[%s2974 + $0xb4] sm:$0xf]
        %v3335 = vld [vmem:[%s2974 + $0xb8] sm:$0xf]
        %v3336 = vld [vmem:[%s2974 + $0xbc] sm:$0x1]
        %v3338 = vshrl.u32 %v3289, 16
        %v3340 = vrot.slane %v3338, 4
        %v3341 = vshll.u32 %v3289, 16
        %v3343 = vrot.slane %v3341, 5
        %v3344 = vor.u32 %v3340, %v3343
        %v3345 = vrot.slane %v3344, 4
        %v3347 = vshll.u32 %v3290, 16
        %v3349 = vrot.slane %v3347, 5
        %v3350 = vsel %vm302, %v3345, %v3349
        %v3351 = vshrl.u32 %v3290, 16
        %v3353 = vrot.slane %v3351, 4
        %v3354 = vor.u32 %v3353, %v3349
        %v3355 = vrot.slane %v3354, 4
        %v3357 = vshll.u32 %v3291, 16
        %v3359 = vrot.slane %v3357, 5
        %v3360 = vsel %vm302, %v3355, %v3359
        %v3362 = vshrl.u32 %v3292, 16
        %v3364 = vrot.slane %v3362, 4
        %v3365 = vshll.u32 %v3292, 16
        %v3367 = vrot.slane %v3365, 5
        %v3368 = vor.u32 %v3364, %v3367
        %v3369 = vrot.slane %v3368, 4
        %v3371 = vshll.u32 %v3293, 16
        %v3373 = vrot.slane %v3371, 5
        %v3374 = vsel %vm302, %v3369, %v3373
        %v3375 = vshrl.u32 %v3293, 16
        %v3377 = vrot.slane %v3375, 4
        %v3378 = vor.u32 %v3377, %v3373
        %v3379 = vrot.slane %v3378, 4
        %v3381 = vshll.u32 %v3294, 16
        %v3383 = vrot.slane %v3381, 5
        %v3384 = vsel %vm302, %v3379, %v3383
        %v3386 = vshrl.u32 %v3295, 16
        %v3388 = vrot.slane %v3386, 4
        %v3389 = vshll.u32 %v3295, 16
        %v3391 = vrot.slane %v3389, 5
        %v3392 = vor.u32 %v3388, %v3391
        %v3393 = vrot.slane %v3392, 4
        %v3395 = vshll.u32 %v3296, 16
        %v3397 = vrot.slane %v3395, 5
        %v3398 = vsel %vm302, %v3393, %v3397
        %v3399 = vshrl.u32 %v3296, 16
        %v3401 = vrot.slane %v3399, 4
        %v3402 = vor.u32 %v3401, %v3397
        %v3403 = vrot.slane %v3402, 4
        %v3405 = vshll.u32 %v3297, 16
        %v3407 = vrot.slane %v3405, 5
        %v3408 = vsel %vm302, %v3403, %v3407
        %v3410 = vshrl.u32 %v3298, 16
        %v3412 = vrot.slane %v3410, 4
        %v3413 = vshll.u32 %v3298, 16
        %v3415 = vrot.slane %v3413, 5
        %v3416 = vor.u32 %v3412, %v3415
        %v3417 = vrot.slane %v3416, 4
        %v3419 = vshll.u32 %v3299, 16
        %v3421 = vrot.slane %v3419, 5
        %v3422 = vsel %vm302, %v3417, %v3421
        %v3423 = vshrl.u32 %v3299, 16
        %v3425 = vrot.slane %v3423, 4
        %v3426 = vor.u32 %v3425, %v3421
        %v3427 = vrot.slane %v3426, 4
        %v3429 = vshll.u32 %v3300, 16
        %v3431 = vrot.slane %v3429, 5
        %v3432 = vsel %vm302, %v3427, %v3431
        %v3434 = vshrl.u32 %v3301, 16
        %v3436 = vrot.slane %v3434, 4
        %v3437 = vshll.u32 %v3301, 16
        %v3439 = vrot.slane %v3437, 5
        %v3440 = vor.u32 %v3436, %v3439
        %v3441 = vrot.slane %v3440, 4
        %v3443 = vshll.u32 %v3302, 16
        %v3445 = vrot.slane %v3443, 5
        %v3446 = vsel %vm302, %v3441, %v3445
        %v3447 = vshrl.u32 %v3302, 16
        %v3449 = vrot.slane %v3447, 4
        %v3450 = vor.u32 %v3449, %v3445
        %v3451 = vrot.slane %v3450, 4
        %v3453 = vshll.u32 %v3303, 16
        %v3455 = vrot.slane %v3453, 5
        %v3456 = vsel %vm302, %v3451, %v3455
        %v3458 = vshrl.u32 %v3304, 16
        %v3460 = vrot.slane %v3458, 4
        %v3461 = vshll.u32 %v3304, 16
        %v3463 = vrot.slane %v3461, 5
        %v3464 = vor.u32 %v3460, %v3463
        %v3465 = vrot.slane %v3464, 4
        %v3467 = vshll.u32 %v3305, 16
        %v3469 = vrot.slane %v3467, 5
        %v3470 = vsel %vm302, %v3465, %v3469
        %v3471 = vshrl.u32 %v3305, 16
        %v3473 = vrot.slane %v3471, 4
        %v3474 = vor.u32 %v3473, %v3469
        %v3475 = vrot.slane %v3474, 4
        %v3477 = vshll.u32 %v3306, 16
        %v3479 = vrot.slane %v3477, 5
        %v3480 = vsel %vm302, %v3475, %v3479
        %v3482 = vshrl.u32 %v3307, 16
        %v3484 = vrot.slane %v3482, 4
        %v3485 = vshll.u32 %v3307, 16
        %v3487 = vrot.slane %v3485, 5
        %v3488 = vor.u32 %v3484, %v3487
        %v3489 = vrot.slane %v3488, 4
        %v3491 = vshll.u32 %v3308, 16
        %v3493 = vrot.slane %v3491, 5
        %v3494 = vsel %vm302, %v3489, %v3493
        %v3495 = vshrl.u32 %v3308, 16
        %v3497 = vrot.slane %v3495, 4
        %v3498 = vor.u32 %v3497, %v3493
        %v3499 = vrot.slane %v3498, 4
        %v3501 = vshll.u32 %v3309, 16
        %v3503 = vrot.slane %v3501, 5
        %v3504 = vsel %vm302, %v3499, %v3503
        %v3506 = vshrl.u32 %v3310, 16
        %v3508 = vrot.slane %v3506, 4
        %v3509 = vshll.u32 %v3310, 16
        %v3511 = vrot.slane %v3509, 5
        %v3512 = vor.u32 %v3508, %v3511
        %v3513 = vrot.slane %v3512, 4
        %v3515 = vshll.u32 %v3311, 16
        %v3517 = vrot.slane %v3515, 5
        %v3518 = vsel %vm302, %v3513, %v3517
        %v3519 = vshrl.u32 %v3311, 16
        %v3521 = vrot.slane %v3519, 4
        %v3522 = vor.u32 %v3521, %v3517
        %v3523 = vrot.slane %v3522, 4
        %v3525 = vshll.u32 %v3312, 16
        %v3527 = vrot.slane %v3525, 5
        %v3528 = vsel %vm302, %v3523, %v3527
        %v3530 = vshrl.u32 %v3313, 16
        %v3532 = vrot.slane %v3530, 4
        %v3533 = vshll.u32 %v3313, 16
        %v3535 = vrot.slane %v3533, 5
        %v3536 = vor.u32 %v3532, %v3535
        %v3537 = vrot.slane %v3536, 4
        %v3539 = vshll.u32 %v3314, 16
        %v3541 = vrot.slane %v3539, 5
        %v3542 = vsel %vm302, %v3537, %v3541
        %v3543 = vshrl.u32 %v3314, 16
        %v3545 = vrot.slane %v3543, 4
        %v3546 = vor.u32 %v3545, %v3541
        %v3547 = vrot.slane %v3546, 4
        %v3549 = vshll.u32 %v3315, 16
        %v3551 = vrot.slane %v3549, 5
        %v3552 = vsel %vm302, %v3547, %v3551
        %v3554 = vshrl.u32 %v3316, 16
        %v3556 = vrot.slane %v3554, 4
        %v3557 = vshll.u32 %v3316, 16
        %v3559 = vrot.slane %v3557, 5
        %v3560 = vor.u32 %v3556, %v3559
        %v3561 = vrot.slane %v3560, 4
        %v3563 = vshll.u32 %v3317, 16
        %v3565 = vrot.slane %v3563, 5
        %v3566 = vsel %vm302, %v3561, %v3565
        %v3567 = vshrl.u32 %v3317, 16
        %v3569 = vrot.slane %v3567, 4
        %v3570 = vor.u32 %v3569, %v3565
        %v3571 = vrot.slane %v3570, 4
        %v3573 = vshll.u32 %v3318, 16
        %v3575 = vrot.slane %v3573, 5
        %v3576 = vsel %vm302, %v3571, %v3575
        %v3578 = vshrl.u32 %v3319, 16
        %v3580 = vrot.slane %v3578, 4
        %v3581 = vshll.u32 %v3319, 16
        %v3583 = vrot.slane %v3581, 5
        %v3584 = vor.u32 %v3580, %v3583
        %v3585 = vrot.slane %v3584, 4
        %v3587 = vshll.u32 %v3320, 16
        %v3589 = vrot.slane %v3587, 5
        %v3590 = vsel %vm302, %v3585, %v3589
        %v3591 = vshrl.u32 %v3320, 16
        %v3593 = vrot.slane %v3591, 4
        %v3594 = vor.u32 %v3593, %v3589
        %v3595 = vrot.slane %v3594, 4
        %v3597 = vshll.u32 %v3321, 16
        %v3599 = vrot.slane %v3597, 5
        %v3600 = vsel %vm302, %v3595, %v3599
        %v3602 = vshrl.u32 %v3322, 16
        %v3604 = vrot.slane %v3602, 4
        %v3605 = vshll.u32 %v3322, 16
        %v3607 = vrot.slane %v3605, 5
        %v3608 = vor.u32 %v3604, %v3607
        %v3609 = vrot.slane %v3608, 4
        %v3611 = vshll.u32 %v3323, 16
        %v3613 = vrot.slane %v3611, 5
        %v3614 = vsel %vm302, %v3609, %v3613
        %v3615 = vshrl.u32 %v3323, 16
        %v3617 = vrot.slane %v3615, 4
        %v3618 = vor.u32 %v3617, %v3613
        %v3619 = vrot.slane %v3618, 4
        %v3621 = vshll.u32 %v3324, 16
        %v3623 = vrot.slane %v3621, 5
        %v3624 = vsel %vm302, %v3619, %v3623
        %v3626 = vshrl.u32 %v3325, 16
        %v3628 = vrot.slane %v3626, 4
        %v3629 = vshll.u32 %v3325, 16
        %v3631 = vrot.slane %v3629, 5
        %v3632 = vor.u32 %v3628, %v3631
        %v3633 = vrot.slane %v3632, 4
        %v3635 = vshll.u32 %v3326, 16
        %v3637 = vrot.slane %v3635, 5
        %v3638 = vsel %vm302, %v3633, %v3637
        %v3639 = vshrl.u32 %v3326, 16
        %v3641 = vrot.slane %v3639, 4
        %v3642 = vor.u32 %v3641, %v3637
        %v3643 = vrot.slane %v3642, 4
        %v3645 = vshll.u32 %v3327, 16
        %v3647 = vrot.slane %v3645, 5
        %v3648 = vsel %vm302, %v3643, %v3647
        %v3650 = vshrl.u32 %v3328, 16
        %v3652 = vrot.slane %v3650, 4
        %v3653 = vshll.u32 %v3328, 16
        %v3655 = vrot.slane %v3653, 5
        %v3656 = vor.u32 %v3652, %v3655
        %v3657 = vrot.slane %v3656, 4
        %v3659 = vshll.u32 %v3329, 16
        %v3661 = vrot.slane %v3659, 5
        %v3662 = vsel %vm302, %v3657, %v3661
        %v3663 = vshrl.u32 %v3329, 16
        %v3665 = vrot.slane %v3663, 4
        %v3666 = vor.u32 %v3665, %v3661
        %v3667 = vrot.slane %v3666, 4
        %v3669 = vshll.u32 %v3330, 16
        %v3671 = vrot.slane %v3669, 5
        %v3672 = vsel %vm302, %v3667, %v3671
        %v3674 = vshrl.u32 %v3331, 16
        %v3676 = vrot.slane %v3674, 4
        %v3677 = vshll.u32 %v3331, 16
        %v3679 = vrot.slane %v3677, 5
        %v3680 = vor.u32 %v3676, %v3679
        %v3681 = vrot.slane %v3680, 4
        %v3683 = vshll.u32 %v3332, 16
        %v3685 = vrot.slane %v3683, 5
        %v3686 = vsel %vm302, %v3681, %v3685
        %v3687 = vshrl.u32 %v3332, 16
        %v3689 = vrot.slane %v3687, 4
        %v3690 = vor.u32 %v3689, %v3685
        %v3691 = vrot.slane %v3690, 4
        %v3693 = vshll.u32 %v3333, 16
        %v3695 = vrot.slane %v3693, 5
        %v3696 = vsel %vm302, %v3691, %v3695
        %v3698 = vshrl.u32 %v3334, 16
        %v3700 = vrot.slane %v3698, 4
        %v3701 = vshll.u32 %v3334, 16
        %v3703 = vrot.slane %v3701, 5
        %v3704 = vor.u32 %v3700, %v3703
        %v3705 = vrot.slane %v3704, 4
        %v3707 = vshll.u32 %v3335, 16
        %v3709 = vrot.slane %v3707, 5
        %v3710 = vsel %vm302, %v3705, %v3709
        %v3711 = vshrl.u32 %v3335, 16
        %v3713 = vrot.slane %v3711, 4
        %v3714 = vor.u32 %v3713, %v3709
        %v3715 = vrot.slane %v3714, 4
        %v3717 = vshll.u32 %v3336, 16
        %v3719 = vrot.slane %v3717, 5
        %v3720 = vsel %vm302, %v3715, %v3719
        %s3721 = scalar_lea.vmem [#allocation2], 448
        %v3722 = vld [vmem:[%s3721] sm:$0xf]
        %v3723 = vld [vmem:[%s3721 + $0x4] sm:$0xf]
        %v3724 = vld [vmem:[%s3721 + $0x8] sm:$0xf]
        %v3725 = vld [vmem:[%s3721 + $0xc] sm:$0xf]
        %v3726 = vld [vmem:[%s3721 + $0x10] sm:$0xf]
        %v3727 = vld [vmem:[%s3721 + $0x14] sm:$0xf]
        %v3728 = vld [vmem:[%s3721 + $0x18] sm:$0xf]
        %v3729 = vld [vmem:[%s3721 + $0x1c] sm:$0xf]
        %v3730 = vld [vmem:[%s3721 + $0x20] sm:$0xf]
        %v3731 = vld [vmem:[%s3721 + $0x24] sm:$0xf]
        %v3732 = vld [vmem:[%s3721 + $0x28] sm:$0xf]
        %v3733 = vld [vmem:[%s3721 + $0x2c] sm:$0xf]
        %v3734 = vld [vmem:[%s3721 + $0x30] sm:$0xf]
        %v3735 = vld [vmem:[%s3721 + $0x34] sm:$0xf]
        %v3736 = vld [vmem:[%s3721 + $0x38] sm:$0xf]
        %v3737 = vld [vmem:[%s3721 + $0x3c] sm:$0xf]
        %v3738 = vunpack.c.l.b16 %v3350
        %v3739 = vunpack.c.l.b16 %v3360
        %v3740 = vunpack.c.l.b16 %v3374
        %v3741 = vunpack.c.l.b16 %v3384
        %v3742 = vunpack.c.l.b16 %v3398
        %v3743 = vunpack.c.l.b16 %v3408
        %v3744 = vunpack.c.l.b16 %v3422
        %v3745 = vunpack.c.l.b16 %v3432
        %v3746 = vunpack.c.l.b16 %v3446
        %v3747 = vunpack.c.l.b16 %v3456
        %v3748 = vunpack.c.l.b16 %v3470
        %v3749 = vunpack.c.l.b16 %v3480
        %v3750 = vunpack.c.l.b16 %v3494
        %v3751 = vunpack.c.l.b16 %v3504
        %v3752 = vunpack.c.l.b16 %v3518
        %v3753 = vunpack.c.l.b16 %v3528
        %v3754 = vunpack.c.l.b16 %v3542
        %v3755 = vunpack.c.l.b16 %v3552
        %v3756 = vunpack.c.l.b16 %v3566
        %v3757 = vunpack.c.l.b16 %v3576
        %v3758 = vunpack.c.l.b16 %v3590
        %v3759 = vunpack.c.l.b16 %v3600
        %v3760 = vunpack.c.l.b16 %v3614
        %v3761 = vunpack.c.l.b16 %v3624
        %v3762 = vunpack.c.l.b16 %v3638
        %v3763 = vunpack.c.l.b16 %v3648
        %v3764 = vunpack.c.l.b16 %v3662
        %v3765 = vunpack.c.l.b16 %v3672
        %v3766 = vunpack.c.l.b16 %v3686
        %v3767 = vunpack.c.l.b16 %v3696
        %v3768 = vunpack.c.l.b16 %v3710
        %v3769 = vunpack.c.l.b16 %v3720
        %v3770 = vpack.c.b16 %v3739, %v3738
        %v3771 = vpack.c.b16 %v3741, %v3740
        %v3772 = vpack.c.b16 %v3743, %v3742
        %v3773 = vpack.c.b16 %v3745, %v3744
        %v3774 = vpack.c.b16 %v3747, %v3746
        %v3775 = vpack.c.b16 %v3749, %v3748
        %v3776 = vpack.c.b16 %v3751, %v3750
        %v3777 = vpack.c.b16 %v3753, %v3752
        %v3778 = vpack.c.b16 %v3755, %v3754
        %v3779 = vpack.c.b16 %v3757, %v3756
        %v3780 = vpack.c.b16 %v3759, %v3758
        %v3781 = vpack.c.b16 %v3761, %v3760
        %v3782 = vpack.c.b16 %v3763, %v3762
        %v3783 = vpack.c.b16 %v3765, %v3764
        %v3784 = vpack.c.b16 %v3767, %v3766
        %v3785 = vpack.c.b16 %v3769, %v3768
        %v3818 = vunpack.c.l.b16 %v3722
        %v3819 = vunpack.c.l.b16 %v3723
        %v3820 = vunpack.c.l.b16 %v3724
        %v3821 = vunpack.c.l.b16 %v3725
        %v3822 = vunpack.c.l.b16 %v3726
        %v3823 = vunpack.c.l.b16 %v3727
        %v3824 = vunpack.c.l.b16 %v3728
        %v3825 = vunpack.c.l.b16 %v3729
        %v3826 = vunpack.c.l.b16 %v3730
        %v3827 = vunpack.c.l.b16 %v3731
        %v3828 = vunpack.c.l.b16 %v3732
        %v3829 = vunpack.c.l.b16 %v3733
        %v3830 = vunpack.c.l.b16 %v3734
        %v3831 = vunpack.c.l.b16 %v3735
        %v3832 = vunpack.c.l.b16 %v3736
        %v3833 = vunpack.c.l.b16 %v3737
        %v3834 = vpack.c.b16 %v3819, %v3818
        %v3835 = vpack.c.b16 %v3821, %v3820
        %v3836 = vpack.c.b16 %v3823, %v3822
        %v3837 = vpack.c.b16 %v3825, %v3824
        %v3838 = vpack.c.b16 %v3827, %v3826
        %v3839 = vpack.c.b16 %v3829, %v3828
        %v3840 = vpack.c.b16 %v3831, %v3830
        %v3841 = vpack.c.b16 %v3833, %v3832
        %3850 = vmatpush.bf16.msra.mxu0 %v3841
        %3851 = vmatpush.bf16.msra.mxu0 %v3840
        %3852 = vmatpush.bf16.msra.mxu0 %v3839
        %3853 = vmatpush.bf16.msra.mxu0 %v3838
        %3854 = vmatpush.bf16.msra.mxu0 %v3837
        %3855 = vmatpush.bf16.msra.mxu0 %v3836
        %3856 = vmatpush.bf16.msra.mxu0 %v3835
        %3857 = vmatpush.bf16.msra.mxu0 %v3834
        %3858 = vmatmul.bf16.gmra.mxu0 %v3770
        %v3859 = vpop.f32.mrf.mxu0
        %v3860 = vadd.f32 0.0, %v3859
        %v3861 = vpop.f32.mrf.mxu0
        %v3862 = vadd.f32 0.0, %v3861
        %3863 = vmatmul.bf16.gmra.mxu0 %v3771
        %v3864 = vpop.f32.mrf.mxu0
        %v3865 = vadd.f32 0.0, %v3864
        %v3866 = vpop.f32.mrf.mxu0
        %v3867 = vadd.f32 0.0, %v3866
        %3868 = vmatmul.bf16.gmra.mxu0 %v3772
        %v3869 = vpop.f32.mrf.mxu0
        %v3870 = vadd.f32 0.0, %v3869
        %v3871 = vpop.f32.mrf.mxu0
        %v3872 = vadd.f32 0.0, %v3871
        %3873 = vmatmul.bf16.gmra.mxu0 %v3773
        %v3874 = vpop.f32.mrf.mxu0
        %v3875 = vadd.f32 0.0, %v3874
        %v3876 = vpop.f32.mrf.mxu0
        %v3877 = vadd.f32 0.0, %v3876
        %3878 = vmatmul.bf16.gmra.mxu0 %v3774
        %v3879 = vpop.f32.mrf.mxu0
        %v3880 = vadd.f32 0.0, %v3879
        %v3881 = vpop.f32.mrf.mxu0
        %v3882 = vadd.f32 0.0, %v3881
        %3883 = vmatmul.bf16.gmra.mxu0 %v3775
        %v3884 = vpop.f32.mrf.mxu0
        %v3885 = vadd.f32 0.0, %v3884
        %v3886 = vpop.f32.mrf.mxu0
        %v3887 = vadd.f32 0.0, %v3886
        %3888 = vmatmul.bf16.gmra.mxu0 %v3776
        %v3889 = vpop.f32.mrf.mxu0
        %v3890 = vadd.f32 0.0, %v3889
        %v3891 = vpop.f32.mrf.mxu0
        %v3892 = vadd.f32 0.0, %v3891
        %3893 = vmatmul.bf16.gmra.mxu0 %v3777
        %v3894 = vpop.f32.mrf.mxu0
        %v3895 = vadd.f32 0.0, %v3894
        %v3896 = vpop.f32.mrf.mxu0
        %v3897 = vadd.f32 0.0, %v3896
        %3898 = vmatmul.bf16.gmra.mxu0 %v3778
        %v3899 = vpop.f32.mrf.mxu0
        %v3900 = vadd.f32 0.0, %v3899
        %v3901 = vpop.f32.mrf.mxu0
        %v3902 = vadd.f32 0.0, %v3901
        %3903 = vmatmul.bf16.gmra.mxu0 %v3779
        %v3904 = vpop.f32.mrf.mxu0
        %v3905 = vadd.f32 0.0, %v3904
        %v3906 = vpop.f32.mrf.mxu0
        %v3907 = vadd.f32 0.0, %v3906
        %3908 = vmatmul.bf16.gmra.mxu0 %v3780
        %v3909 = vpop.f32.mrf.mxu0
        %v3910 = vadd.f32 0.0, %v3909
        %v3911 = vpop.f32.mrf.mxu0
        %v3912 = vadd.f32 0.0, %v3911
        %3913 = vmatmul.bf16.gmra.mxu0 %v3781
        %v3914 = vpop.f32.mrf.mxu0
        %v3915 = vadd.f32 0.0, %v3914
        %v3916 = vpop.f32.mrf.mxu0
        %v3917 = vadd.f32 0.0, %v3916
        %3918 = vmatmul.bf16.gmra.mxu0 %v3782
        %v3919 = vpop.f32.mrf.mxu0
        %v3920 = vadd.f32 0.0, %v3919
        %v3921 = vpop.f32.mrf.mxu0
        %v3922 = vadd.f32 0.0, %v3921
        %3923 = vmatmul.bf16.gmra.mxu0 %v3783
        %v3924 = vpop.f32.mrf.mxu0
        %v3925 = vadd.f32 0.0, %v3924
        %v3926 = vpop.f32.mrf.mxu0
        %v3927 = vadd.f32 0.0, %v3926
        %3928 = vmatmul.bf16.gmra.mxu0 %v3784
        %v3929 = vpop.f32.mrf.mxu0
        %v3930 = vadd.f32 0.0, %v3929
        %v3931 = vpop.f32.mrf.mxu0
        %v3932 = vadd.f32 0.0, %v3931
        %3933 = vmatmul.bf16.gmra.mxu0 %v3785
        %v3934 = vpop.f32.mrf.mxu0
        %v3935 = vadd.f32 0.0, %v3934
        %v3936 = vpop.f32.mrf.mxu0
        %v3937 = vadd.f32 0.0, %v3936
        %3938 = vdwg.mxu0
        %v3939 = vadd.f32 %v3257, %v3860
        %v3940 = vadd.f32 %v3258, %v3862
        %v3941 = vadd.f32 %v3259, %v3865
        %v3942 = vadd.f32 %v3260, %v3867
        %v3943 = vadd.f32 %v3261, %v3870
        %v3944 = vadd.f32 %v3262, %v3872
        %v3945 = vadd.f32 %v3263, %v3875
        %v3946 = vadd.f32 %v3264, %v3877
        %v3947 = vadd.f32 %v3265, %v3880
        %v3948 = vadd.f32 %v3266, %v3882
        %v3949 = vadd.f32 %v3267, %v3885
        %v3950 = vadd.f32 %v3268, %v3887
        %v3951 = vadd.f32 %v3269, %v3890
        %v3952 = vadd.f32 %v3270, %v3892
        %v3953 = vadd.f32 %v3271, %v3895
        %v3954 = vadd.f32 %v3272, %v3897
        %v3955 = vadd.f32 %v3273, %v3900
        %v3956 = vadd.f32 %v3274, %v3902
        %v3957 = vadd.f32 %v3275, %v3905
        %v3958 = vadd.f32 %v3276, %v3907
        %v3959 = vadd.f32 %v3277, %v3910
        %v3960 = vadd.f32 %v3278, %v3912
        %v3961 = vadd.f32 %v3279, %v3915
        %v3962 = vadd.f32 %v3280, %v3917
        %v3963 = vadd.f32 %v3281, %v3920
        %v3964 = vadd.f32 %v3282, %v3922
        %v3965 = vadd.f32 %v3283, %v3925
        %v3966 = vadd.f32 %v3284, %v3927
        %v3967 = vadd.f32 %v3285, %v3930
        %v3968 = vadd.f32 %v3286, %v3932
        %v3969 = vadd.f32 %v3287, %v3935
        %v3970 = vadd.f32 %v3288, %v3937
        %v3971 = vld [vmem:[%s2974] sm:$0xe]
        %v3972 = vld [vmem:[%s2974 + $0xc] sm:$0xe]
        %v3973 = vld [vmem:[%s2974 + $0x18] sm:$0xe]
        %v3974 = vld [vmem:[%s2974 + $0x24] sm:$0xe]
        %v3975 = vld [vmem:[%s2974 + $0x30] sm:$0xe]
        %v3976 = vld [vmem:[%s2974 + $0x3c] sm:$0xe]
        %v3977 = vld [vmem:[%s2974 + $0x48] sm:$0xe]
        %v3978 = vld [vmem:[%s2974 + $0x54] sm:$0xe]
        %v3979 = vld [vmem:[%s2974 + $0x60] sm:$0xe]
        %v3980 = vld [vmem:[%s2974 + $0x6c] sm:$0xe]
        %v3981 = vld [vmem:[%s2974 + $0x78] sm:$0xe]
        %v3982 = vld [vmem:[%s2974 + $0x84] sm:$0xe]
        %v3983 = vld [vmem:[%s2974 + $0x90] sm:$0xe]
        %v3984 = vld [vmem:[%s2974 + $0x9c] sm:$0xe]
        %v3985 = vld [vmem:[%s2974 + $0xa8] sm:$0xe]
        %v3986 = vld [vmem:[%s2974 + $0xb4] sm:$0xe]
        %v4035 = vrot.slane %v3971, 5
        %v4036 = vrot.slane %v4035, 4
        %v4037 = vrot.slane %v3290, 5
        %v4038 = vsel %vm1188, %v4036, %v4037
        %v4039 = vrot.slane %v4037, 4
        %v4040 = vrot.slane %v3291, 5
        %v4041 = vsel %vm1188, %v4039, %v4040
        %v4042 = vrot.slane %v3972, 5
        %v4043 = vrot.slane %v4042, 4
        %v4044 = vrot.slane %v3293, 5
        %v4045 = vsel %vm1188, %v4043, %v4044
        %v4046 = vrot.slane %v4044, 4
        %v4047 = vrot.slane %v3294, 5
        %v4048 = vsel %vm1188, %v4046, %v4047
        %v4049 = vrot.slane %v3973, 5
        %v4050 = vrot.slane %v4049, 4
        %v4051 = vrot.slane %v3296, 5
        %v4052 = vsel %vm1188, %v4050, %v4051
        %v4053 = vrot.slane %v4051, 4
        %v4054 = vrot.slane %v3297, 5
        %v4055 = vsel %vm1188, %v4053, %v4054
        %v4056 = vrot.slane %v3974, 5
        %v4057 = vrot.slane %v4056, 4
        %v4058 = vrot.slane %v3299, 5
        %v4059 = vsel %vm1188, %v4057, %v4058
        %v4060 = vrot.slane %v4058, 4
        %v4061 = vrot.slane %v3300, 5
        %v4062 = vsel %vm1188, %v4060, %v4061
        %v4063 = vrot.slane %v3975, 5
        %v4064 = vrot.slane %v4063, 4
        %v4065 = vrot.slane %v3302, 5
        %v4066 = vsel %vm1188, %v4064, %v4065
        %v4067 = vrot.slane %v4065, 4
        %v4068 = vrot.slane %v3303, 5
        %v4069 = vsel %vm1188, %v4067, %v4068
        %v4070 = vrot.slane %v3976, 5
        %v4071 = vrot.slane %v4070, 4
        %v4072 = vrot.slane %v3305, 5
        %v4073 = vsel %vm1188, %v4071, %v4072
        %v4074 = vrot.slane %v4072, 4
        %v4075 = vrot.slane %v3306, 5
        %v4076 = vsel %vm1188, %v4074, %v4075
        %v4077 = vrot.slane %v3977, 5
        %v4078 = vrot.slane %v4077, 4
        %v4079 = vrot.slane %v3308, 5
        %v4080 = vsel %vm1188, %v4078, %v4079
        %v4081 = vrot.slane %v4079, 4
        %v4082 = vrot.slane %v3309, 5
        %v4083 = vsel %vm1188, %v4081, %v4082
        %v4084 = vrot.slane %v3978, 5
        %v4085 = vrot.slane %v4084, 4
        %v4086 = vrot.slane %v3311, 5
        %v4087 = vsel %vm1188, %v4085, %v4086
        %v4088 = vrot.slane %v4086, 4
        %v4089 = vrot.slane %v3312, 5
        %v4090 = vsel %vm1188, %v4088, %v4089
        %v4091 = vrot.slane %v3979, 5
        %v4092 = vrot.slane %v4091, 4
        %v4093 = vrot.slane %v3314, 5
        %v4094 = vsel %vm1188, %v4092, %v4093
        %v4095 = vrot.slane %v4093, 4
        %v4096 = vrot.slane %v3315, 5
        %v4097 = vsel %vm1188, %v4095, %v4096
        %v4098 = vrot.slane %v3980, 5
        %v4099 = vrot.slane %v4098, 4
        %v4100 = vrot.slane %v3317, 5
        %v4101 = vsel %vm1188, %v4099, %v4100
        %v4102 = vrot.slane %v4100, 4
        %v4103 = vrot.slane %v3318, 5
        %v4104 = vsel %vm1188, %v4102, %v4103
        %v4105 = vrot.slane %v3981, 5
        %v4106 = vrot.slane %v4105, 4
        %v4107 = vrot.slane %v3320, 5
        %v4108 = vsel %vm1188, %v4106, %v4107
        %v4109 = vrot.slane %v4107, 4
        %v4110 = vrot.slane %v3321, 5
        %v4111 = vsel %vm1188, %v4109, %v4110
        %v4112 = vrot.slane %v3982, 5
        %v4113 = vrot.slane %v4112, 4
        %v4114 = vrot.slane %v3323, 5
        %v4115 = vsel %vm1188, %v4113, %v4114
        %v4116 = vrot.slane %v4114, 4
        %v4117 = vrot.slane %v3324, 5
        %v4118 = vsel %vm1188, %v4116, %v4117
        %v4119 = vrot.slane %v3983, 5
        %v4120 = vrot.slane %v4119, 4
        %v4121 = vrot.slane %v3326, 5
        %v4122 = vsel %vm1188, %v4120, %v4121
        %v4123 = vrot.slane %v4121, 4
        %v4124 = vrot.slane %v3327, 5
        %v4125 = vsel %vm1188, %v4123, %v4124
        %v4126 = vrot.slane %v3984, 5
        %v4127 = vrot.slane %v4126, 4
        %v4128 = vrot.slane %v3329, 5
        %v4129 = vsel %vm1188, %v4127, %v4128
        %v4130 = vrot.slane %v4128, 4
        %v4131 = vrot.slane %v3330, 5
        %v4132 = vsel %vm1188, %v4130, %v4131
        %v4133 = vrot.slane %v3985, 5
        %v4134 = vrot.slane %v4133, 4
        %v4135 = vrot.slane %v3332, 5
        %v4136 = vsel %vm1188, %v4134, %v4135
        %v4137 = vrot.slane %v4135, 4
        %v4138 = vrot.slane %v3333, 5
        %v4139 = vsel %vm1188, %v4137, %v4138
        %v4140 = vrot.slane %v3986, 5
        %v4141 = vrot.slane %v4140, 4
        %v4142 = vrot.slane %v3335, 5
        %v4143 = vsel %vm1188, %v4141, %v4142
        %v4144 = vrot.slane %v4142, 4
        %v4145 = vrot.slane %v3336, 5
        %v4146 = vsel %vm1188, %v4144, %v4145
        %s4147 = scalar_lea.vmem [#allocation2], 512
        %v4148 = vld [vmem:[%s4147] sm:$0xf]
        %v4149 = vld [vmem:[%s4147 + $0x4] sm:$0xf]
        %v4150 = vld [vmem:[%s4147 + $0x8] sm:$0xf]
        %v4151 = vld [vmem:[%s4147 + $0xc] sm:$0xf]
        %v4152 = vld [vmem:[%s4147 + $0x10] sm:$0xf]
        %v4153 = vld [vmem:[%s4147 + $0x14] sm:$0xf]
        %v4154 = vld [vmem:[%s4147 + $0x18] sm:$0xf]
        %v4155 = vld [vmem:[%s4147 + $0x1c] sm:$0xf]
        %v4156 = vld [vmem:[%s4147 + $0x20] sm:$0xf]
        %v4157 = vld [vmem:[%s4147 + $0x24] sm:$0xf]
        %v4158 = vld [vmem:[%s4147 + $0x28] sm:$0xf]
        %v4159 = vld [vmem:[%s4147 + $0x2c] sm:$0xf]
        %v4160 = vld [vmem:[%s4147 + $0x30] sm:$0xf]
        %v4161 = vld [vmem:[%s4147 + $0x34] sm:$0xf]
        %v4162 = vld [vmem:[%s4147 + $0x38] sm:$0xf]
        %v4163 = vld [vmem:[%s4147 + $0x3c] sm:$0xf]
        %v4164 = vunpack.c.l.b16 %v4038
        %v4165 = vunpack.c.l.b16 %v4041
        %v4166 = vunpack.c.l.b16 %v4045
        %v4167 = vunpack.c.l.b16 %v4048
        %v4168 = vunpack.c.l.b16 %v4052
        %v4169 = vunpack.c.l.b16 %v4055
        %v4170 = vunpack.c.l.b16 %v4059
        %v4171 = vunpack.c.l.b16 %v4062
        %v4172 = vunpack.c.l.b16 %v4066
        %v4173 = vunpack.c.l.b16 %v4069
        %v4174 = vunpack.c.l.b16 %v4073
        %v4175 = vunpack.c.l.b16 %v4076
        %v4176 = vunpack.c.l.b16 %v4080
        %v4177 = vunpack.c.l.b16 %v4083
        %v4178 = vunpack.c.l.b16 %v4087
        %v4179 = vunpack.c.l.b16 %v4090
        %v4180 = vunpack.c.l.b16 %v4094
        %v4181 = vunpack.c.l.b16 %v4097
        %v4182 = vunpack.c.l.b16 %v4101
        %v4183 = vunpack.c.l.b16 %v4104
        %v4184 = vunpack.c.l.b16 %v4108
        %v4185 = vunpack.c.l.b16 %v4111
        %v4186 = vunpack.c.l.b16 %v4115
        %v4187 = vunpack.c.l.b16 %v4118
        %v4188 = vunpack.c.l.b16 %v4122
        %v4189 = vunpack.c.l.b16 %v4125
        %v4190 = vunpack.c.l.b16 %v4129
        %v4191 = vunpack.c.l.b16 %v4132
        %v4192 = vunpack.c.l.b16 %v4136
        %v4193 = vunpack.c.l.b16 %v4139
        %v4194 = vunpack.c.l.b16 %v4143
        %v4195 = vunpack.c.l.b16 %v4146
        %v4196 = vpack.c.b16 %v4165, %v4164
        %v4197 = vpack.c.b16 %v4167, %v4166
        %v4198 = vpack.c.b16 %v4169, %v4168
        %v4199 = vpack.c.b16 %v4171, %v4170
        %v4200 = vpack.c.b16 %v4173, %v4172
        %v4201 = vpack.c.b16 %v4175, %v4174
        %v4202 = vpack.c.b16 %v4177, %v4176
        %v4203 = vpack.c.b16 %v4179, %v4178
        %v4204 = vpack.c.b16 %v4181, %v4180
        %v4205 = vpack.c.b16 %v4183, %v4182
        %v4206 = vpack.c.b16 %v4185, %v4184
        %v4207 = vpack.c.b16 %v4187, %v4186
        %v4208 = vpack.c.b16 %v4189, %v4188
        %v4209 = vpack.c.b16 %v4191, %v4190
        %v4210 = vpack.c.b16 %v4193, %v4192
        %v4211 = vpack.c.b16 %v4195, %v4194
        %v4244 = vunpack.c.l.b16 %v4148
        %v4245 = vunpack.c.l.b16 %v4149
        %v4246 = vunpack.c.l.b16 %v4150
        %v4247 = vunpack.c.l.b16 %v4151
        %v4248 = vunpack.c.l.b16 %v4152
        %v4249 = vunpack.c.l.b16 %v4153
        %v4250 = vunpack.c.l.b16 %v4154
        %v4251 = vunpack.c.l.b16 %v4155
        %v4252 = vunpack.c.l.b16 %v4156
        %v4253 = vunpack.c.l.b16 %v4157
        %v4254 = vunpack.c.l.b16 %v4158
        %v4255 = vunpack.c.l.b16 %v4159
        %v4256 = vunpack.c.l.b16 %v4160
        %v4257 = vunpack.c.l.b16 %v4161
        %v4258 = vunpack.c.l.b16 %v4162
        %v4259 = vunpack.c.l.b16 %v4163
        %v4260 = vpack.c.b16 %v4245, %v4244
        %v4261 = vpack.c.b16 %v4247, %v4246
        %v4262 = vpack.c.b16 %v4249, %v4248
        %v4263 = vpack.c.b16 %v4251, %v4250
        %v4264 = vpack.c.b16 %v4253, %v4252
        %v4265 = vpack.c.b16 %v4255, %v4254
        %v4266 = vpack.c.b16 %v4257, %v4256
        %v4267 = vpack.c.b16 %v4259, %v4258
        %4276 = vmatpush.bf16.msra.mxu0 %v4267
        %4277 = vmatpush.bf16.msra.mxu0 %v4266
        %4278 = vmatpush.bf16.msra.mxu0 %v4265
        %4279 = vmatpush.bf16.msra.mxu0 %v4264
        %4280 = vmatpush.bf16.msra.mxu0 %v4263
        %4281 = vmatpush.bf16.msra.mxu0 %v4262
        %4282 = vmatpush.bf16.msra.mxu0 %v4261
        %4283 = vmatpush.bf16.msra.mxu0 %v4260
        %4284 = vmatmul.bf16.gmra.mxu0 %v4196
        %v4285 = vpop.f32.mrf.mxu0
        %v4286 = vadd.f32 0.0, %v4285
        %v4287 = vpop.f32.mrf.mxu0
        %v4288 = vadd.f32 0.0, %v4287
        %4289 = vmatmul.bf16.gmra.mxu0 %v4197
        %v4290 = vpop.f32.mrf.mxu0
        %v4291 = vadd.f32 0.0, %v4290
        %v4292 = vpop.f32.mrf.mxu0
        %v4293 = vadd.f32 0.0, %v4292
        %4294 = vmatmul.bf16.gmra.mxu0 %v4198
        %v4295 = vpop.f32.mrf.mxu0
        %v4296 = vadd.f32 0.0, %v4295
        %v4297 = vpop.f32.mrf.mxu0
        %v4298 = vadd.f32 0.0, %v4297
        %4299 = vmatmul.bf16.gmra.mxu0 %v4199
        %v4300 = vpop.f32.mrf.mxu0
        %v4301 = vadd.f32 0.0, %v4300
        %v4302 = vpop.f32.mrf.mxu0
        %v4303 = vadd.f32 0.0, %v4302
        %4304 = vmatmul.bf16.gmra.mxu0 %v4200
        %v4305 = vpop.f32.mrf.mxu0
        %v4306 = vadd.f32 0.0, %v4305
        %v4307 = vpop.f32.mrf.mxu0
        %v4308 = vadd.f32 0.0, %v4307
        %4309 = vmatmul.bf16.gmra.mxu0 %v4201
        %v4310 = vpop.f32.mrf.mxu0
        %v4311 = vadd.f32 0.0, %v4310
        %v4312 = vpop.f32.mrf.mxu0
        %v4313 = vadd.f32 0.0, %v4312
        %4314 = vmatmul.bf16.gmra.mxu0 %v4202
        %v4315 = vpop.f32.mrf.mxu0
        %v4316 = vadd.f32 0.0, %v4315
        %v4317 = vpop.f32.mrf.mxu0
        %v4318 = vadd.f32 0.0, %v4317
        %4319 = vmatmul.bf16.gmra.mxu0 %v4203
        %v4320 = vpop.f32.mrf.mxu0
        %v4321 = vadd.f32 0.0, %v4320
        %v4322 = vpop.f32.mrf.mxu0
        %v4323 = vadd.f32 0.0, %v4322
        %4324 = vmatmul.bf16.gmra.mxu0 %v4204
        %v4325 = vpop.f32.mrf.mxu0
        %v4326 = vadd.f32 0.0, %v4325
        %v4327 = vpop.f32.mrf.mxu0
        %v4328 = vadd.f32 0.0, %v4327
        %4329 = vmatmul.bf16.gmra.mxu0 %v4205
        %v4330 = vpop.f32.mrf.mxu0
        %v4331 = vadd.f32 0.0, %v4330
        %v4332 = vpop.f32.mrf.mxu0
        %v4333 = vadd.f32 0.0, %v4332
        %4334 = vmatmul.bf16.gmra.mxu0 %v4206
        %v4335 = vpop.f32.mrf.mxu0
        %v4336 = vadd.f32 0.0, %v4335
        %v4337 = vpop.f32.mrf.mxu0
        %v4338 = vadd.f32 0.0, %v4337
        %4339 = vmatmul.bf16.gmra.mxu0 %v4207
        %v4340 = vpop.f32.mrf.mxu0
        %v4341 = vadd.f32 0.0, %v4340
        %v4342 = vpop.f32.mrf.mxu0
        %v4343 = vadd.f32 0.0, %v4342
        %4344 = vmatmul.bf16.gmra.mxu0 %v4208
        %v4345 = vpop.f32.mrf.mxu0
        %v4346 = vadd.f32 0.0, %v4345
        %v4347 = vpop.f32.mrf.mxu0
        %v4348 = vadd.f32 0.0, %v4347
        %4349 = vmatmul.bf16.gmra.mxu0 %v4209
        %v4350 = vpop.f32.mrf.mxu0
        %v4351 = vadd.f32 0.0, %v4350
        %v4352 = vpop.f32.mrf.mxu0
        %v4353 = vadd.f32 0.0, %v4352
        %4354 = vmatmul.bf16.gmra.mxu0 %v4210
        %v4355 = vpop.f32.mrf.mxu0
        %v4356 = vadd.f32 0.0, %v4355
        %v4357 = vpop.f32.mrf.mxu0
        %v4358 = vadd.f32 0.0, %v4357
        %4359 = vmatmul.bf16.gmra.mxu0 %v4211
        %v4360 = vpop.f32.mrf.mxu0
        %v4361 = vadd.f32 0.0, %v4360
        %v4362 = vpop.f32.mrf.mxu0
        %v4363 = vadd.f32 0.0, %v4362
        %4364 = vdwg.mxu0
        %v4365 = vadd.f32 %v3939, %v4286
        %v4366 = vadd.f32 %v3940, %v4288
        %v4367 = vadd.f32 %v3941, %v4291
        %v4368 = vadd.f32 %v3942, %v4293
        %v4369 = vadd.f32 %v3943, %v4296
        %v4370 = vadd.f32 %v3944, %v4298
        %v4371 = vadd.f32 %v3945, %v4301
        %v4372 = vadd.f32 %v3946, %v4303
        %v4373 = vadd.f32 %v3947, %v4306
        %v4374 = vadd.f32 %v3948, %v4308
        %v4375 = vadd.f32 %v3949, %v4311
        %v4376 = vadd.f32 %v3950, %v4313
        %v4377 = vadd.f32 %v3951, %v4316
        %v4378 = vadd.f32 %v3952, %v4318
        %v4379 = vadd.f32 %v3953, %v4321
        %v4380 = vadd.f32 %v3954, %v4323
        %v4381 = vadd.f32 %v3955, %v4326
        %v4382 = vadd.f32 %v3956, %v4328
        %v4383 = vadd.f32 %v3957, %v4331
        %v4384 = vadd.f32 %v3958, %v4333
        %v4385 = vadd.f32 %v3959, %v4336
        %v4386 = vadd.f32 %v3960, %v4338
        %v4387 = vadd.f32 %v3961, %v4341
        %v4388 = vadd.f32 %v3962, %v4343
        %v4389 = vadd.f32 %v3963, %v4346
        %v4390 = vadd.f32 %v3964, %v4348
        %v4391 = vadd.f32 %v3965, %v4351
        %v4392 = vadd.f32 %v3966, %v4353
        %v4393 = vadd.f32 %v3967, %v4356
        %v4394 = vadd.f32 %v3968, %v4358
        %v4395 = vadd.f32 %v3969, %v4361
        %v4396 = vadd.f32 %v3970, %v4363
        %v4397 = vld [vmem:[#allocation4] sm:$0x1]
        %v4399 = vperm.slane %v4397, 0
        %v4401 = vadd.f32 %v4365, %v4399
        %v4402 = vadd.f32 %v4366, %v4399
        %v4403 = vadd.f32 %v4367, %v4399
        %v4404 = vadd.f32 %v4368, %v4399
        %v4405 = vadd.f32 %v4369, %v4399
        %v4406 = vadd.f32 %v4370, %v4399
        %v4407 = vadd.f32 %v4371, %v4399
        %v4408 = vadd.f32 %v4372, %v4399
        %v4409 = vadd.f32 %v4373, %v4399
        %v4410 = vadd.f32 %v4374, %v4399
        %v4411 = vadd.f32 %v4375, %v4399
        %v4412 = vadd.f32 %v4376, %v4399
        %v4413 = vadd.f32 %v4377, %v4399
        %v4414 = vadd.f32 %v4378, %v4399
        %v4415 = vadd.f32 %v4379, %v4399
        %v4416 = vadd.f32 %v4380, %v4399
        %v4417 = vadd.f32 %v4381, %v4399
        %v4418 = vadd.f32 %v4382, %v4399
        %v4419 = vadd.f32 %v4383, %v4399
        %v4420 = vadd.f32 %v4384, %v4399
        %v4421 = vadd.f32 %v4385, %v4399
        %v4422 = vadd.f32 %v4386, %v4399
        %v4423 = vadd.f32 %v4387, %v4399
        %v4424 = vadd.f32 %v4388, %v4399
        %v4425 = vadd.f32 %v4389, %v4399
        %v4426 = vadd.f32 %v4390, %v4399
        %v4427 = vadd.f32 %v4391, %v4399
        %v4428 = vadd.f32 %v4392, %v4399
        %v4429 = vadd.f32 %v4393, %v4399
        %v4430 = vadd.f32 %v4394, %v4399
        %v4431 = vadd.f32 %v4395, %v4399
        %v4432 = vadd.f32 %v4396, %v4399
        %v4433 = vmax.f32 %v4401, 0.0
        %v4434 = vmax.f32 %v4402, 0.0
        %v4435 = vmax.f32 %v4403, 0.0
        %v4436 = vmax.f32 %v4404, 0.0
        %v4437 = vmax.f32 %v4405, 0.0
        %v4438 = vmax.f32 %v4406, 0.0
        %v4439 = vmax.f32 %v4407, 0.0
        %v4440 = vmax.f32 %v4408, 0.0
        %v4441 = vmax.f32 %v4409, 0.0
        %v4442 = vmax.f32 %v4410, 0.0
        %v4443 = vmax.f32 %v4411, 0.0
        %v4444 = vmax.f32 %v4412, 0.0
        %v4445 = vmax.f32 %v4413, 0.0
        %v4446 = vmax.f32 %v4414, 0.0
        %v4447 = vmax.f32 %v4415, 0.0
        %v4448 = vmax.f32 %v4416, 0.0
        %v4449 = vmax.f32 %v4417, 0.0
        %v4450 = vmax.f32 %v4418, 0.0
        %v4451 = vmax.f32 %v4419, 0.0
        %v4452 = vmax.f32 %v4420, 0.0
        %v4453 = vmax.f32 %v4421, 0.0
        %v4454 = vmax.f32 %v4422, 0.0
        %v4455 = vmax.f32 %v4423, 0.0
        %v4456 = vmax.f32 %v4424, 0.0
        %v4457 = vmax.f32 %v4425, 0.0
        %v4458 = vmax.f32 %v4426, 0.0
        %v4459 = vmax.f32 %v4427, 0.0
        %v4460 = vmax.f32 %v4428, 0.0
        %v4461 = vmax.f32 %v4429, 0.0
        %v4462 = vmax.f32 %v4430, 0.0
        %v4463 = vmax.f32 %v4431, 0.0
        %v4464 = vmax.f32 %v4432, 0.0
        %v4465 = vpack.c.bf16 %v4433, %v4433
        %v4466 = vpack.c.bf16 %v4434, %v4434
        %v4467 = vpack.c.bf16 %v4435, %v4435
        %v4468 = vpack.c.bf16 %v4436, %v4436
        %v4469 = vpack.c.bf16 %v4437, %v4437
        %v4470 = vpack.c.bf16 %v4438, %v4438
        %v4471 = vpack.c.bf16 %v4439, %v4439
        %v4472 = vpack.c.bf16 %v4440, %v4440
        %v4473 = vpack.c.bf16 %v4441, %v4441
        %v4474 = vpack.c.bf16 %v4442, %v4442
        %v4475 = vpack.c.bf16 %v4443, %v4443
        %v4476 = vpack.c.bf16 %v4444, %v4444
        %v4477 = vpack.c.bf16 %v4445, %v4445
        %v4478 = vpack.c.bf16 %v4446, %v4446
        %v4479 = vpack.c.bf16 %v4447, %v4447
        %v4480 = vpack.c.bf16 %v4448, %v4448
        %v4481 = vpack.c.bf16 %v4449, %v4449
        %v4482 = vpack.c.bf16 %v4450, %v4450
        %v4483 = vpack.c.bf16 %v4451, %v4451
        %v4484 = vpack.c.bf16 %v4452, %v4452
        %v4485 = vpack.c.bf16 %v4453, %v4453
        %v4486 = vpack.c.bf16 %v4454, %v4454
        %v4487 = vpack.c.bf16 %v4455, %v4455
        %v4488 = vpack.c.bf16 %v4456, %v4456
        %v4489 = vpack.c.bf16 %v4457, %v4457
        %v4490 = vpack.c.bf16 %v4458, %v4458
        %v4491 = vpack.c.bf16 %v4459, %v4459
        %v4492 = vpack.c.bf16 %v4460, %v4460
        %v4493 = vpack.c.bf16 %v4461, %v4461
        %v4494 = vpack.c.bf16 %v4462, %v4462
        %v4495 = vpack.c.bf16 %v4463, %v4463
        %v4496 = vpack.c.bf16 %v4464, %v4464
        %4497 = vst [vmem:[%s235] sm:$0xf] %v4465
        %4498 = vst [vmem:[%s235 + $0x4] sm:$0xf] %v4466
        %4499 = vst [vmem:[%s235 + $0x8] sm:$0xf] %v4467
        %4500 = vst [vmem:[%s235 + $0xc] sm:$0xf] %v4468
        %4501 = vst [vmem:[%s235 + $0x10] sm:$0xf] %v4469
        %4502 = vst [vmem:[%s235 + $0x14] sm:$0xf] %v4470
        %4503 = vst [vmem:[%s235 + $0x18] sm:$0xf] %v4471
        %4504 = vst [vmem:[%s235 + $0x1c] sm:$0xf] %v4472
        %4505 = vst [vmem:[%s235 + $0x20] sm:$0xf] %v4473
        %4506 = vst [vmem:[%s235 + $0x24] sm:$0xf] %v4474
        %4507 = vst [vmem:[%s235 + $0x28] sm:$0xf] %v4475
        %4508 = vst [vmem:[%s235 + $0x2c] sm:$0xf] %v4476
        %4509 = vst [vmem:[%s235 + $0x30] sm:$0xf] %v4477
        %4510 = vst [vmem:[%s235 + $0x34] sm:$0xf] %v4478
        %4511 = vst [vmem:[%s235 + $0x38] sm:$0xf] %v4479
        %4512 = vst [vmem:[%s235 + $0x3c] sm:$0xf] %v4480
        %4513 = vst [vmem:[%s235 + $0x40] sm:$0xf] %v4481
        %4514 = vst [vmem:[%s235 + $0x44] sm:$0xf] %v4482
        %4515 = vst [vmem:[%s235 + $0x48] sm:$0xf] %v4483
        %4516 = vst [vmem:[%s235 + $0x4c] sm:$0xf] %v4484
        %4517 = vst [vmem:[%s235 + $0x50] sm:$0xf] %v4485
        %4518 = vst [vmem:[%s235 + $0x54] sm:$0xf] %v4486
        %4519 = vst [vmem:[%s235 + $0x58] sm:$0xf] %v4487
        %4520 = vst [vmem:[%s235 + $0x5c] sm:$0xf] %v4488
        %4521 = vst [vmem:[%s235 + $0x60] sm:$0xf] %v4489
        %4522 = vst [vmem:[%s235 + $0x64] sm:$0xf] %v4490
        %4523 = vst [vmem:[%s235 + $0x68] sm:$0xf] %v4491
        %4524 = vst [vmem:[%s235 + $0x6c] sm:$0xf] %v4492
        %4525 = vst [vmem:[%s235 + $0x70] sm:$0xf] %v4493
        %4526 = vst [vmem:[%s235 + $0x74] sm:$0xf] %v4494
        %4527 = vst [vmem:[%s235 + $0x78] sm:$0xf] %v4495
        %4528 = vst [vmem:[%s235 + $0x7c] sm:$0xf] %v4496
        %p4529 = scmp.lt.s32.totalorder %s20, 1
        %s4530 = scalar_select %p4529, %s20, 1
        %p4531 = scmp.lt.s32.totalorder %s21, 0
        %s4532 = scalar_select %p4531, %s21, 0
        %s4533 = smul.addr %s4530, 32
        %s4534 = sadd.s32 %s4532, %s4533
        %s4535 = smul.addr %s4534, 4
        %s4536 = scalar_lea.vmem %s3, %s4535
        // Predicated region
        $region41: #{_lambda_.4} parent=31 // pred_check
          %p4537 = pneg %p126
        $region42: #{_lambda_.4} parent=31 // pred_check_branch
          %4539 = sbr.rel (%p4537) target = $region44
        $region43: #{_lambda_.4} parent=31 // pred_region
          _
        $region44: #{_lambda_.4} parent=31 // pred_fallthru
          _
      $region32: #{_lambda_.4} parent=5 // pred_fallthru
        _
      %p4540 = scmp.le.s32.totalorder 2, %s11
      // Predicated region
      $region45: #{_lambda_.4} parent=5 // pred_check
        %p4541 = pneg %p4540
      $region46: #{_lambda_.4} parent=5 // pred_check_branch
        %4543 = sbr.rel (%p4541) target = $region48
      $region47: #{_lambda_.4} parent=5 // pred_region
        %s4544 = ssub.s32 %s11, 2
        // Predicated region
        $region49: #{_lambda_.4} parent=47 // pred_check
          %p4545 = pneg %p132
        $region50: #{_lambda_.4} parent=47 // pred_check_branch
          %4547 = sbr.rel (%p4545) target = $region52
        $region51: #{_lambda_.4} parent=47 // pred_region
          %p4548 = scmp.lt.s32.totalorder %s22, 1
          %s4549 = scalar_select %p4548, %s22, 1
          %p4550 = scmp.lt.s32.totalorder %s23, 0
          %s4551 = scalar_select %p4550, %s23, 0
          %s4552 = smul.addr %s4549, 32
          %s4553 = sadd.s32 %s4551, %s4552
          %s4554 = smul.addr %s4553, 4
          %s4555 = scalar_lea.vmem %s3, %s4554
        $region52: #{_lambda_.4} parent=47 // pred_fallthru
          _
      $region48: #{_lambda_.4} parent=5 // pred_fallthru
        _
    $region6: #{_lambda_.4} parent=1 // loop_footer
      %s15 = sadd.s32 1, %s11
    $region7: #{_lambda_.4} parent=1 // loop_footer_branch
      %10 = sbr.rel target = $region3
    $region8: #{_lambda_.4} parent=1 // loop_exit
      _
    %4556 = vsyncpa [#allocation3], 1
    %s4557 = scalar_lea.sflag [#allocation3], 1
    %4558 = vsyncpa %s4557, 1
    %4559 = vsyncpa [#allocation5], 1

</llo_original>
